<compile_context>
chip_gen: v5e
topology: v5e:2x2
jax: 0.10.0
libtpu: 0.0.40
codegen_flags: <defaults>
</compile_context>

<pallas_src>
import functools

import jax
import jax.numpy as jnp
from jax import lax
from jax.experimental import pallas as pl
from jax.experimental.pallas import tpu as pltpu


NDF = 128          # as in the PyTorch module
EPS = 1e-5         # InstanceNorm2d default
VMEM_LIMIT = 40 * 1024 * 1024      # > default scoped limit on v5e/v6e/v7x
FUSED_H2_BYTES = 8 * 1024 * 1024   # budget for the VMEM-resident bf16 h2 stash


def _leaky_relu(v, slope=0.2):
    return jnp.where(v > 0, v, slope * v)


def _full_spec(a):
    zero = (0,) * a.ndim
    return pl.BlockSpec(a.shape, lambda *_: zero)


# --------------------------------------------------------------------------
# Fused kernel (preferred): whole network in one pallas_call.
# Grid: (N, 2, T).  Phase 0: conv1+conv2 per tile, stash bf16 h2 in VMEM
# scratch, accumulate per-channel sum / sumsq.  Phase 1: finalize
# InstanceNorm, conv3+conv4, write lane-dense (1, TP) output tiles.
# --------------------------------------------------------------------------
def _fused_kernel(x_ref, w1_ref, b1_ref, w2_ref, b2_ref, w3_ref, b3_ref,
                  w4_ref, b4_ref, o_ref,
                  h2_buf, sum_ref, sumsq_ref, *, inv_p):
    ph = pl.program_id(1)
    j = pl.program_id(2)

    @pl.when(ph == 0)
    def _pass1():
        @pl.when(j == 0)
        def _():
            sum_ref[...] = jnp.zeros_like(sum_ref)
            sumsq_ref[...] = jnp.zeros_like(sumsq_ref)

        x = x_ref[0].astype(jnp.bfloat16)                           # (Cin, TP)

        # conv1 (1x1): (128, Cin) @ (Cin, TP) -> (128, TP), f32 accumulate
        h1 = jnp.dot(w1_ref[...], x,
                     preferred_element_type=jnp.float32) + b1_ref[...]
        h1 = _leaky_relu(h1)

        # conv2 (1x1): (256, 128) @ (128, TP) -> (256, TP)
        h2 = jnp.dot(w2_ref[...], h1.astype(jnp.bfloat16),
                     preferred_element_type=jnp.float32) + b2_ref[...]
        h2 = _leaky_relu(h2)

        # fused single-pass InstanceNorm statistics (f32 accumulators)
        sum_ref[...] += jnp.sum(h2, axis=-1, keepdims=True)         # (256, 1)
        sumsq_ref[...] += jnp.sum(h2 * h2, axis=-1, keepdims=True)  # (256, 1)

        h2_buf[j] = h2.astype(jnp.bfloat16)                         # VMEM stash

    @pl.when(ph == 1)
    def _pass2():
        mean = sum_ref[...] * inv_p                                 # (256, 1)
        var = jnp.maximum(sumsq_ref[...] * inv_p - mean * mean, 0.0)
        rstd = lax.rsqrt(var + EPS)

        h2 = h2_buf[j].astype(jnp.float32)                          # (256, TP)
        h2n = (h2 - mean) * rstd                                    # InstanceNorm

        # conv3 (1x1): (256, 256) @ (256, TP) -> (256, TP)
        h3 = jnp.dot(w3_ref[...], h2n.astype(jnp.bfloat16),
                     preferred_element_type=jnp.float32) + b3_ref[...]
        h3 = _leaky_relu(h3)

        # conv4 (1x1, single output channel): VPU broadcast-multiply + channel
        # reduction instead of a degenerate M=1 MXU matmul.
        out = jnp.sum(h3 * w4_ref[...], axis=0, keepdims=True) + b4_ref[...]
        o_ref[0] = out.astype(o_ref.dtype)                          # (1, TP)


# --------------------------------------------------------------------------
# Fallback pass 1 (large images): conv1 + conv2, stash bf16 h2 to HBM,
# accumulate per-channel sum / sumsq.  Grid: (N, T), T is a reduction axis.
# --------------------------------------------------------------------------
def _stats_kernel(x_ref, w1_ref, b1_ref, w2_ref, b2_ref,
                  h2_ref, sum_ref, sumsq_ref):
    j = pl.program_id(1)

    @pl.when(j == 0)
    def _():
        sum_ref[...] = jnp.zeros_like(sum_ref)
        sumsq_ref[...] = jnp.zeros_like(sumsq_ref)

    x = x_ref[0].astype(jnp.bfloat16)                               # (Cin, TP)

    h1 = jnp.dot(w1_ref[...], x,
                 preferred_element_type=jnp.float32) + b1_ref[...]
    h1 = _leaky_relu(h1)

    h2 = jnp.dot(w2_ref[...], h1.astype(jnp.bfloat16),
                 preferred_element_type=jnp.float32) + b2_ref[...]
    h2 = _leaky_relu(h2)

    sum_ref[0] += jnp.sum(h2, axis=-1, keepdims=True)               # (256, 1)
    sumsq_ref[0] += jnp.sum(h2 * h2, axis=-1, keepdims=True)        # (256, 1)

    h2_ref[0] = h2.astype(jnp.bfloat16)                             # bf16 stash


# --------------------------------------------------------------------------
# Fallback pass 2: finalize InstanceNorm, conv3 + LReLU, conv4.  Grid: (N, T).
# --------------------------------------------------------------------------
def _head_kernel(h2_ref, sum_ref, sumsq_ref, w3_ref, b3_ref, w4_ref, b4_ref,
                 o_ref, *, inv_p):
    mean = sum_ref[0] * inv_p                                       # (256, 1)
    var = jnp.maximum(sumsq_ref[0] * inv_p - mean * mean, 0.0)
    rstd = lax.rsqrt(var + EPS)

    h2 = h2_ref[0].astype(jnp.float32)                              # (256, TP)
    h2n = (h2 - mean) * rstd

    h3 = jnp.dot(w3_ref[...], h2n.astype(jnp.bfloat16),
                 preferred_element_type=jnp.float32) + b3_ref[...]
    h3 = _leaky_relu(h3)

    out = jnp.sum(h3 * w4_ref[...], axis=0, keepdims=True) + b4_ref[...]
    o_ref[0] = out.astype(o_ref.dtype)


# --------------------------------------------------------------------------
# Glue (not the hot path)
# --------------------------------------------------------------------------
def bilinear_downsample_quarter(x):
    """F.interpolate(x, scale_factor=0.25, mode='bilinear', align_corners=False)
    for NCHW input.  src = (dst + 0.5) * 4 - 0.5 (PyTorch scale_factor path).
    Plain JAX glue (gather-based)."""
    n, c, h, w = x.shape
    ho, wo = int(h * 0.25), int(w * 0.25)

    def resample(arr, in_size, out_size, axis):
        src = (jnp.arange(out_size, dtype=jnp.float32) + 0.5) * 4.0 - 0.5
        src = jnp.clip(src, 0.0, in_size - 1)
        lo = jnp.floor(src).astype(jnp.int32)
        hi = jnp.minimum(lo + 1, in_size - 1)
        frac = src - lo.astype(jnp.float32)
        a = jnp.take(arr, lo, axis=axis)
        b = jnp.take(arr, hi, axis=axis)
        shape = [1] * arr.ndim
        shape[axis] = out_size
        return a * (1.0 - frac.reshape(shape)) + b * frac.reshape(shape)

    y = resample(x, h, ho, axis=2)
    y = resample(y, w, wo, axis=3)
    return y


def _choose_p_tile(p):
    for tp in (2048, 1024, 512, 256, 128):
        if p % tp == 0:
            return tp
    return p   # small / odd spatial sizes: single full-P block


def pixel_discriminator(x_nchw, params):
    """x_nchw: (N, Cin, H, W) float32 -> (N, 1, floor(H/4), floor(W/4))."""
    w1, b1, w2, b2, w3, b3, w4, b4 = params      # weights (Cout, Cin), biases (Cout, 1)

    xd = bilinear_downsample_quarter(x_nchw)     # (N, Cin, Hd, Wd)
    n, cin, hd, wd = xd.shape
    p = hd * wd
    xc = xd.reshape(n, cin, p)                   # channel-major, no transpose
    c2 = 2 * NDF

    tp = _choose_p_tile(p)
    t = p // tp

    # bf16 MXU operands (weights cast once); conv4 weight as (256, 1) f32 column.
    w1b = w1.astype(jnp.bfloat16)
    w2b = w2.astype(jnp.bfloat16)
    w3b = w3.astype(jnp.bfloat16)
    w4c = w4.T                                   # (256, 1) f32 for the VPU reduce

    if c2 * p * 2 <= FUSED_H2_BYTES:
        # ---- fused path: single kernel, h2 stays in VMEM ------------------
        out = pl.pallas_call(
            functools.partial(_fused_kernel, inv_p=1.0 / float(p)),
            out_shape=jax.ShapeDtypeStruct((n, 1, p), jnp.float32),
            grid_spec=pltpu.PrefetchScalarGridSpec(
                num_scalar_prefetch=0,
                grid=(n, 2, t),
                in_specs=[
                    # x only needed in phase 0; park on block 0 during phase 1.
                    pl.BlockSpec((1, cin, tp),
                                 lambda b, ph, j: (b, 0, j * (1 - ph))),
                    _full_spec(w1b), _full_spec(b1),
                    _full_spec(w2b), _full_spec(b2),
                    _full_spec(w3b), _full_spec(b3),
                    _full_spec(w4c), _full_spec(b4),
                ],
                # Output written only in phase 1; phase-gated index avoids any
                # garbage writeback during phase 0.
                out_specs=pl.BlockSpec((1, 1, tp),
                                       lambda b, ph, j: (b, 0, j * ph)),
                scratch_shapes=[
                    pltpu.VMEM((t, c2, tp), jnp.bfloat16),   # h2 stash
                    pltpu.VMEM((c2, 1), jnp.float32),        # sum
                    pltpu.VMEM((c2, 1), jnp.float32),        # sumsq
                ],
            ),
            compiler_params=pltpu.CompilerParams(
                dimension_semantics=("parallel", "arbitrary", "arbitrary"),
                vmem_limit_bytes=VMEM_LIMIT),
        )(xc, w1b, b1, w2b, b2, w3b, b3, w4c, b4)
        return out.reshape(n, 1, hd, wd)

    # ---- fallback: two-pass with bf16 h2 round-trip through HBM ----------
    h2, ssum, ssq = pl.pallas_call(
        _stats_kernel,
        out_shape=(jax.ShapeDtypeStruct((n, c2, p), jnp.bfloat16),
                   jax.ShapeDtypeStruct((n, c2, 1), jnp.float32),
                   jax.ShapeDtypeStruct((n, c2, 1), jnp.float32)),
        grid_spec=pltpu.PrefetchScalarGridSpec(
            num_scalar_prefetch=0,
            grid=(n, t),
            in_specs=[
                pl.BlockSpec((1, cin, tp), lambda b, j: (b, 0, j)),
                _full_spec(w1b), _full_spec(b1),
                _full_spec(w2b), _full_spec(b2),
            ],
            out_specs=[
                pl.BlockSpec((1, c2, tp), lambda b, j: (b, 0, j)),
                pl.BlockSpec((1, c2, 1), lambda b, j: (b, 0, 0)),
                pl.BlockSpec((1, c2, 1), lambda b, j: (b, 0, 0)),
            ],
        ),
        compiler_params=pltpu.CompilerParams(
            dimension_semantics=("parallel", "arbitrary"),
            vmem_limit_bytes=VMEM_LIMIT),
    )(xc, w1b, b1, w2b, b2)

    out = pl.pallas_call(
        functools.partial(_head_kernel, inv_p=1.0 / float(p)),
        out_shape=jax.ShapeDtypeStruct((n, 1, p), jnp.float32),
        grid_spec=pltpu.PrefetchScalarGridSpec(
            num_scalar_prefetch=0,
            grid=(n, t),
            in_specs=[
                pl.BlockSpec((1, c2, tp), lambda b, j: (b, 0, j)),
                pl.BlockSpec((1, c2, 1), lambda b, j: (b, 0, 0)),
                pl.BlockSpec((1, c2, 1), lambda b, j: (b, 0, 0)),
                _full_spec(w3b), _full_spec(b3),
                _full_spec(w4c), _full_spec(b4),
            ],
            out_specs=pl.BlockSpec((1, 1, tp), lambda b, j: (b, 0, j)),
        ),
        compiler_params=pltpu.CompilerParams(
            dimension_semantics=("parallel", "parallel"),
            vmem_limit_bytes=VMEM_LIMIT),
    )(h2, ssum, ssq, w3b, b3, w4c, b4)

    return out.reshape(n, 1, hd, wd)


# --------------------------------------------------------------------------
# Parameters & pure-JAX reference (f32, mirrors the PyTorch forward)
# --------------------------------------------------------------------------
def init_params(key, input_nc):
    """Conv2d(k=1) weights stored as (Cout, Cin); biases as (Cout, 1)."""
    dims = [(NDF, input_nc), (2 * NDF, NDF), (2 * NDF, 2 * NDF), (1, 2 * NDF)]
    params = []
    for i, (cout, cin) in enumerate(dims):
        kw, kb = jax.random.split(jax.random.fold_in(key, i))
        params.append(jax.random.normal(kw, (cout, cin), jnp.float32) * 0.05)
        params.append(jax.random.normal(kb, (cout, 1), jnp.float32) * 0.05)
    return tuple(params)


def reference_forward(x_nchw, params):
    w1, b1, w2, b2, w3, b3, w4, b4 = params
    xd = bilinear_downsample_quarter(x_nchw)
    n, cin, hd, wd = xd.shape
    h = xd.reshape(n, cin, hd * wd)
    h = _leaky_relu(jnp.einsum('oc,ncp->nop', w1, h) + b1)
    h = _leaky_relu(jnp.einsum('oc,ncp->nop', w2, h) + b2)
    mean = jnp.mean(h, axis=2, keepdims=True)
    var = jnp.mean((h - mean) ** 2, axis=2, keepdims=True)
    h = (h - mean) / jnp.sqrt(var + EPS)
    h = _leaky_relu(jnp.einsum('oc,ncp->nop', w3, h) + b3)
    out = jnp.einsum('oc,ncp->nop', w4, h) + b4
    return out.reshape(n, 1, hd, wd)


if __name__ == "__main__":
    key = jax.random.PRNGKey(0)
    kx, kp = jax.random.split(key)

    N, Cin, H, W = 2, 4, 16, 16
    x = jax.random.normal(kx, (N, Cin, H, W), jnp.float32)
    params = init_params(kp, Cin)

    y = jax.block_until_ready(jax.jit(pixel_discriminator)(x, params))
    y_ref = jax.block_until_ready(reference_forward(x, params))

    assert y.shape == (N, 1, H // 4, W // 4), y.shape
    # Tolerance accounts for bf16 MXU operands and the bf16 h2 stash
    # (reference is f32 end-to-end).
    assert jnp.allclose(y, y_ref, atol=5e-2, rtol=5e-2), \
        float(jnp.max(jnp.abs(y - y_ref)))
    print("KERNEL_OK")
</pallas_src>

<mosaic_0001>
module attributes {stable_mosaic.version = 11 : i64} {
  func.func @_fused_kernel(%arg0: i32, %arg1: i32, %arg2: i32, %arg3: memref<1x4x16xf32, #tpu.memory_space<vmem>>, %arg4: memref<128x4xbf16, #tpu.memory_space<vmem>>, %arg5: memref<128x1xf32, #tpu.memory_space<vmem>>, %arg6: memref<256x128xbf16, #tpu.memory_space<vmem>>, %arg7: memref<256x1xf32, #tpu.memory_space<vmem>>, %arg8: memref<256x256xbf16, #tpu.memory_space<vmem>>, %arg9: memref<256x1xf32, #tpu.memory_space<vmem>>, %arg10: memref<256x1xf32, #tpu.memory_space<vmem>>, %arg11: memref<1x1xf32, #tpu.memory_space<vmem>>, %arg12: memref<1x1x16xf32, #tpu.memory_space<vmem>>, %arg13: memref<1x256x16xbf16, #tpu.memory_space<vmem>>, %arg14: memref<256x1xf32, #tpu.memory_space<vmem>>, %arg15: memref<256x1xf32, #tpu.memory_space<vmem>>) attributes {dimension_semantics = [#tpu.dimension_semantics<parallel>, #tpu.dimension_semantics<arbitrary>, #tpu.dimension_semantics<arbitrary>], iteration_bounds = array<i64: 2, 2, 1>, scalar_prefetch = 0 : i64, scratch_operands = 3 : i64, tpu.core_type = #tpu.core_type<tc>, window_params = [{transform_indices = @transform_0, window_bounds = array<i64: 1, 4, 16>}, {pipeline_mode = #tpu.pipeline_mode<synchronous>, transform_indices = @transform_1, window_bounds = array<i64: 128, 4>}, {pipeline_mode = #tpu.pipeline_mode<synchronous>, transform_indices = @transform_2, window_bounds = array<i64: 128, 1>}, {pipeline_mode = #tpu.pipeline_mode<synchronous>, transform_indices = @transform_3, window_bounds = array<i64: 256, 128>}, {pipeline_mode = #tpu.pipeline_mode<synchronous>, transform_indices = @transform_4, window_bounds = array<i64: 256, 1>}, {pipeline_mode = #tpu.pipeline_mode<synchronous>, transform_indices = @transform_5, window_bounds = array<i64: 256, 256>}, {pipeline_mode = #tpu.pipeline_mode<synchronous>, transform_indices = @transform_6, window_bounds = array<i64: 256, 1>}, {pipeline_mode = #tpu.pipeline_mode<synchronous>, transform_indices = @transform_7, window_bounds = array<i64: 256, 1>}, {pipeline_mode = #tpu.pipeline_mode<synchronous>, transform_indices = @transform_8, window_bounds = array<i64: 1, 1>}, {transform_indices = @transform_9, window_bounds = array<i64: 1, 1, 16>}]} {
    %c0_i32 = arith.constant 0 : i32
    %0 = arith.cmpi eq, %arg1, %c0_i32 : i32
    %1 = arith.extui %0 : i1 to i32
    %c0_i32_0 = arith.constant 0 : i32
    %2 = arith.cmpi ne, %1, %c0_i32_0 : i32
    scf.if %2 {
      %c0_i32_2 = arith.constant 0 : i32
      %6 = arith.cmpi eq, %arg2, %c0_i32_2 : i32
      %7 = arith.extui %6 : i1 to i32
      %c0_i32_3 = arith.constant 0 : i32
      %8 = arith.cmpi ne, %7, %c0_i32_3 : i32
      scf.if %8 {
        %cst_31 = arith.constant 0.000000e+00 : f32
        %49 = vector.broadcast %cst_31 : f32 to vector<256x1xf32>
        %c0_32 = arith.constant 0 : index
        %c0_33 = arith.constant 0 : index
        %50 = vector.load %arg14[%c0_32, %c0_33] : memref<256x1xf32, #tpu.memory_space<vmem>>, vector<256x1xf32>
        tpu.vector_store %arg14[%c0_32, %c0_33], %49 {strides = array<i32>} : memref<256x1xf32, #tpu.memory_space<vmem>>, vector<256x1xf32>,
        %cst_34 = arith.constant 0.000000e+00 : f32
        %51 = vector.broadcast %cst_34 : f32 to vector<256x1xf32>
        %c0_35 = arith.constant 0 : index
        %c0_36 = arith.constant 0 : index
        %52 = vector.load %arg15[%c0_35, %c0_36] : memref<256x1xf32, #tpu.memory_space<vmem>>, vector<256x1xf32>
        tpu.vector_store %arg15[%c0_35, %c0_36], %51 {strides = array<i32>} : memref<256x1xf32, #tpu.memory_space<vmem>>, vector<256x1xf32>,
      } else {
      }
      %c0 = arith.constant 0 : index
      %c0_4 = arith.constant 0 : index
      %c0_5 = arith.constant 0 : index
      %9 = vector.load %arg3[%c0, %c0_4, %c0_5] : memref<1x4x16xf32, #tpu.memory_space<vmem>>, vector<1x4x16xf32>
      %10 = vector.shape_cast %9 : vector<1x4x16xf32> to vector<4x16xf32>
      %11 = arith.truncf %10 : vector<4x16xf32> to vector<4x16xbf16>
      %c0_6 = arith.constant 0 : index
      %c0_7 = arith.constant 0 : index
      %12 = vector.load %arg4[%c0_6, %c0_7] : memref<128x4xbf16, #tpu.memory_space<vmem>>, vector<128x4xbf16>
      %cst = arith.constant dense<0.000000e+00> : vector<128x16xf32>
      %13 = tpu.matmul %12, %11, %cst {dimension_numbers = #tpu.dot_dimension_numbers<[1], [0], [0], [1], [0, 0, 1, 1], [], []>} : vector<128x4xbf16>, vector<4x16xbf16>, vector<128x16xf32> -> vector<128x16xf32>
      %c0_8 = arith.constant 0 : index
      %c0_9 = arith.constant 0 : index
      %14 = vector.load %arg5[%c0_8, %c0_9] : memref<128x1xf32, #tpu.memory_space<vmem>>, vector<128x1xf32>
      %15 = vector.broadcast %14 : vector<128x1xf32> to vector<128x16xf32>
      %16 = arith.addf %13, %15 : vector<128x16xf32>
      %cst_10 = arith.constant 0.000000e+00 : f32
      %17 = vector.broadcast %cst_10 : f32 to vector<128x16xf32>
      %18 = arith.cmpf ogt, %16, %17 : vector<128x16xf32>
      %cst_11 = arith.constant 2.000000e-01 : f32
      %19 = vector.broadcast %cst_11 : f32 to vector<128x16xf32>
      %20 = arith.mulf %19, %16 : vector<128x16xf32>
      %21 = arith.select %18, %16, %20 : vector<128x16xi1>, vector<128x16xf32>
      %c0_12 = arith.constant 0 : index
      %c0_13 = arith.constant 0 : index
      %22 = vector.load %arg6[%c0_12, %c0_13] : memref<256x128xbf16, #tpu.memory_space<vmem>>, vector<256x128xbf16>
      %23 = arith.truncf %21 : vector<128x16xf32> to vector<128x16xbf16>
      %cst_14 = arith.constant dense<0.000000e+00> : vector<256x16xf32>
      %24 = tpu.matmul %22, %23, %cst_14 {dimension_numbers = #tpu.dot_dimension_numbers<[1], [0], [0], [1], [0, 0, 1, 1], [], []>} : vector<256x128xbf16>, vector<128x16xbf16>, vector<256x16xf32> -> vector<256x16xf32>
      %c0_15 = arith.constant 0 : index
      %c0_16 = arith.constant 0 : index
      %25 = vector.load %arg7[%c0_15, %c0_16] : memref<256x1xf32, #tpu.memory_space<vmem>>, vector<256x1xf32>
      %26 = vector.broadcast %25 : vector<256x1xf32> to vector<256x16xf32>
      %27 = arith.addf %24, %26 : vector<256x16xf32>
      %cst_17 = arith.constant 0.000000e+00 : f32
      %28 = vector.broadcast %cst_17 : f32 to vector<256x16xf32>
      %29 = arith.cmpf ogt, %27, %28 : vector<256x16xf32>
      %cst_18 = arith.constant 2.000000e-01 : f32
      %30 = vector.broadcast %cst_18 : f32 to vector<256x16xf32>
      %31 = arith.mulf %30, %27 : vector<256x16xf32>
      %32 = arith.select %29, %27, %31 : vector<256x16xi1>, vector<256x16xf32>
      %c0_19 = arith.constant 0 : index
      %c0_20 = arith.constant 0 : index
      %33 = vector.load %arg14[%c0_19, %c0_20] : memref<256x1xf32, #tpu.memory_space<vmem>>, vector<256x1xf32>
      %cst_21 = arith.constant dense<0.000000e+00> : vector<256xf32>
      %34 = vector.multi_reduction <add>, %32, %cst_21 [1] : vector<256x16xf32> to vector<256xf32>
      %35 = vector.shape_cast %34 : vector<256xf32> to vector<256x1xf32>
      %36 = arith.addf %33, %35 : vector<256x1xf32>
      %c0_22 = arith.constant 0 : index
      %c0_23 = arith.constant 0 : index
      %37 = vector.load %arg14[%c0_22, %c0_23] : memref<256x1xf32, #tpu.memory_space<vmem>>, vector<256x1xf32>
      tpu.vector_store %arg14[%c0_22, %c0_23], %36 {strides = array<i32>} : memref<256x1xf32, #tpu.memory_space<vmem>>, vector<256x1xf32>,
      %c0_24 = arith.constant 0 : index
      %c0_25 = arith.constant 0 : index
      %38 = vector.load %arg15[%c0_24, %c0_25] : memref<256x1xf32, #tpu.memory_space<vmem>>, vector<256x1xf32>
      %39 = arith.mulf %32, %32 : vector<256x16xf32>
      %cst_26 = arith.constant dense<0.000000e+00> : vector<256xf32>
      %40 = vector.multi_reduction <add>, %39, %cst_26 [1] : vector<256x16xf32> to vector<256xf32>
      %41 = vector.shape_cast %40 : vector<256xf32> to vector<256x1xf32>
      %42 = arith.addf %38, %41 : vector<256x1xf32>
      %c0_27 = arith.constant 0 : index
      %c0_28 = arith.constant 0 : index
      %43 = vector.load %arg15[%c0_27, %c0_28] : memref<256x1xf32, #tpu.memory_space<vmem>>, vector<256x1xf32>
      tpu.vector_store %arg15[%c0_27, %c0_28], %42 {strides = array<i32>} : memref<256x1xf32, #tpu.memory_space<vmem>>, vector<256x1xf32>,
      %44 = arith.truncf %32 : vector<256x16xf32> to vector<256x16xbf16>
      %45 = arith.index_cast %arg2 : i32 to index
      %c0_29 = arith.constant 0 : index
      %c0_30 = arith.constant 0 : index
      %46 = vector.load %arg13[%45, %c0_29, %c0_30] : memref<1x256x16xbf16, #tpu.memory_space<vmem>>, vector<1x256x16xbf16>
      %47 = vector.shape_cast %46 : vector<1x256x16xbf16> to vector<256x16xbf16>
      %48 = vector.shape_cast %44 : vector<256x16xbf16> to vector<1x256x16xbf16>
      tpu.vector_store %arg13[%45, %c0_29, %c0_30], %48 {strides = array<i32>} : memref<1x256x16xbf16, #tpu.memory_space<vmem>>, vector<1x256x16xbf16>,
    } else {
    }
    %c1_i32 = arith.constant 1 : i32
    %3 = arith.cmpi eq, %arg1, %c1_i32 : i32
    %4 = arith.extui %3 : i1 to i32
    %c0_i32_1 = arith.constant 0 : i32
    %5 = arith.cmpi ne, %4, %c0_i32_1 : i32
    scf.if %5 {
      %c0 = arith.constant 0 : index
      %c0_2 = arith.constant 0 : index
      %6 = vector.load %arg14[%c0, %c0_2] : memref<256x1xf32, #tpu.memory_space<vmem>>, vector<256x1xf32>
      %cst = arith.constant 6.250000e-02 : f32
      %7 = vector.broadcast %cst : f32 to vector<256x1xf32>
      %8 = arith.mulf %6, %7 : vector<256x1xf32>
      %c0_3 = arith.constant 0 : index
      %c0_4 = arith.constant 0 : index
      %9 = vector.load %arg15[%c0_3, %c0_4] : memref<256x1xf32, #tpu.memory_space<vmem>>, vector<256x1xf32>
      %cst_5 = arith.constant 6.250000e-02 : f32
      %10 = vector.broadcast %cst_5 : f32 to vector<256x1xf32>
      %11 = arith.mulf %9, %10 : vector<256x1xf32>
      %12 = arith.mulf %8, %8 : vector<256x1xf32>
      %13 = arith.subf %11, %12 : vector<256x1xf32>
      %cst_6 = arith.constant 0.000000e+00 : f32
      %14 = vector.broadcast %cst_6 : f32 to vector<256x1xf32>
      %15 = arith.maximumf %13, %14 : vector<256x1xf32>
      %cst_7 = arith.constant 9.99999974E-6 : f32
      %16 = vector.broadcast %cst_7 : f32 to vector<256x1xf32>
      %17 = arith.addf %15, %16 : vector<256x1xf32>
      %18 = math.rsqrt %17 : vector<256x1xf32>
      %19 = arith.index_cast %arg2 : i32 to index
      %c0_8 = arith.constant 0 : index
      %c0_9 = arith.constant 0 : index
      %20 = vector.load %arg13[%19, %c0_8, %c0_9] : memref<1x256x16xbf16, #tpu.memory_space<vmem>>, vector<1x256x16xbf16>
      %21 = vector.shape_cast %20 : vector<1x256x16xbf16> to vector<256x16xbf16>
      %22 = arith.extf %21 : vector<256x16xbf16> to vector<256x16xf32>
      %23 = vector.broadcast %8 : vector<256x1xf32> to vector<256x16xf32>
      %24 = arith.subf %22, %23 : vector<256x16xf32>
      %25 = vector.broadcast %18 : vector<256x1xf32> to vector<256x16xf32>
      %26 = arith.mulf %24, %25 : vector<256x16xf32>
      %c0_10 = arith.constant 0 : index
      %c0_11 = arith.constant 0 : index
      %27 = vector.load %arg8[%c0_10, %c0_11] : memref<256x256xbf16, #tpu.memory_space<vmem>>, vector<256x256xbf16>
      %28 = arith.truncf %26 : vector<256x16xf32> to vector<256x16xbf16>
      %cst_12 = arith.constant dense<0.000000e+00> : vector<256x16xf32>
      %29 = tpu.matmul %27, %28, %cst_12 {dimension_numbers = #tpu.dot_dimension_numbers<[1], [0], [0], [1], [0, 0, 1, 1], [], []>} : vector<256x256xbf16>, vector<256x16xbf16>, vector<256x16xf32> -> vector<256x16xf32>
      %c0_13 = arith.constant 0 : index
      %c0_14 = arith.constant 0 : index
      %30 = vector.load %arg9[%c0_13, %c0_14] : memref<256x1xf32, #tpu.memory_space<vmem>>, vector<256x1xf32>
      %31 = vector.broadcast %30 : vector<256x1xf32> to vector<256x16xf32>
      %32 = arith.addf %29, %31 : vector<256x16xf32>
      %cst_15 = arith.constant 0.000000e+00 : f32
      %33 = vector.broadcast %cst_15 : f32 to vector<256x16xf32>
      %34 = arith.cmpf ogt, %32, %33 : vector<256x16xf32>
      %cst_16 = arith.constant 2.000000e-01 : f32
      %35 = vector.broadcast %cst_16 : f32 to vector<256x16xf32>
      %36 = arith.mulf %35, %32 : vector<256x16xf32>
      %37 = arith.select %34, %32, %36 : vector<256x16xi1>, vector<256x16xf32>
      %c0_17 = arith.constant 0 : index
      %c0_18 = arith.constant 0 : index
      %38 = vector.load %arg10[%c0_17, %c0_18] : memref<256x1xf32, #tpu.memory_space<vmem>>, vector<256x1xf32>
      %39 = vector.broadcast %38 : vector<256x1xf32> to vector<256x16xf32>
      %40 = arith.mulf %37, %39 : vector<256x16xf32>
      %cst_19 = arith.constant dense<0.000000e+00> : vector<16xf32>
      %41 = vector.multi_reduction <add>, %40, %cst_19 [0] : vector<256x16xf32> to vector<16xf32>
      %42 = vector.shape_cast %41 : vector<16xf32> to vector<1x16xf32>
      %c0_20 = arith.constant 0 : index
      %c0_21 = arith.constant 0 : index
      %43 = vector.load %arg11[%c0_20, %c0_21] : memref<1x1xf32, #tpu.memory_space<vmem>>, vector<1x1xf32>
      %44 = vector.broadcast %43 : vector<1x1xf32> to vector<1x16xf32>
      %45 = arith.addf %42, %44 : vector<1x16xf32>
      %c0_22 = arith.constant 0 : index
      %c0_23 = arith.constant 0 : index
      %c0_24 = arith.constant 0 : index
      %46 = vector.load %arg12[%c0_22, %c0_23, %c0_24] : memref<1x1x16xf32, #tpu.memory_space<vmem>>, vector<1x1x16xf32>
      %47 = vector.shape_cast %46 : vector<1x1x16xf32> to vector<1x16xf32>
      %48 = vector.shape_cast %45 : vector<1x16xf32> to vector<1x1x16xf32>
      tpu.vector_store %arg12[%c0_22, %c0_23, %c0_24], %48 {strides = array<i32>} : memref<1x1x16xf32, #tpu.memory_space<vmem>>, vector<1x1x16xf32>,
    } else {
    }
    return
  }
  func.func @transform_0(%arg0: i32, %arg1: i32, %arg2: i32) -> (i32, i32, i32) {
    %c1_i32 = arith.constant 1 : i32
    %0 = arith.subi %c1_i32, %arg1 : i32
    %1 = arith.muli %arg2, %0 : i32
    %c0_i32 = arith.constant 0 : i32
    %c0_i32_0 = arith.constant 0 : i32
    return %arg0, %c0_i32, %1 : i32, i32, i32
  }
  func.func @transform_1(%arg0: i32, %arg1: i32, %arg2: i32) -> (i32, i32) {
    %c0_i32 = arith.constant 0 : i32
    %c0_i32_0 = arith.constant 0 : i32
    %c0_i32_1 = arith.constant 0 : i32
    return %c0_i32, %c0_i32_0 : i32, i32
  }
  func.func @transform_2(%arg0: i32, %arg1: i32, %arg2: i32) -> (i32, i32) {
    %c0_i32 = arith.constant 0 : i32
    %c0_i32_0 = arith.constant 0 : i32
    %c0_i32_1 = arith.constant 0 : i32
    return %c0_i32, %c0_i32_0 : i32, i32
  }
  func.func @transform_3(%arg0: i32, %arg1: i32, %arg2: i32) -> (i32, i32) {
    %c0_i32 = arith.constant 0 : i32
    %c0_i32_0 = arith.constant 0 : i32
    %c0_i32_1 = arith.constant 0 : i32
    return %c0_i32, %c0_i32_0 : i32, i32
  }
  func.func @transform_4(%arg0: i32, %arg1: i32, %arg2: i32) -> (i32, i32) {
    %c0_i32 = arith.constant 0 : i32
    %c0_i32_0 = arith.constant 0 : i32
    %c0_i32_1 = arith.constant 0 : i32
    return %c0_i32, %c0_i32_0 : i32, i32
  }
  func.func @transform_5(%arg0: i32, %arg1: i32, %arg2: i32) -> (i32, i32) {
    %c0_i32 = arith.constant 0 : i32
    %c0_i32_0 = arith.constant 0 : i32
    %c0_i32_1 = arith.constant 0 : i32
    return %c0_i32, %c0_i32_0 : i32, i32
  }
  func.func @transform_6(%arg0: i32, %arg1: i32, %arg2: i32) -> (i32, i32) {
    %c0_i32 = arith.constant 0 : i32
    %c0_i32_0 = arith.constant 0 : i32
    %c0_i32_1 = arith.constant 0 : i32
    return %c0_i32, %c0_i32_0 : i32, i32
  }
  func.func @transform_7(%arg0: i32, %arg1: i32, %arg2: i32) -> (i32, i32) {
    %c0_i32 = arith.constant 0 : i32
    %c0_i32_0 = arith.constant 0 : i32
    %c0_i32_1 = arith.constant 0 : i32
    return %c0_i32, %c0_i32_0 : i32, i32
  }
  func.func @transform_8(%arg0: i32, %arg1: i32, %arg2: i32) -> (i32, i32) {
    %c0_i32 = arith.constant 0 : i32
    %c0_i32_0 = arith.constant 0 : i32
    %c0_i32_1 = arith.constant 0 : i32
    return %c0_i32, %c0_i32_0 : i32, i32
  }
  func.func @transform_9(%arg0: i32, %arg1: i32, %arg2: i32) -> (i32, i32, i32) {
    %0 = arith.muli %arg2, %arg1 : i32
    %c0_i32 = arith.constant 0 : i32
    %c0_i32_0 = arith.constant 0 : i32
    return %arg0, %c0_i32, %0 : i32, i32, i32
  }
}

</mosaic_0001>

<llo_original>
// kernel: pixel_discriminator.1
$region0: #{pixel_discriminator.1}
  #allocation0 [shape = 'u32[]', space=smem, size = 0x4, offset = 0x4, fixed_abs, tag = 'smem constant byte address 0x4 - core index']
  #allocation1 [shape = 'u32[72,128]{1,0:T(1,128)}', space=vmem, size = 0x9000, scoped, tag = 'internal scratch']
  #allocation2 [shape = 'bf16[1,256,16]{2,1,0:T(8,128)(2,1)}', space=vmem, size = 0x10000, scoped, tag = 'scratch operand']
  #allocation3 [shape = 'f32[256,1]{1,0:T(8,128)}', space=vmem, size = 0x20000, scoped, tag = 'scratch operand']
  #allocation4 [shape = 'f32[256,1]{1,0:T(8,128)}', space=vmem, size = 0x20000, scoped, tag = 'scratch operand']
  #allocation5 [shape = 'f32[1,1]{1,0:T(1,128)S(1)}', space=vmem, size = 0x200, scoped, tag = 'scoped memory for pixel_discriminator.1']
  %s0 = inlined_call_operand.vmem [shape: f32[2,4,16], index: 0, kind: input, shape index: {}]
  %s1 = inlined_call_operand.vmem [shape: bf16[128,4], index: 1, kind: input, shape index: {}]
  %s2 = inlined_call_operand.vmem [shape: f32[128,1], index: 2, kind: input, shape index: {}]
  %s3 = inlined_call_operand.vmem [shape: bf16[256,128], index: 3, kind: input, shape index: {}]
  %s4 = inlined_call_operand.vmem [shape: f32[256,1], index: 4, kind: input, shape index: {}]
  %s5 = inlined_call_operand.vmem [shape: bf16[256,256], index: 5, kind: input, shape index: {}]
  %s6 = inlined_call_operand.vmem [shape: f32[256,1], index: 6, kind: input, shape index: {}]
  %s7 = inlined_call_operand.vmem [shape: f32[256,1], index: 7, kind: input, shape index: {}]
  %s8 = inlined_call_operand.<no memory space> [shape: f32[1,1], index: 8, kind: input, shape index: {}]
  %s9 = inlined_call_operand.vmem [shape: f32[2,1,16], index: 9, kind: output, shape index: {}]
  %s10 = sld [smem:[#allocation0]]
  $region81: #{pixel_discriminator.1} parent=0
    _
  %s12 = ssub.s32 1, %s10
  %s13 = scalar_select 0, %s12, %s10
  %v14 = vstv %s8
  %15 = vst [vmem:[#allocation5] sm:$0x1] %v14
  loop: start=0, step=1, limit=6
  $region2: #{pixel_discriminator.1} parent=0 // loop_pre_header
    _
  $region3: #{pixel_discriminator.1} parent=0 // loop_header
    %s17 = sphi 0, %s21
    %p18 = scmp.ge.s32.totalorder %s17, 6
    %s24 = sphi 0, %s43
    %s25 = sphi 0, %s39
    %s26 = sphi 0, %s35
    %s27 = sphi 0, %s24
    %s28 = sphi 0, %s25
    %s29 = sphi 0, %s26
    %s30 = sphi 0, %s27
    %s31 = sphi 0, %s28
    %s32 = sphi 0, %s29
    %s52 = sphi 0, %s54
    %s55 = sphi 0, %s52
    %s56 = sphi 0, %s55
    %s72 = sphi 0, %s56
    %s76 = sphi 0, %s76
    %s78 = sphi 0, %s76
    %s79 = sphi 0, %s78
    %s93 = sphi 0, %s79
    %s97 = sphi 0, %s97
    %s99 = sphi 0, %s97
    %s100 = sphi 0, %s99
    %s114 = sphi 0, %s100
    %s118 = sphi 0, %s118
    %s120 = sphi 0, %s118
    %s121 = sphi 0, %s120
    %s135 = sphi 0, %s121
    %s139 = sphi 0, %s139
    %s141 = sphi 0, %s139
    %s142 = sphi 0, %s141
    %s156 = sphi 0, %s142
    %s160 = sphi 0, %s160
    %s162 = sphi 0, %s160
    %s163 = sphi 0, %s162
    %s177 = sphi 0, %s163
    %s181 = sphi 0, %s181
    %s183 = sphi 0, %s181
    %s184 = sphi 0, %s183
    %s198 = sphi 0, %s184
    %s202 = sphi 0, %s202
    %s204 = sphi 0, %s202
    %s205 = sphi 0, %s204
    %s219 = sphi 0, %s205
    %s223 = sphi 0, %s223
    %s225 = sphi 0, %s223
    %s226 = sphi 0, %s225
    %s240 = sphi 0, %s226
    %s250 = sphi 0, %s252
    %s253 = sphi 0, %s250
    %s254 = sphi 0, %s253
    %s270 = sphi 0, %s254
  $region4: #{pixel_discriminator.1} parent=0 // loop_header_branch
    %20 = sbr.rel (%p18) target = $region8
  $region5: #{pixel_discriminator.1} parent=0 // loop_body
    %s22 = ssub.s32 %s17, 1
    %s23 = ssub.s32 %s17, 2
    %s33 = sadd.s32 1, %s26
    %p34 = scmp.ge.s32.totalorder %s33, 1
    %s35 = scalar_select %p34, 0, %s33
    %s36 = sadd.s32 1, %s25
    %s37 = scalar_select %p34, %s36, %s25
    %p38 = scmp.ge.s32.totalorder %s37, 2
    %s39 = scalar_select %p38, 0, %s37
    %s40 = sadd.s32 1, %s24
    %s41 = scalar_select %p38, %s40, %s24
    %p42 = scmp.ge.s32.totalorder %s41, 2
    %s43 = scalar_select %p42, 0, %s41
    %s44 = ssub.s32 1, %s25
    %s45 = smul.u32 %s26, %s44
    %s46 = ssub.s32 1, %s39
    %s47 = smul.u32 %s35, %s46
    %s48 = ssub.s32 %s24, %s43
    %s49 = ssub.s32 %s45, %s47
    %s50 = sor.u32 %s48, %s49
    %p51 = scmp.eq.s32.totalorder %s50, 0
    %s53 = sadd.s32 %s52, 1
    %s54 = scalar_select %p51, %s52, %s53
    %p57 = pneg %p51
    %p58 = scmp.eq.s32.totalorder %s17, 3
    %p59 = por %p57, %p58
    %p60 = scmp.ne.s32.totalorder %s52, %s55
    %p61 = scmp.eq.s32.totalorder %s17, 0
    %p62 = por %p60, %p61
    %p63 = scmp.ne.s32.totalorder %s52, %s55
    %p64 = scmp.eq.s32.totalorder %s22, 3
    %p65 = por %p63, %p64
    %p66 = scmp.ne.s32.totalorder %s55, %s56
    %p67 = scmp.eq.s32.totalorder %s22, 0
    %p68 = por %p66, %p67
    %p69 = scmp.ne.s32.totalorder %s55, %s56
    %p70 = scmp.eq.s32.totalorder %s23, 3
    %p71 = por %p69, %p70
    %p73 = scmp.ne.s32.totalorder %s56, %s72
    %p74 = scmp.eq.s32.totalorder %s23, 0
    %p75 = por %p73, %p74
    %s77 = sadd.s32 %s76, 1
    %p80 = scmp.eq.s32.totalorder %s17, 3
    %p81 = scmp.ne.s32.totalorder %s76, %s78
    %p82 = scmp.eq.s32.totalorder %s17, 0
    %p83 = por %p81, %p82
    %p84 = scmp.ne.s32.totalorder %s76, %s78
    %p85 = scmp.eq.s32.totalorder %s22, 3
    %p86 = por %p84, %p85
    %p87 = scmp.ne.s32.totalorder %s78, %s79
    %p88 = scmp.eq.s32.totalorder %s22, 0
    %p89 = por %p87, %p88
    %p90 = scmp.ne.s32.totalorder %s78, %s79
    %p91 = scmp.eq.s32.totalorder %s23, 3
    %p92 = por %p90, %p91
    %p94 = scmp.ne.s32.totalorder %s79, %s93
    %p95 = scmp.eq.s32.totalorder %s23, 0
    %p96 = por %p94, %p95
    %s98 = sadd.s32 %s97, 1
    %p101 = scmp.eq.s32.totalorder %s17, 3
    %p102 = scmp.ne.s32.totalorder %s97, %s99
    %p103 = scmp.eq.s32.totalorder %s17, 0
    %p104 = por %p102, %p103
    %p105 = scmp.ne.s32.totalorder %s97, %s99
    %p106 = scmp.eq.s32.totalorder %s22, 3
    %p107 = por %p105, %p106
    %p108 = scmp.ne.s32.totalorder %s99, %s100
    %p109 = scmp.eq.s32.totalorder %s22, 0
    %p110 = por %p108, %p109
    %p111 = scmp.ne.s32.totalorder %s99, %s100
    %p112 = scmp.eq.s32.totalorder %s23, 3
    %p113 = por %p111, %p112
    %p115 = scmp.ne.s32.totalorder %s100, %s114
    %p116 = scmp.eq.s32.totalorder %s23, 0
    %p117 = por %p115, %p116
    %s119 = sadd.s32 %s118, 1
    %p122 = scmp.eq.s32.totalorder %s17, 3
    %p123 = scmp.ne.s32.totalorder %s118, %s120
    %p124 = scmp.eq.s32.totalorder %s17, 0
    %p125 = por %p123, %p124
    %p126 = scmp.ne.s32.totalorder %s118, %s120
    %p127 = scmp.eq.s32.totalorder %s22, 3
    %p128 = por %p126, %p127
    %p129 = scmp.ne.s32.totalorder %s120, %s121
    %p130 = scmp.eq.s32.totalorder %s22, 0
    %p131 = por %p129, %p130
    %p132 = scmp.ne.s32.totalorder %s120, %s121
    %p133 = scmp.eq.s32.totalorder %s23, 3
    %p134 = por %p132, %p133
    %p136 = scmp.ne.s32.totalorder %s121, %s135
    %p137 = scmp.eq.s32.totalorder %s23, 0
    %p138 = por %p136, %p137
    %s140 = sadd.s32 %s139, 1
    %p143 = scmp.eq.s32.totalorder %s17, 3
    %p144 = scmp.ne.s32.totalorder %s139, %s141
    %p145 = scmp.eq.s32.totalorder %s17, 0
    %p146 = por %p144, %p145
    %p147 = scmp.ne.s32.totalorder %s139, %s141
    %p148 = scmp.eq.s32.totalorder %s22, 3
    %p149 = por %p147, %p148
    %p150 = scmp.ne.s32.totalorder %s141, %s142
    %p151 = scmp.eq.s32.totalorder %s22, 0
    %p152 = por %p150, %p151
    %p153 = scmp.ne.s32.totalorder %s141, %s142
    %p154 = scmp.eq.s32.totalorder %s23, 3
    %p155 = por %p153, %p154
    %p157 = scmp.ne.s32.totalorder %s142, %s156
    %p158 = scmp.eq.s32.totalorder %s23, 0
    %p159 = por %p157, %p158
    %s161 = sadd.s32 %s160, 1
    %p164 = scmp.eq.s32.totalorder %s17, 3
    %p165 = scmp.ne.s32.totalorder %s160, %s162
    %p166 = scmp.eq.s32.totalorder %s17, 0
    %p167 = por %p165, %p166
    %p168 = scmp.ne.s32.totalorder %s160, %s162
    %p169 = scmp.eq.s32.totalorder %s22, 3
    %p170 = por %p168, %p169
    %p171 = scmp.ne.s32.totalorder %s162, %s163
    %p172 = scmp.eq.s32.totalorder %s22, 0
    %p173 = por %p171, %p172
    %p174 = scmp.ne.s32.totalorder %s162, %s163
    %p175 = scmp.eq.s32.totalorder %s23, 3
    %p176 = por %p174, %p175
    %p178 = scmp.ne.s32.totalorder %s163, %s177
    %p179 = scmp.eq.s32.totalorder %s23, 0
    %p180 = por %p178, %p179
    %s182 = sadd.s32 %s181, 1
    %p185 = scmp.eq.s32.totalorder %s17, 3
    %p186 = scmp.ne.s32.totalorder %s181, %s183
    %p187 = scmp.eq.s32.totalorder %s17, 0
    %p188 = por %p186, %p187
    %p189 = scmp.ne.s32.totalorder %s181, %s183
    %p190 = scmp.eq.s32.totalorder %s22, 3
    %p191 = por %p189, %p190
    %p192 = scmp.ne.s32.totalorder %s183, %s184
    %p193 = scmp.eq.s32.totalorder %s22, 0
    %p194 = por %p192, %p193
    %p195 = scmp.ne.s32.totalorder %s183, %s184
    %p196 = scmp.eq.s32.totalorder %s23, 3
    %p197 = por %p195, %p196
    %p199 = scmp.ne.s32.totalorder %s184, %s198
    %p200 = scmp.eq.s32.totalorder %s23, 0
    %p201 = por %p199, %p200
    %s203 = sadd.s32 %s202, 1
    %p206 = scmp.eq.s32.totalorder %s17, 3
    %p207 = scmp.ne.s32.totalorder %s202, %s204
    %p208 = scmp.eq.s32.totalorder %s17, 0
    %p209 = por %p207, %p208
    %p210 = scmp.ne.s32.totalorder %s202, %s204
    %p211 = scmp.eq.s32.totalorder %s22, 3
    %p212 = por %p210, %p211
    %p213 = scmp.ne.s32.totalorder %s204, %s205
    %p214 = scmp.eq.s32.totalorder %s22, 0
    %p215 = por %p213, %p214
    %p216 = scmp.ne.s32.totalorder %s204, %s205
    %p217 = scmp.eq.s32.totalorder %s23, 3
    %p218 = por %p216, %p217
    %p220 = scmp.ne.s32.totalorder %s205, %s219
    %p221 = scmp.eq.s32.totalorder %s23, 0
    %p222 = por %p220, %p221
    %s224 = sadd.s32 %s223, 1
    %p227 = scmp.eq.s32.totalorder %s17, 3
    %p228 = scmp.ne.s32.totalorder %s223, %s225
    %p229 = scmp.eq.s32.totalorder %s17, 0
    %p230 = por %p228, %p229
    %p231 = scmp.ne.s32.totalorder %s223, %s225
    %p232 = scmp.eq.s32.totalorder %s22, 3
    %p233 = por %p231, %p232
    %p234 = scmp.ne.s32.totalorder %s225, %s226
    %p235 = scmp.eq.s32.totalorder %s22, 0
    %p236 = por %p234, %p235
    %p237 = scmp.ne.s32.totalorder %s225, %s226
    %p238 = scmp.eq.s32.totalorder %s23, 3
    %p239 = por %p237, %p238
    %p241 = scmp.ne.s32.totalorder %s226, %s240
    %p242 = scmp.eq.s32.totalorder %s23, 0
    %p243 = por %p241, %p242
    %s244 = smul.u32 %s26, %s25
    %s245 = smul.u32 %s35, %s39
    %s246 = ssub.s32 %s24, %s43
    %s247 = ssub.s32 %s244, %s245
    %s248 = sor.u32 %s246, %s247
    %p249 = scmp.eq.s32.totalorder %s248, 0
    %s251 = sadd.s32 %s250, 1
    %s252 = scalar_select %p249, %s250, %s251
    %p255 = pneg %p249
    %p256 = scmp.eq.s32.totalorder %s17, 3
    %p257 = por %p255, %p256
    %p258 = scmp.ne.s32.totalorder %s250, %s253
    %p259 = scmp.eq.s32.totalorder %s17, 0
    %p260 = por %p258, %p259
    %p261 = scmp.ne.s32.totalorder %s250, %s253
    %p262 = scmp.eq.s32.totalorder %s22, 3
    %p263 = por %p261, %p262
    %p264 = scmp.ne.s32.totalorder %s253, %s254
    %p265 = scmp.eq.s32.totalorder %s22, 0
    %p266 = por %p264, %p265
    %p267 = scmp.ne.s32.totalorder %s253, %s254
    %p268 = scmp.eq.s32.totalorder %s23, 3
    %p269 = por %p267, %p268
    %p271 = scmp.ne.s32.totalorder %s254, %s270
    %p272 = scmp.eq.s32.totalorder %s23, 0
    %p273 = por %p271, %p272
    %p274 = scmp.le.s32.totalorder 1, %s17
    %p275 = scmp.lt.s32.totalorder %s17, 5
    %p276 = pnand %p274, %p275
    %p277 = pneg %p276
    // Predicated region
    $region9: #{pixel_discriminator.1} parent=5 // pred_check
      _
    $region10: #{pixel_discriminator.1} parent=5 // pred_check_branch
      %279 = sbr.rel (%p276) target = $region12
    $region11: #{pixel_discriminator.1} parent=5 // pred_region
      %s280 = ssub.s32 %s17, 1
      // Predicated region
      $region13: #{pixel_discriminator.1} parent=11 // pred_check
        %p281 = pneg %p89
      $region14: #{pixel_discriminator.1} parent=11 // pred_check_branch
        %283 = sbr.rel (%p281) target = $region16
      $region15: #{pixel_discriminator.1} parent=11 // pred_region
        _
      $region16: #{pixel_discriminator.1} parent=11 // pred_fallthru
        _
      // Predicated region
      $region17: #{pixel_discriminator.1} parent=11 // pred_check
        %p284 = pneg %p110
      $region18: #{pixel_discriminator.1} parent=11 // pred_check_branch
        %286 = sbr.rel (%p284) target = $region20
      $region19: #{pixel_discriminator.1} parent=11 // pred_region
        _
      $region20: #{pixel_discriminator.1} parent=11 // pred_fallthru
        _
      // Predicated region
      $region21: #{pixel_discriminator.1} parent=11 // pred_check
        %p287 = pneg %p131
      $region22: #{pixel_discriminator.1} parent=11 // pred_check_branch
        %289 = sbr.rel (%p287) target = $region24
      $region23: #{pixel_discriminator.1} parent=11 // pred_region
        _
      $region24: #{pixel_discriminator.1} parent=11 // pred_fallthru
        _
      // Predicated region
      $region25: #{pixel_discriminator.1} parent=11 // pred_check
        %p290 = pneg %p152
      $region26: #{pixel_discriminator.1} parent=11 // pred_check_branch
        %292 = sbr.rel (%p290) target = $region28
      $region27: #{pixel_discriminator.1} parent=11 // pred_region
        _
      $region28: #{pixel_discriminator.1} parent=11 // pred_fallthru
        _
      // Predicated region
      $region29: #{pixel_discriminator.1} parent=11 // pred_check
        %p293 = pneg %p173
      $region30: #{pixel_discriminator.1} parent=11 // pred_check_branch
        %295 = sbr.rel (%p293) target = $region32
      $region31: #{pixel_discriminator.1} parent=11 // pred_region
        _
      $region32: #{pixel_discriminator.1} parent=11 // pred_fallthru
        _
      // Predicated region
      $region33: #{pixel_discriminator.1} parent=11 // pred_check
        %p296 = pneg %p194
      $region34: #{pixel_discriminator.1} parent=11 // pred_check_branch
        %298 = sbr.rel (%p296) target = $region36
      $region35: #{pixel_discriminator.1} parent=11 // pred_region
        _
      $region36: #{pixel_discriminator.1} parent=11 // pred_fallthru
        _
      // Predicated region
      $region37: #{pixel_discriminator.1} parent=11 // pred_check
        %p299 = pneg %p215
      $region38: #{pixel_discriminator.1} parent=11 // pred_check_branch
        %301 = sbr.rel (%p299) target = $region40
      $region39: #{pixel_discriminator.1} parent=11 // pred_region
        _
      $region40: #{pixel_discriminator.1} parent=11 // pred_fallthru
        _
      // Predicated region
      $region41: #{pixel_discriminator.1} parent=11 // pred_check
        %p302 = pneg %p236
      $region42: #{pixel_discriminator.1} parent=11 // pred_check_branch
        %304 = sbr.rel (%p302) target = $region44
      $region43: #{pixel_discriminator.1} parent=11 // pred_region
        _
      $region44: #{pixel_discriminator.1} parent=11 // pred_fallthru
        _
    $region12: #{pixel_discriminator.1} parent=5 // pred_fallthru
      _
    %p305 = scmp.lt.s32.totalorder %s17, 4
    // Predicated region
    $region45: #{pixel_discriminator.1} parent=5 // pred_check
      %p306 = pneg %p305
    $region46: #{pixel_discriminator.1} parent=5 // pred_check_branch
      %308 = sbr.rel (%p306) target = $region48
    $region47: #{pixel_discriminator.1} parent=5 // pred_region
      // Predicated region
      $region49: #{pixel_discriminator.1} parent=47 // pred_check
        %p309 = pneg %p62
      $region50: #{pixel_discriminator.1} parent=47 // pred_check_branch
        %311 = sbr.rel (%p309) target = $region52
      $region51: #{pixel_discriminator.1} parent=47 // pred_region
        %s312 = ssub.s32 1, %s25
        %s313 = smul.u32 %s26, %s312
        %p314 = scmp.lt.s32.totalorder %s24, 1
        %s315 = scalar_select %p314, %s24, 1
        %p316 = scmp.lt.s32.totalorder %s313, 0
        %s317 = scalar_select %p316, %s313, 0
        %s318 = sadd.s32 %s317, %s315
        %s319 = smul.addr %s318, 4
        %s320 = scalar_lea.vmem %s0, %s319
        %s321 = ssub.s32 1, %s25
        %s322 = smul.u32 %s26, %s321
      $region52: #{pixel_discriminator.1} parent=47 // pred_fallthru
        _
    $region48: #{pixel_discriminator.1} parent=5 // pred_fallthru
      _
    %p323 = scmp.le.s32.totalorder 1, %s17
    %p324 = scmp.lt.s32.totalorder %s17, 5
    %p325 = pnand %p323, %p324
    %p326 = pneg %p325
    // Predicated region
    $region53: #{pixel_discriminator.1} parent=5 // pred_check
      _
    $region54: #{pixel_discriminator.1} parent=5 // pred_check_branch
      %328 = sbr.rel (%p325) target = $region56
    $region55: #{pixel_discriminator.1} parent=5 // pred_region
      %s329 = ssub.s32 %s17, 1
      %s330 = ssub.s32 1, %s28
      %s331 = smul.u32 %s29, %s330
      %p332 = scmp.lt.s32.totalorder %s27, 1
      %s333 = scalar_select %p332, %s27, 1
      %p334 = scmp.lt.s32.totalorder %s331, 0
      %s335 = scalar_select %p334, %s331, 0
      %s336 = sadd.s32 %s335, %s333
      %s337 = smul.addr %s336, 4
      %s338 = scalar_lea.vmem %s0, %s337
      %p339 = pneg %p68
      %p340 = pneg %p65
      %p341 = pneg %p89
      %p342 = pneg %p86
      %p343 = pneg %p110
      %p344 = pneg %p107
      %p345 = pneg %p131
      %p346 = pneg %p128
      %p347 = pneg %p152
      %p348 = pneg %p149
      %p349 = pneg %p173
      %p350 = pneg %p170
      %p351 = pneg %p194
      %p352 = pneg %p191
      %p353 = pneg %p215
      %p354 = pneg %p212
      %p355 = pneg %p236
      %p356 = pneg %p233
      %p357 = pneg %p266
      %p358 = pneg %p263
      %s359 = smul.u32 %s29, %s28
      %p360 = scmp.lt.s32.totalorder %s27, 1
      %s361 = scalar_select %p360, %s27, 1
      %p362 = scmp.lt.s32.totalorder %s359, 0
      %s363 = scalar_select %p362, %s359, 0
      %s364 = sadd.s32 %s363, %s361
      %s365 = scalar_lea.vmem %s9, %s364
      %s366 = ssub.s32 1, %s28
      %s367 = smul.u32 %s29, %s366
      %p368 = scmp.lt.s32.totalorder %s27, 1
      %s369 = scalar_select %p368, %s27, 1
      %p370 = scmp.lt.s32.totalorder %s367, 0
      %s371 = scalar_select %p370, %s367, 0
      %s372 = sadd.s32 %s371, %s369
      %s373 = smul.addr %s372, 4
      %s374 = scalar_lea.vmem %s0, %s373
      %s375 = ssub.s32 1, %s28
      %s376 = smul.u32 %s29, %s375
      %s377 = smul.u32 %s29, %s28
      %p378 = scmp.lt.s32.totalorder %s27, 1
      %s379 = scalar_select %p378, %s27, 1
      %p380 = scmp.lt.s32.totalorder %s377, 0
      %s381 = scalar_select %p380, %s377, 0
      %s382 = sadd.s32 %s381, %s379
      %s383 = scalar_lea.vmem %s9, %s382
      %s384 = smul.u32 %s29, %s28
      %p386 = scmp.eq.s32.totalorder %s28, 0
      // Predicated region
      $region57: #{pixel_discriminator.1} parent=55 // pred_check
        %p387 = pneg %p386
      $region58: #{pixel_discriminator.1} parent=55 // pred_check_branch
        %389 = sbr.rel (%p387) target = $region60
      $region59: #{pixel_discriminator.1} parent=55 // pred_region
        %p390 = scmp.eq.s32.totalorder %s29, 0
        // Predicated region
        $region61: #{pixel_discriminator.1} parent=59 // pred_check
          %p391 = pneg %p390
        $region62: #{pixel_discriminator.1} parent=59 // pred_check_branch
          %393 = sbr.rel (%p391) target = $region64
        $region63: #{pixel_discriminator.1} parent=59 // pred_region
          %vm394 = vcmask 7168
          %395 = vst.msk [vmem:[#allocation3] sm:$0xff] %vm394, 0.0
          %396 = vst.msk [vmem:[#allocation3 + $0x8] sm:$0xff] %vm394, 0.0
          %397 = vst.msk [vmem:[#allocation3 + $0x10] sm:$0xff] %vm394, 0.0
          %398 = vst.msk [vmem:[#allocation3 + $0x18] sm:$0xff] %vm394, 0.0
          %399 = vst.msk [vmem:[#allocation3 + $0x20] sm:$0xff] %vm394, 0.0
          %400 = vst.msk [vmem:[#allocation3 + $0x28] sm:$0xff] %vm394, 0.0
          %401 = vst.msk [vmem:[#allocation3 + $0x30] sm:$0xff] %vm394, 0.0
          %402 = vst.msk [vmem:[#allocation3 + $0x38] sm:$0xff] %vm394, 0.0
          %403 = vst.msk [vmem:[#allocation3 + $0x40] sm:$0xff] %vm394, 0.0
          %404 = vst.msk [vmem:[#allocation3 + $0x48] sm:$0xff] %vm394, 0.0
          %405 = vst.msk [vmem:[#allocation3 + $0x50] sm:$0xff] %vm394, 0.0
          %406 = vst.msk [vmem:[#allocation3 + $0x58] sm:$0xff] %vm394, 0.0
          %407 = vst.msk [vmem:[#allocation3 + $0x60] sm:$0xff] %vm394, 0.0
          %408 = vst.msk [vmem:[#allocation3 + $0x68] sm:$0xff] %vm394, 0.0
          %409 = vst.msk [vmem:[#allocation3 + $0x70] sm:$0xff] %vm394, 0.0
          %410 = vst.msk [vmem:[#allocation3 + $0x78] sm:$0xff] %vm394, 0.0
          %411 = vst.msk [vmem:[#allocation3 + $0x80] sm:$0xff] %vm394, 0.0
          %412 = vst.msk [vmem:[#allocation3 + $0x88] sm:$0xff] %vm394, 0.0
          %413 = vst.msk [vmem:[#allocation3 + $0x90] sm:$0xff] %vm394, 0.0
          %414 = vst.msk [vmem:[#allocation3 + $0x98] sm:$0xff] %vm394, 0.0
          %415 = vst.msk [vmem:[#allocation3 + $0xa0] sm:$0xff] %vm394, 0.0
          %416 = vst.msk [vmem:[#allocation3 + $0xa8] sm:$0xff] %vm394, 0.0
          %417 = vst.msk [vmem:[#allocation3 + $0xb0] sm:$0xff] %vm394, 0.0
          %418 = vst.msk [vmem:[#allocation3 + $0xb8] sm:$0xff] %vm394, 0.0
          %419 = vst.msk [vmem:[#allocation3 + $0xc0] sm:$0xff] %vm394, 0.0
          %420 = vst.msk [vmem:[#allocation3 + $0xc8] sm:$0xff] %vm394, 0.0
          %421 = vst.msk [vmem:[#allocation3 + $0xd0] sm:$0xff] %vm394, 0.0
          %422 = vst.msk [vmem:[#allocation3 + $0xd8] sm:$0xff] %vm394, 0.0
          %423 = vst.msk [vmem:[#allocation3 + $0xe0] sm:$0xff] %vm394, 0.0
          %424 = vst.msk [vmem:[#allocation3 + $0xe8] sm:$0xff] %vm394, 0.0
          %425 = vst.msk [vmem:[#allocation3 + $0xf0] sm:$0xff] %vm394, 0.0
          %426 = vst.msk [vmem:[#allocation3 + $0xf8] sm:$0xff] %vm394, 0.0
          %427 = vst.msk [vmem:[#allocation4] sm:$0xff] %vm394, 0.0
          %428 = vst.msk [vmem:[#allocation4 + $0x8] sm:$0xff] %vm394, 0.0
          %429 = vst.msk [vmem:[#allocation4 + $0x10] sm:$0xff] %vm394, 0.0
          %430 = vst.msk [vmem:[#allocation4 + $0x18] sm:$0xff] %vm394, 0.0
          %431 = vst.msk [vmem:[#allocation4 + $0x20] sm:$0xff] %vm394, 0.0
          %432 = vst.msk [vmem:[#allocation4 + $0x28] sm:$0xff] %vm394, 0.0
          %433 = vst.msk [vmem:[#allocation4 + $0x30] sm:$0xff] %vm394, 0.0
          %434 = vst.msk [vmem:[#allocation4 + $0x38] sm:$0xff] %vm394, 0.0
          %435 = vst.msk [vmem:[#allocation4 + $0x40] sm:$0xff] %vm394, 0.0
          %436 = vst.msk [vmem:[#allocation4 + $0x48] sm:$0xff] %vm394, 0.0
          %437 = vst.msk [vmem:[#allocation4 + $0x50] sm:$0xff] %vm394, 0.0
          %438 = vst.msk [vmem:[#allocation4 + $0x58] sm:$0xff] %vm394, 0.0
          %439 = vst.msk [vmem:[#allocation4 + $0x60] sm:$0xff] %vm394, 0.0
          %440 = vst.msk [vmem:[#allocation4 + $0x68] sm:$0xff] %vm394, 0.0
          %441 = vst.msk [vmem:[#allocation4 + $0x70] sm:$0xff] %vm394, 0.0
          %442 = vst.msk [vmem:[#allocation4 + $0x78] sm:$0xff] %vm394, 0.0
          %443 = vst.msk [vmem:[#allocation4 + $0x80] sm:$0xff] %vm394, 0.0
          %444 = vst.msk [vmem:[#allocation4 + $0x88] sm:$0xff] %vm394, 0.0
          %445 = vst.msk [vmem:[#allocation4 + $0x90] sm:$0xff] %vm394, 0.0
          %446 = vst.msk [vmem:[#allocation4 + $0x98] sm:$0xff] %vm394, 0.0
          %447 = vst.msk [vmem:[#allocation4 + $0xa0] sm:$0xff] %vm394, 0.0
          %448 = vst.msk [vmem:[#allocation4 + $0xa8] sm:$0xff] %vm394, 0.0
          %449 = vst.msk [vmem:[#allocation4 + $0xb0] sm:$0xff] %vm394, 0.0
          %450 = vst.msk [vmem:[#allocation4 + $0xb8] sm:$0xff] %vm394, 0.0
          %451 = vst.msk [vmem:[#allocation4 + $0xc0] sm:$0xff] %vm394, 0.0
          %452 = vst.msk [vmem:[#allocation4 + $0xc8] sm:$0xff] %vm394, 0.0
          %453 = vst.msk [vmem:[#allocation4 + $0xd0] sm:$0xff] %vm394, 0.0
          %454 = vst.msk [vmem:[#allocation4 + $0xd8] sm:$0xff] %vm394, 0.0
          %455 = vst.msk [vmem:[#allocation4 + $0xe0] sm:$0xff] %vm394, 0.0
          %456 = vst.msk [vmem:[#allocation4 + $0xe8] sm:$0xff] %vm394, 0.0
          %457 = vst.msk [vmem:[#allocation4 + $0xf0] sm:$0xff] %vm394, 0.0
          %458 = vst.msk [vmem:[#allocation4 + $0xf8] sm:$0xff] %vm394, 0.0
        $region64: #{pixel_discriminator.1} parent=59 // pred_fallthru
          _
        %v459 = vld [vmem:[%s374] sm:$0xf]
        %v460 = vpack.c.bf16 %v459, %v459
        %v461 = vld [vmem:[%s1] sm:$0xf]
        %v462 = vld [vmem:[%s1 + $0x4] sm:$0xf]
        %v463 = vld [vmem:[%s1 + $0x8] sm:$0xf]
        %v464 = vld [vmem:[%s1 + $0xc] sm:$0xf]
        %v465 = vld [vmem:[%s1 + $0x10] sm:$0xf]
        %v466 = vld [vmem:[%s1 + $0x14] sm:$0xf]
        %v467 = vld [vmem:[%s1 + $0x18] sm:$0xf]
        %v468 = vld [vmem:[%s1 + $0x1c] sm:$0xf]
        %v469 = vld [vmem:[%s1 + $0x20] sm:$0xf]
        %v470 = vld [vmem:[%s1 + $0x24] sm:$0xf]
        %v471 = vld [vmem:[%s1 + $0x28] sm:$0xf]
        %v472 = vld [vmem:[%s1 + $0x2c] sm:$0xf]
        %v473 = vld [vmem:[%s1 + $0x30] sm:$0xf]
        %v474 = vld [vmem:[%s1 + $0x34] sm:$0xf]
        %v475 = vld [vmem:[%s1 + $0x38] sm:$0xf]
        %v476 = vld [vmem:[%s1 + $0x3c] sm:$0xf]
        %v477 = vld [vmem:[%s2] sm:$0xff]
        %v478 = vld [vmem:[%s2 + $0x8] sm:$0xff]
        %v479 = vld [vmem:[%s2 + $0x10] sm:$0xff]
        %v480 = vld [vmem:[%s2 + $0x18] sm:$0xff]
        %v481 = vld [vmem:[%s2 + $0x20] sm:$0xff]
        %v482 = vld [vmem:[%s2 + $0x28] sm:$0xff]
        %v483 = vld [vmem:[%s2 + $0x30] sm:$0xff]
        %v484 = vld [vmem:[%s2 + $0x38] sm:$0xff]
        %v485 = vld [vmem:[%s2 + $0x40] sm:$0xff]
        %v486 = vld [vmem:[%s2 + $0x48] sm:$0xff]
        %v487 = vld [vmem:[%s2 + $0x50] sm:$0xff]
        %v488 = vld [vmem:[%s2 + $0x58] sm:$0xff]
        %v489 = vld [vmem:[%s2 + $0x60] sm:$0xff]
        %v490 = vld [vmem:[%s2 + $0x68] sm:$0xff]
        %v491 = vld [vmem:[%s2 + $0x70] sm:$0xff]
        %v492 = vld [vmem:[%s2 + $0x78] sm:$0xff]
        %494 = vset.pattern.permute.xlu0 0
        %495 = vperm.xlu0 %494, %v477
        %v496 = vpop.permute.xlu0 %495
        %499 = vset.pattern.permute.xlu0 0
        %500 = vperm.xlu0 %499, %v478
        %v501 = vpop.permute.xlu0 %500
        %504 = vset.pattern.permute.xlu0 0
        %505 = vperm.xlu0 %504, %v479
        %v506 = vpop.permute.xlu0 %505
        %509 = vset.pattern.permute.xlu0 0
        %510 = vperm.xlu0 %509, %v480
        %v511 = vpop.permute.xlu0 %510
        %514 = vset.pattern.permute.xlu0 0
        %515 = vperm.xlu0 %514, %v481
        %v516 = vpop.permute.xlu0 %515
        %519 = vset.pattern.permute.xlu0 0
        %520 = vperm.xlu0 %519, %v482
        %v521 = vpop.permute.xlu0 %520
        %524 = vset.pattern.permute.xlu0 0
        %525 = vperm.xlu0 %524, %v483
        %v526 = vpop.permute.xlu0 %525
        %529 = vset.pattern.permute.xlu0 0
        %530 = vperm.xlu0 %529, %v484
        %v531 = vpop.permute.xlu0 %530
        %534 = vset.pattern.permute.xlu0 0
        %535 = vperm.xlu0 %534, %v485
        %v536 = vpop.permute.xlu0 %535
        %539 = vset.pattern.permute.xlu0 0
        %540 = vperm.xlu0 %539, %v486
        %v541 = vpop.permute.xlu0 %540
        %544 = vset.pattern.permute.xlu0 0
        %545 = vperm.xlu0 %544, %v487
        %v546 = vpop.permute.xlu0 %545
        %549 = vset.pattern.permute.xlu0 0
        %550 = vperm.xlu0 %549, %v488
        %v551 = vpop.permute.xlu0 %550
        %554 = vset.pattern.permute.xlu0 0
        %555 = vperm.xlu0 %554, %v489
        %v556 = vpop.permute.xlu0 %555
        %559 = vset.pattern.permute.xlu0 0
        %560 = vperm.xlu0 %559, %v490
        %v561 = vpop.permute.xlu0 %560
        %564 = vset.pattern.permute.xlu0 0
        %565 = vperm.xlu0 %564, %v491
        %v566 = vpop.permute.xlu0 %565
        %569 = vset.pattern.permute.xlu0 0
        %570 = vperm.xlu0 %569, %v492
        %v571 = vpop.permute.xlu0 %570
        %v589 = vunpack.c.l.b16 %v461
        %v590 = vunpack.c.l.b16 %v462
        %v591 = vunpack.c.l.b16 %v463
        %v592 = vunpack.c.l.b16 %v464
        %v593 = vunpack.c.l.b16 %v465
        %v594 = vunpack.c.l.b16 %v466
        %v595 = vunpack.c.l.b16 %v467
        %v596 = vunpack.c.l.b16 %v468
        %v597 = vunpack.c.l.b16 %v469
        %v598 = vunpack.c.l.b16 %v470
        %v599 = vunpack.c.l.b16 %v471
        %v600 = vunpack.c.l.b16 %v472
        %v601 = vunpack.c.l.b16 %v473
        %v602 = vunpack.c.l.b16 %v474
        %v603 = vunpack.c.l.b16 %v475
        %v604 = vunpack.c.l.b16 %v476
        %v605 = vpack.c.b16 %v590, %v589
        %v606 = vpack.c.b16 %v592, %v591
        %v607 = vpack.c.b16 %v594, %v593
        %v608 = vpack.c.b16 %v596, %v595
        %v609 = vpack.c.b16 %v598, %v597
        %v610 = vpack.c.b16 %v600, %v599
        %v611 = vpack.c.b16 %v602, %v601
        %v612 = vpack.c.b16 %v604, %v603
        %vm613 = vcmask 31744
        %v615 = vsel %vm613, %v605, 0
        %v618 = vsel %vm613, %v606, 0
        %v621 = vsel %vm613, %v607, 0
        %v624 = vsel %vm613, %v608, 0
        %v627 = vsel %vm613, %v609, 0
        %v630 = vsel %vm613, %v610, 0
        %v633 = vsel %vm613, %v611, 0
        %v636 = vsel %vm613, %v612, 0
        %vm638 = vcmask 1041408
        %v640 = vsel %vm638, %v460, 0
        %642 = vmatpush.bf16.msra.mxu0 0
        %643 = vmatpush.bf16.msra.mxu0 0
        %644 = vmatpush.bf16.msra.mxu0 0
        %645 = vmatpush.bf16.msra.mxu0 0
        %646 = vmatpush.bf16.msra.mxu0 0
        %647 = vmatpush.bf16.msra.mxu0 0
        %648 = vmatpush.bf16.msra.mxu0 0
        %649 = vmatpush.bf16.msra.mxu0 %v640
        %650 = vmatmul.bf16.gmra.mxu0 %v615
        %v651 = vpop.f32.mrf.mxu0
        %v652 = vadd.f32 %v496, %v651
        %v653 = vpop.f32.mrf.mxu0
        %v654 = vadd.f32 %v501, %v653
        %655 = vmatmul.bf16.gmra.mxu0 %v618
        %v656 = vpop.f32.mrf.mxu0
        %v657 = vadd.f32 %v506, %v656
        %v658 = vpop.f32.mrf.mxu0
        %v659 = vadd.f32 %v511, %v658
        %660 = vmatmul.bf16.gmra.mxu0 %v621
        %v661 = vpop.f32.mrf.mxu0
        %v662 = vadd.f32 %v516, %v661
        %v663 = vpop.f32.mrf.mxu0
        %v664 = vadd.f32 %v521, %v663
        %665 = vmatmul.bf16.gmra.mxu0 %v624
        %v666 = vpop.f32.mrf.mxu0
        %v667 = vadd.f32 %v526, %v666
        %v668 = vpop.f32.mrf.mxu0
        %v669 = vadd.f32 %v531, %v668
        %670 = vmatmul.bf16.gmra.mxu0 %v627
        %v671 = vpop.f32.mrf.mxu0
        %v672 = vadd.f32 %v536, %v671
        %v673 = vpop.f32.mrf.mxu0
        %v674 = vadd.f32 %v541, %v673
        %675 = vmatmul.bf16.gmra.mxu0 %v630
        %v676 = vpop.f32.mrf.mxu0
        %v677 = vadd.f32 %v546, %v676
        %v678 = vpop.f32.mrf.mxu0
        %v679 = vadd.f32 %v551, %v678
        %680 = vmatmul.bf16.gmra.mxu0 %v633
        %v681 = vpop.f32.mrf.mxu0
        %v682 = vadd.f32 %v556, %v681
        %v683 = vpop.f32.mrf.mxu0
        %v684 = vadd.f32 %v561, %v683
        %685 = vmatmul.bf16.gmra.mxu0 %v636
        %v686 = vpop.f32.mrf.mxu0
        %v687 = vadd.f32 %v566, %v686
        %v688 = vpop.f32.mrf.mxu0
        %v689 = vadd.f32 %v571, %v688
        %690 = vdwg.mxu0
        %vm691 = vcmp.gt.f32.partialorder %v652, 0.0
        %vm692 = vcmp.gt.f32.partialorder %v654, 0.0
        %vm693 = vcmp.gt.f32.partialorder %v657, 0.0
        %vm694 = vcmp.gt.f32.partialorder %v659, 0.0
        %vm695 = vcmp.gt.f32.partialorder %v662, 0.0
        %vm696 = vcmp.gt.f32.partialorder %v664, 0.0
        %vm697 = vcmp.gt.f32.partialorder %v667, 0.0
        %vm698 = vcmp.gt.f32.partialorder %v669, 0.0
        %vm699 = vcmp.gt.f32.partialorder %v672, 0.0
        %vm700 = vcmp.gt.f32.partialorder %v674, 0.0
        %vm701 = vcmp.gt.f32.partialorder %v677, 0.0
        %vm702 = vcmp.gt.f32.partialorder %v679, 0.0
        %vm703 = vcmp.gt.f32.partialorder %v682, 0.0
        %vm704 = vcmp.gt.f32.partialorder %v684, 0.0
        %vm705 = vcmp.gt.f32.partialorder %v687, 0.0
        %vm706 = vcmp.gt.f32.partialorder %v689, 0.0
        %v707 = vmul.f32 %v652, 0.2
        %v708 = vmul.f32 %v654, 0.2
        %v709 = vmul.f32 %v657, 0.2
        %v710 = vmul.f32 %v659, 0.2
        %v711 = vmul.f32 %v662, 0.2
        %v712 = vmul.f32 %v664, 0.2
        %v713 = vmul.f32 %v667, 0.2
        %v714 = vmul.f32 %v669, 0.2
        %v715 = vmul.f32 %v672, 0.2
        %v716 = vmul.f32 %v674, 0.2
        %v717 = vmul.f32 %v677, 0.2
        %v718 = vmul.f32 %v679, 0.2
        %v719 = vmul.f32 %v682, 0.2
        %v720 = vmul.f32 %v684, 0.2
        %v721 = vmul.f32 %v687, 0.2
        %v722 = vmul.f32 %v689, 0.2
        %v723 = vsel %vm691, %v652, %v707
        %v724 = vsel %vm692, %v654, %v708
        %v725 = vsel %vm693, %v657, %v709
        %v726 = vsel %vm694, %v659, %v710
        %v727 = vsel %vm695, %v662, %v711
        %v728 = vsel %vm696, %v664, %v712
        %v729 = vsel %vm697, %v667, %v713
        %v730 = vsel %vm698, %v669, %v714
        %v731 = vsel %vm699, %v672, %v715
        %v732 = vsel %vm700, %v674, %v716
        %v733 = vsel %vm701, %v677, %v717
        %v734 = vsel %vm702, %v679, %v718
        %v735 = vsel %vm703, %v682, %v719
        %v736 = vsel %vm704, %v684, %v720
        %v737 = vsel %vm705, %v687, %v721
        %v738 = vsel %vm706, %v689, %v722
        %v739 = vld [vmem:[%s3] sm:$0xf]
        %v740 = vld [vmem:[%s3 + $0x4] sm:$0xf]
        %v741 = vld [vmem:[%s3 + $0x8] sm:$0xf]
        %v742 = vld [vmem:[%s3 + $0xc] sm:$0xf]
        %v743 = vld [vmem:[%s3 + $0x10] sm:$0xf]
        %v744 = vld [vmem:[%s3 + $0x14] sm:$0xf]
        %v745 = vld [vmem:[%s3 + $0x18] sm:$0xf]
        %v746 = vld [vmem:[%s3 + $0x1c] sm:$0xf]
        %v747 = vld [vmem:[%s3 + $0x20] sm:$0xf]
        %v748 = vld [vmem:[%s3 + $0x24] sm:$0xf]
        %v749 = vld [vmem:[%s3 + $0x28] sm:$0xf]
        %v750 = vld [vmem:[%s3 + $0x2c] sm:$0xf]
        %v751 = vld [vmem:[%s3 + $0x30] sm:$0xf]
        %v752 = vld [vmem:[%s3 + $0x34] sm:$0xf]
        %v753 = vld [vmem:[%s3 + $0x38] sm:$0xf]
        %v754 = vld [vmem:[%s3 + $0x3c] sm:$0xf]
        %v755 = vld [vmem:[%s3 + $0x40] sm:$0xf]
        %v756 = vld [vmem:[%s3 + $0x44] sm:$0xf]
        %v757 = vld [vmem:[%s3 + $0x48] sm:$0xf]
        %v758 = vld [vmem:[%s3 + $0x4c] sm:$0xf]
        %v759 = vld [vmem:[%s3 + $0x50] sm:$0xf]
        %v760 = vld [vmem:[%s3 + $0x54] sm:$0xf]
        %v761 = vld [vmem:[%s3 + $0x58] sm:$0xf]
        %v762 = vld [vmem:[%s3 + $0x5c] sm:$0xf]
        %v763 = vld [vmem:[%s3 + $0x60] sm:$0xf]
        %v764 = vld [vmem:[%s3 + $0x64] sm:$0xf]
        %v765 = vld [vmem:[%s3 + $0x68] sm:$0xf]
        %v766 = vld [vmem:[%s3 + $0x6c] sm:$0xf]
        %v767 = vld [vmem:[%s3 + $0x70] sm:$0xf]
        %v768 = vld [vmem:[%s3 + $0x74] sm:$0xf]
        %v769 = vld [vmem:[%s3 + $0x78] sm:$0xf]
        %v770 = vld [vmem:[%s3 + $0x7c] sm:$0xf]
        %v771 = vpack.c.bf16 %v724, %v723
        %v772 = vpack.c.bf16 %v726, %v725
        %v773 = vpack.c.bf16 %v728, %v727
        %v774 = vpack.c.bf16 %v730, %v729
        %v775 = vpack.c.bf16 %v732, %v731
        %v776 = vpack.c.bf16 %v734, %v733
        %v777 = vpack.c.bf16 %v736, %v735
        %v778 = vpack.c.bf16 %v738, %v737
        %v779 = vld [vmem:[%s4] sm:$0xff]
        %v780 = vld [vmem:[%s4 + $0x8] sm:$0xff]
        %v781 = vld [vmem:[%s4 + $0x10] sm:$0xff]
        %v782 = vld [vmem:[%s4 + $0x18] sm:$0xff]
        %v783 = vld [vmem:[%s4 + $0x20] sm:$0xff]
        %v784 = vld [vmem:[%s4 + $0x28] sm:$0xff]
        %v785 = vld [vmem:[%s4 + $0x30] sm:$0xff]
        %v786 = vld [vmem:[%s4 + $0x38] sm:$0xff]
        %v787 = vld [vmem:[%s4 + $0x40] sm:$0xff]
        %v788 = vld [vmem:[%s4 + $0x48] sm:$0xff]
        %v789 = vld [vmem:[%s4 + $0x50] sm:$0xff]
        %v790 = vld [vmem:[%s4 + $0x58] sm:$0xff]
        %v791 = vld [vmem:[%s4 + $0x60] sm:$0xff]
        %v792 = vld [vmem:[%s4 + $0x68] sm:$0xff]
        %v793 = vld [vmem:[%s4 + $0x70] sm:$0xff]
        %v794 = vld [vmem:[%s4 + $0x78] sm:$0xff]
        %v795 = vld [vmem:[%s4 + $0x80] sm:$0xff]
        %v796 = vld [vmem:[%s4 + $0x88] sm:$0xff]
        %v797 = vld [vmem:[%s4 + $0x90] sm:$0xff]
        %v798 = vld [vmem:[%s4 + $0x98] sm:$0xff]
        %v799 = vld [vmem:[%s4 + $0xa0] sm:$0xff]
        %v800 = vld [vmem:[%s4 + $0xa8] sm:$0xff]
        %v801 = vld [vmem:[%s4 + $0xb0] sm:$0xff]
        %v802 = vld [vmem:[%s4 + $0xb8] sm:$0xff]
        %v803 = vld [vmem:[%s4 + $0xc0] sm:$0xff]
        %v804 = vld [vmem:[%s4 + $0xc8] sm:$0xff]
        %v805 = vld [vmem:[%s4 + $0xd0] sm:$0xff]
        %v806 = vld [vmem:[%s4 + $0xd8] sm:$0xff]
        %v807 = vld [vmem:[%s4 + $0xe0] sm:$0xff]
        %v808 = vld [vmem:[%s4 + $0xe8] sm:$0xff]
        %v809 = vld [vmem:[%s4 + $0xf0] sm:$0xff]
        %v810 = vld [vmem:[%s4 + $0xf8] sm:$0xff]
        %812 = vset.pattern.permute.xlu0 0
        %813 = vperm.xlu0 %812, %v779
        %v814 = vpop.permute.xlu0 %813
        %817 = vset.pattern.permute.xlu0 0
        %818 = vperm.xlu0 %817, %v780
        %v819 = vpop.permute.xlu0 %818
        %822 = vset.pattern.permute.xlu0 0
        %823 = vperm.xlu0 %822, %v781
        %v824 = vpop.permute.xlu0 %823
        %827 = vset.pattern.permute.xlu0 0
        %828 = vperm.xlu0 %827, %v782
        %v829 = vpop.permute.xlu0 %828
        %832 = vset.pattern.permute.xlu0 0
        %833 = vperm.xlu0 %832, %v783
        %v834 = vpop.permute.xlu0 %833
        %837 = vset.pattern.permute.xlu0 0
        %838 = vperm.xlu0 %837, %v784
        %v839 = vpop.permute.xlu0 %838
        %842 = vset.pattern.permute.xlu0 0
        %843 = vperm.xlu0 %842, %v785
        %v844 = vpop.permute.xlu0 %843
        %847 = vset.pattern.permute.xlu0 0
        %848 = vperm.xlu0 %847, %v786
        %v849 = vpop.permute.xlu0 %848
        %852 = vset.pattern.permute.xlu0 0
        %853 = vperm.xlu0 %852, %v787
        %v854 = vpop.permute.xlu0 %853
        %857 = vset.pattern.permute.xlu0 0
        %858 = vperm.xlu0 %857, %v788
        %v859 = vpop.permute.xlu0 %858
        %862 = vset.pattern.permute.xlu0 0
        %863 = vperm.xlu0 %862, %v789
        %v864 = vpop.permute.xlu0 %863
        %867 = vset.pattern.permute.xlu0 0
        %868 = vperm.xlu0 %867, %v790
        %v869 = vpop.permute.xlu0 %868
        %872 = vset.pattern.permute.xlu0 0
        %873 = vperm.xlu0 %872, %v791
        %v874 = vpop.permute.xlu0 %873
        %877 = vset.pattern.permute.xlu0 0
        %878 = vperm.xlu0 %877, %v792
        %v879 = vpop.permute.xlu0 %878
        %882 = vset.pattern.permute.xlu0 0
        %883 = vperm.xlu0 %882, %v793
        %v884 = vpop.permute.xlu0 %883
        %887 = vset.pattern.permute.xlu0 0
        %888 = vperm.xlu0 %887, %v794
        %v889 = vpop.permute.xlu0 %888
        %892 = vset.pattern.permute.xlu0 0
        %893 = vperm.xlu0 %892, %v795
        %v894 = vpop.permute.xlu0 %893
        %897 = vset.pattern.permute.xlu0 0
        %898 = vperm.xlu0 %897, %v796
        %v899 = vpop.permute.xlu0 %898
        %902 = vset.pattern.permute.xlu0 0
        %903 = vperm.xlu0 %902, %v797
        %v904 = vpop.permute.xlu0 %903
        %907 = vset.pattern.permute.xlu0 0
        %908 = vperm.xlu0 %907, %v798
        %v909 = vpop.permute.xlu0 %908
        %912 = vset.pattern.permute.xlu0 0
        %913 = vperm.xlu0 %912, %v799
        %v914 = vpop.permute.xlu0 %913
        %917 = vset.pattern.permute.xlu0 0
        %918 = vperm.xlu0 %917, %v800
        %v919 = vpop.permute.xlu0 %918
        %922 = vset.pattern.permute.xlu0 0
        %923 = vperm.xlu0 %922, %v801
        %v924 = vpop.permute.xlu0 %923
        %927 = vset.pattern.permute.xlu0 0
        %928 = vperm.xlu0 %927, %v802
        %v929 = vpop.permute.xlu0 %928
        %932 = vset.pattern.permute.xlu0 0
        %933 = vperm.xlu0 %932, %v803
        %v934 = vpop.permute.xlu0 %933
        %937 = vset.pattern.permute.xlu0 0
        %938 = vperm.xlu0 %937, %v804
        %v939 = vpop.permute.xlu0 %938
        %942 = vset.pattern.permute.xlu0 0
        %943 = vperm.xlu0 %942, %v805
        %v944 = vpop.permute.xlu0 %943
        %947 = vset.pattern.permute.xlu0 0
        %948 = vperm.xlu0 %947, %v806
        %v949 = vpop.permute.xlu0 %948
        %952 = vset.pattern.permute.xlu0 0
        %953 = vperm.xlu0 %952, %v807
        %v954 = vpop.permute.xlu0 %953
        %957 = vset.pattern.permute.xlu0 0
        %958 = vperm.xlu0 %957, %v808
        %v959 = vpop.permute.xlu0 %958
        %962 = vset.pattern.permute.xlu0 0
        %963 = vperm.xlu0 %962, %v809
        %v964 = vpop.permute.xlu0 %963
        %967 = vset.pattern.permute.xlu0 0
        %968 = vperm.xlu0 %967, %v810
        %v969 = vpop.permute.xlu0 %968
        %v1003 = vunpack.c.l.b16 %v739
        %v1004 = vunpack.c.l.b16 %v740
        %v1005 = vunpack.c.l.b16 %v741
        %v1006 = vunpack.c.l.b16 %v742
        %v1007 = vunpack.c.l.b16 %v743
        %v1008 = vunpack.c.l.b16 %v744
        %v1009 = vunpack.c.l.b16 %v745
        %v1010 = vunpack.c.l.b16 %v746
        %v1011 = vunpack.c.l.b16 %v747
        %v1012 = vunpack.c.l.b16 %v748
        %v1013 = vunpack.c.l.b16 %v749
        %v1014 = vunpack.c.l.b16 %v750
        %v1015 = vunpack.c.l.b16 %v751
        %v1016 = vunpack.c.l.b16 %v752
        %v1017 = vunpack.c.l.b16 %v753
        %v1018 = vunpack.c.l.b16 %v754
        %v1019 = vunpack.c.l.b16 %v755
        %v1020 = vunpack.c.l.b16 %v756
        %v1021 = vunpack.c.l.b16 %v757
        %v1022 = vunpack.c.l.b16 %v758
        %v1023 = vunpack.c.l.b16 %v759
        %v1024 = vunpack.c.l.b16 %v760
        %v1025 = vunpack.c.l.b16 %v761
        %v1026 = vunpack.c.l.b16 %v762
        %v1027 = vunpack.c.l.b16 %v763
        %v1028 = vunpack.c.l.b16 %v764
        %v1029 = vunpack.c.l.b16 %v765
        %v1030 = vunpack.c.l.b16 %v766
        %v1031 = vunpack.c.l.b16 %v767
        %v1032 = vunpack.c.l.b16 %v768
        %v1033 = vunpack.c.l.b16 %v769
        %v1034 = vunpack.c.l.b16 %v770
        %v1035 = vpack.c.b16 %v1004, %v1003
        %v1036 = vpack.c.b16 %v1006, %v1005
        %v1037 = vpack.c.b16 %v1008, %v1007
        %v1038 = vpack.c.b16 %v1010, %v1009
        %v1039 = vpack.c.b16 %v1012, %v1011
        %v1040 = vpack.c.b16 %v1014, %v1013
        %v1041 = vpack.c.b16 %v1016, %v1015
        %v1042 = vpack.c.b16 %v1018, %v1017
        %v1043 = vpack.c.b16 %v1020, %v1019
        %v1044 = vpack.c.b16 %v1022, %v1021
        %v1045 = vpack.c.b16 %v1024, %v1023
        %v1046 = vpack.c.b16 %v1026, %v1025
        %v1047 = vpack.c.b16 %v1028, %v1027
        %v1048 = vpack.c.b16 %v1030, %v1029
        %v1049 = vpack.c.b16 %v1032, %v1031
        %v1050 = vpack.c.b16 %v1034, %v1033
        %1067 = vmatpush.bf16.msra.mxu0 %v778
        %1068 = vmatpush.bf16.msra.mxu0 %v777
        %1069 = vmatpush.bf16.msra.mxu0 %v776
        %1070 = vmatpush.bf16.msra.mxu0 %v775
        %1071 = vmatpush.bf16.msra.mxu0 %v774
        %1072 = vmatpush.bf16.msra.mxu0 %v773
        %1073 = vmatpush.bf16.msra.mxu0 %v772
        %1074 = vmatpush.bf16.msra.mxu0 %v771
        %1075 = vmatmul.bf16.gmra.mxu0 %v1035
        %v1076 = vpop.f32.mrf.mxu0
        %v1077 = vadd.f32 %v814, %v1076
        %v1078 = vpop.f32.mrf.mxu0
        %v1079 = vadd.f32 %v819, %v1078
        %1080 = vmatmul.bf16.gmra.mxu0 %v1036
        %v1081 = vpop.f32.mrf.mxu0
        %v1082 = vadd.f32 %v824, %v1081
        %v1083 = vpop.f32.mrf.mxu0
        %v1084 = vadd.f32 %v829, %v1083
        %1085 = vmatmul.bf16.gmra.mxu0 %v1037
        %v1086 = vpop.f32.mrf.mxu0
        %v1087 = vadd.f32 %v834, %v1086
        %v1088 = vpop.f32.mrf.mxu0
        %v1089 = vadd.f32 %v839, %v1088
        %1090 = vmatmul.bf16.gmra.mxu0 %v1038
        %v1091 = vpop.f32.mrf.mxu0
        %v1092 = vadd.f32 %v844, %v1091
        %v1093 = vpop.f32.mrf.mxu0
        %v1094 = vadd.f32 %v849, %v1093
        %1095 = vmatmul.bf16.gmra.mxu0 %v1039
        %v1096 = vpop.f32.mrf.mxu0
        %v1097 = vadd.f32 %v854, %v1096
        %v1098 = vpop.f32.mrf.mxu0
        %v1099 = vadd.f32 %v859, %v1098
        %1100 = vmatmul.bf16.gmra.mxu0 %v1040
        %v1101 = vpop.f32.mrf.mxu0
        %v1102 = vadd.f32 %v864, %v1101
        %v1103 = vpop.f32.mrf.mxu0
        %v1104 = vadd.f32 %v869, %v1103
        %1105 = vmatmul.bf16.gmra.mxu0 %v1041
        %v1106 = vpop.f32.mrf.mxu0
        %v1107 = vadd.f32 %v874, %v1106
        %v1108 = vpop.f32.mrf.mxu0
        %v1109 = vadd.f32 %v879, %v1108
        %1110 = vmatmul.bf16.gmra.mxu0 %v1042
        %v1111 = vpop.f32.mrf.mxu0
        %v1112 = vadd.f32 %v884, %v1111
        %v1113 = vpop.f32.mrf.mxu0
        %v1114 = vadd.f32 %v889, %v1113
        %1115 = vmatmul.bf16.gmra.mxu0 %v1043
        %v1116 = vpop.f32.mrf.mxu0
        %v1117 = vadd.f32 %v894, %v1116
        %v1118 = vpop.f32.mrf.mxu0
        %v1119 = vadd.f32 %v899, %v1118
        %1120 = vmatmul.bf16.gmra.mxu0 %v1044
        %v1121 = vpop.f32.mrf.mxu0
        %v1122 = vadd.f32 %v904, %v1121
        %v1123 = vpop.f32.mrf.mxu0
        %v1124 = vadd.f32 %v909, %v1123
        %1125 = vmatmul.bf16.gmra.mxu0 %v1045
        %v1126 = vpop.f32.mrf.mxu0
        %v1127 = vadd.f32 %v914, %v1126
        %v1128 = vpop.f32.mrf.mxu0
        %v1129 = vadd.f32 %v919, %v1128
        %1130 = vmatmul.bf16.gmra.mxu0 %v1046
        %v1131 = vpop.f32.mrf.mxu0
        %v1132 = vadd.f32 %v924, %v1131
        %v1133 = vpop.f32.mrf.mxu0
        %v1134 = vadd.f32 %v929, %v1133
        %1135 = vmatmul.bf16.gmra.mxu0 %v1047
        %v1136 = vpop.f32.mrf.mxu0
        %v1137 = vadd.f32 %v934, %v1136
        %v1138 = vpop.f32.mrf.mxu0
        %v1139 = vadd.f32 %v939, %v1138
        %1140 = vmatmul.bf16.gmra.mxu0 %v1048
        %v1141 = vpop.f32.mrf.mxu0
        %v1142 = vadd.f32 %v944, %v1141
        %v1143 = vpop.f32.mrf.mxu0
        %v1144 = vadd.f32 %v949, %v1143
        %1145 = vmatmul.bf16.gmra.mxu0 %v1049
        %v1146 = vpop.f32.mrf.mxu0
        %v1147 = vadd.f32 %v954, %v1146
        %v1148 = vpop.f32.mrf.mxu0
        %v1149 = vadd.f32 %v959, %v1148
        %1150 = vmatmul.bf16.gmra.mxu0 %v1050
        %v1151 = vpop.f32.mrf.mxu0
        %v1152 = vadd.f32 %v964, %v1151
        %v1153 = vpop.f32.mrf.mxu0
        %v1154 = vadd.f32 %v969, %v1153
        %1155 = vdwg.mxu0
        %vm1156 = vcmp.gt.f32.partialorder %v1077, 0.0
        %vm1157 = vcmp.gt.f32.partialorder %v1079, 0.0
        %vm1158 = vcmp.gt.f32.partialorder %v1082, 0.0
        %vm1159 = vcmp.gt.f32.partialorder %v1084, 0.0
        %vm1160 = vcmp.gt.f32.partialorder %v1087, 0.0
        %vm1161 = vcmp.gt.f32.partialorder %v1089, 0.0
        %vm1162 = vcmp.gt.f32.partialorder %v1092, 0.0
        %vm1163 = vcmp.gt.f32.partialorder %v1094, 0.0
        %vm1164 = vcmp.gt.f32.partialorder %v1097, 0.0
        %vm1165 = vcmp.gt.f32.partialorder %v1099, 0.0
        %vm1166 = vcmp.gt.f32.partialorder %v1102, 0.0
        %vm1167 = vcmp.gt.f32.partialorder %v1104, 0.0
        %vm1168 = vcmp.gt.f32.partialorder %v1107, 0.0
        %vm1169 = vcmp.gt.f32.partialorder %v1109, 0.0
        %vm1170 = vcmp.gt.f32.partialorder %v1112, 0.0
        %vm1171 = vcmp.gt.f32.partialorder %v1114, 0.0
        %vm1172 = vcmp.gt.f32.partialorder %v1117, 0.0
        %vm1173 = vcmp.gt.f32.partialorder %v1119, 0.0
        %vm1174 = vcmp.gt.f32.partialorder %v1122, 0.0
        %vm1175 = vcmp.gt.f32.partialorder %v1124, 0.0
        %vm1176 = vcmp.gt.f32.partialorder %v1127, 0.0
        %vm1177 = vcmp.gt.f32.partialorder %v1129, 0.0
        %vm1178 = vcmp.gt.f32.partialorder %v1132, 0.0
        %vm1179 = vcmp.gt.f32.partialorder %v1134, 0.0
        %vm1180 = vcmp.gt.f32.partialorder %v1137, 0.0
        %vm1181 = vcmp.gt.f32.partialorder %v1139, 0.0
        %vm1182 = vcmp.gt.f32.partialorder %v1142, 0.0
        %vm1183 = vcmp.gt.f32.partialorder %v1144, 0.0
        %vm1184 = vcmp.gt.f32.partialorder %v1147, 0.0
        %vm1185 = vcmp.gt.f32.partialorder %v1149, 0.0
        %vm1186 = vcmp.gt.f32.partialorder %v1152, 0.0
        %vm1187 = vcmp.gt.f32.partialorder %v1154, 0.0
        %v1188 = vmul.f32 %v1077, 0.2
        %v1189 = vmul.f32 %v1079, 0.2
        %v1190 = vmul.f32 %v1082, 0.2
        %v1191 = vmul.f32 %v1084, 0.2
        %v1192 = vmul.f32 %v1087, 0.2
        %v1193 = vmul.f32 %v1089, 0.2
        %v1194 = vmul.f32 %v1092, 0.2
        %v1195 = vmul.f32 %v1094, 0.2
        %v1196 = vmul.f32 %v1097, 0.2
        %v1197 = vmul.f32 %v1099, 0.2
        %v1198 = vmul.f32 %v1102, 0.2
        %v1199 = vmul.f32 %v1104, 0.2
        %v1200 = vmul.f32 %v1107, 0.2
        %v1201 = vmul.f32 %v1109, 0.2
        %v1202 = vmul.f32 %v1112, 0.2
        %v1203 = vmul.f32 %v1114, 0.2
        %v1204 = vmul.f32 %v1117, 0.2
        %v1205 = vmul.f32 %v1119, 0.2
        %v1206 = vmul.f32 %v1122, 0.2
        %v1207 = vmul.f32 %v1124, 0.2
        %v1208 = vmul.f32 %v1127, 0.2
        %v1209 = vmul.f32 %v1129, 0.2
        %v1210 = vmul.f32 %v1132, 0.2
        %v1211 = vmul.f32 %v1134, 0.2
        %v1212 = vmul.f32 %v1137, 0.2
        %v1213 = vmul.f32 %v1139, 0.2
        %v1214 = vmul.f32 %v1142, 0.2
        %v1215 = vmul.f32 %v1144, 0.2
        %v1216 = vmul.f32 %v1147, 0.2
        %v1217 = vmul.f32 %v1149, 0.2
        %v1218 = vmul.f32 %v1152, 0.2
        %v1219 = vmul.f32 %v1154, 0.2
        %v1220 = vsel %vm1156, %v1077, %v1188
        %v1221 = vsel %vm1157, %v1079, %v1189
        %v1222 = vsel %vm1158, %v1082, %v1190
        %v1223 = vsel %vm1159, %v1084, %v1191
        %v1224 = vsel %vm1160, %v1087, %v1192
        %v1225 = vsel %vm1161, %v1089, %v1193
        %v1226 = vsel %vm1162, %v1092, %v1194
        %v1227 = vsel %vm1163, %v1094, %v1195
        %v1228 = vsel %vm1164, %v1097, %v1196
        %v1229 = vsel %vm1165, %v1099, %v1197
        %v1230 = vsel %vm1166, %v1102, %v1198
        %v1231 = vsel %vm1167, %v1104, %v1199
        %v1232 = vsel %vm1168, %v1107, %v1200
        %v1233 = vsel %vm1169, %v1109, %v1201
        %v1234 = vsel %vm1170, %v1112, %v1202
        %v1235 = vsel %vm1171, %v1114, %v1203
        %v1236 = vsel %vm1172, %v1117, %v1204
        %v1237 = vsel %vm1173, %v1119, %v1205
        %v1238 = vsel %vm1174, %v1122, %v1206
        %v1239 = vsel %vm1175, %v1124, %v1207
        %v1240 = vsel %vm1176, %v1127, %v1208
        %v1241 = vsel %vm1177, %v1129, %v1209
        %v1242 = vsel %vm1178, %v1132, %v1210
        %v1243 = vsel %vm1179, %v1134, %v1211
        %v1244 = vsel %vm1180, %v1137, %v1212
        %v1245 = vsel %vm1181, %v1139, %v1213
        %v1246 = vsel %vm1182, %v1142, %v1214
        %v1247 = vsel %vm1183, %v1144, %v1215
        %v1248 = vsel %vm1184, %v1147, %v1216
        %v1249 = vsel %vm1185, %v1149, %v1217
        %v1250 = vsel %vm1186, %v1152, %v1218
        %v1251 = vsel %vm1187, %v1154, %v1219
        %v1252 = vld [vmem:[#allocation3] sm:$0xff]
        %v1253 = vld [vmem:[#allocation3 + $0x8] sm:$0xff]
        %v1254 = vld [vmem:[#allocation3 + $0x10] sm:$0xff]
        %v1255 = vld [vmem:[#allocation3 + $0x18] sm:$0xff]
        %v1256 = vld [vmem:[#allocation3 + $0x20] sm:$0xff]
        %v1257 = vld [vmem:[#allocation3 + $0x28] sm:$0xff]
        %v1258 = vld [vmem:[#allocation3 + $0x30] sm:$0xff]
        %v1259 = vld [vmem:[#allocation3 + $0x38] sm:$0xff]
        %v1260 = vld [vmem:[#allocation3 + $0x40] sm:$0xff]
        %v1261 = vld [vmem:[#allocation3 + $0x48] sm:$0xff]
        %v1262 = vld [vmem:[#allocation3 + $0x50] sm:$0xff]
        %v1263 = vld [vmem:[#allocation3 + $0x58] sm:$0xff]
        %v1264 = vld [vmem:[#allocation3 + $0x60] sm:$0xff]
        %v1265 = vld [vmem:[#allocation3 + $0x68] sm:$0xff]
        %v1266 = vld [vmem:[#allocation3 + $0x70] sm:$0xff]
        %v1267 = vld [vmem:[#allocation3 + $0x78] sm:$0xff]
        %v1268 = vld [vmem:[#allocation3 + $0x80] sm:$0xff]
        %v1269 = vld [vmem:[#allocation3 + $0x88] sm:$0xff]
        %v1270 = vld [vmem:[#allocation3 + $0x90] sm:$0xff]
        %v1271 = vld [vmem:[#allocation3 + $0x98] sm:$0xff]
        %v1272 = vld [vmem:[#allocation3 + $0xa0] sm:$0xff]
        %v1273 = vld [vmem:[#allocation3 + $0xa8] sm:$0xff]
        %v1274 = vld [vmem:[#allocation3 + $0xb0] sm:$0xff]
        %v1275 = vld [vmem:[#allocation3 + $0xb8] sm:$0xff]
        %v1276 = vld [vmem:[#allocation3 + $0xc0] sm:$0xff]
        %v1277 = vld [vmem:[#allocation3 + $0xc8] sm:$0xff]
        %v1278 = vld [vmem:[#allocation3 + $0xd0] sm:$0xff]
        %v1279 = vld [vmem:[#allocation3 + $0xd8] sm:$0xff]
        %v1280 = vld [vmem:[#allocation3 + $0xe0] sm:$0xff]
        %v1281 = vld [vmem:[#allocation3 + $0xe8] sm:$0xff]
        %v1282 = vld [vmem:[#allocation3 + $0xf0] sm:$0xff]
        %v1283 = vld [vmem:[#allocation3 + $0xf8] sm:$0xff]
        %vm1284 = vcmask 130048
        %v1285 = vsel %vm1284, %v1220, 0.0
        %1286 = vadd.xlane.f32.xlu0 %v1285
        %v1287 = vpop.xlane.xlu0 %1286
        %v1288 = vsel %vm1284, %v1221, 0.0
        %1289 = vadd.xlane.f32.xlu0 %v1288
        %v1290 = vpop.xlane.xlu0 %1289
        %v1291 = vsel %vm1284, %v1222, 0.0
        %1292 = vadd.xlane.f32.xlu0 %v1291
        %v1293 = vpop.xlane.xlu0 %1292
        %v1294 = vsel %vm1284, %v1223, 0.0
        %1295 = vadd.xlane.f32.xlu0 %v1294
        %v1296 = vpop.xlane.xlu0 %1295
        %v1297 = vsel %vm1284, %v1224, 0.0
        %1298 = vadd.xlane.f32.xlu0 %v1297
        %v1299 = vpop.xlane.xlu0 %1298
        %v1300 = vsel %vm1284, %v1225, 0.0
        %1301 = vadd.xlane.f32.xlu0 %v1300
        %v1302 = vpop.xlane.xlu0 %1301
        %v1303 = vsel %vm1284, %v1226, 0.0
        %1304 = vadd.xlane.f32.xlu0 %v1303
        %v1305 = vpop.xlane.xlu0 %1304
        %v1306 = vsel %vm1284, %v1227, 0.0
        %1307 = vadd.xlane.f32.xlu0 %v1306
        %v1308 = vpop.xlane.xlu0 %1307
        %v1309 = vsel %vm1284, %v1228, 0.0
        %1310 = vadd.xlane.f32.xlu0 %v1309
        %v1311 = vpop.xlane.xlu0 %1310
        %v1312 = vsel %vm1284, %v1229, 0.0
        %1313 = vadd.xlane.f32.xlu0 %v1312
        %v1314 = vpop.xlane.xlu0 %1313
        %v1315 = vsel %vm1284, %v1230, 0.0
        %1316 = vadd.xlane.f32.xlu0 %v1315
        %v1317 = vpop.xlane.xlu0 %1316
        %v1318 = vsel %vm1284, %v1231, 0.0
        %1319 = vadd.xlane.f32.xlu0 %v1318
        %v1320 = vpop.xlane.xlu0 %1319
        %v1321 = vsel %vm1284, %v1232, 0.0
        %1322 = vadd.xlane.f32.xlu0 %v1321
        %v1323 = vpop.xlane.xlu0 %1322
        %v1324 = vsel %vm1284, %v1233, 0.0
        %1325 = vadd.xlane.f32.xlu0 %v1324
        %v1326 = vpop.xlane.xlu0 %1325
        %v1327 = vsel %vm1284, %v1234, 0.0
        %1328 = vadd.xlane.f32.xlu0 %v1327
        %v1329 = vpop.xlane.xlu0 %1328
        %v1330 = vsel %vm1284, %v1235, 0.0
        %1331 = vadd.xlane.f32.xlu0 %v1330
        %v1332 = vpop.xlane.xlu0 %1331
        %v1333 = vsel %vm1284, %v1236, 0.0
        %1334 = vadd.xlane.f32.xlu0 %v1333
        %v1335 = vpop.xlane.xlu0 %1334
        %v1336 = vsel %vm1284, %v1237, 0.0
        %1337 = vadd.xlane.f32.xlu0 %v1336
        %v1338 = vpop.xlane.xlu0 %1337
        %v1339 = vsel %vm1284, %v1238, 0.0
        %1340 = vadd.xlane.f32.xlu0 %v1339
        %v1341 = vpop.xlane.xlu0 %1340
        %v1342 = vsel %vm1284, %v1239, 0.0
        %1343 = vadd.xlane.f32.xlu0 %v1342
        %v1344 = vpop.xlane.xlu0 %1343
        %v1345 = vsel %vm1284, %v1240, 0.0
        %1346 = vadd.xlane.f32.xlu0 %v1345
        %v1347 = vpop.xlane.xlu0 %1346
        %v1348 = vsel %vm1284, %v1241, 0.0
        %1349 = vadd.xlane.f32.xlu0 %v1348
        %v1350 = vpop.xlane.xlu0 %1349
        %v1351 = vsel %vm1284, %v1242, 0.0
        %1352 = vadd.xlane.f32.xlu0 %v1351
        %v1353 = vpop.xlane.xlu0 %1352
        %v1354 = vsel %vm1284, %v1243, 0.0
        %1355 = vadd.xlane.f32.xlu0 %v1354
        %v1356 = vpop.xlane.xlu0 %1355
        %v1357 = vsel %vm1284, %v1244, 0.0
        %1358 = vadd.xlane.f32.xlu0 %v1357
        %v1359 = vpop.xlane.xlu0 %1358
        %v1360 = vsel %vm1284, %v1245, 0.0
        %1361 = vadd.xlane.f32.xlu0 %v1360
        %v1362 = vpop.xlane.xlu0 %1361
        %v1363 = vsel %vm1284, %v1246, 0.0
        %1364 = vadd.xlane.f32.xlu0 %v1363
        %v1365 = vpop.xlane.xlu0 %1364
        %v1366 = vsel %vm1284, %v1247, 0.0
        %1367 = vadd.xlane.f32.xlu0 %v1366
        %v1368 = vpop.xlane.xlu0 %1367
        %v1369 = vsel %vm1284, %v1248, 0.0
        %1370 = vadd.xlane.f32.xlu0 %v1369
        %v1371 = vpop.xlane.xlu0 %1370
        %v1372 = vsel %vm1284, %v1249, 0.0
        %1373 = vadd.xlane.f32.xlu0 %v1372
        %v1374 = vpop.xlane.xlu0 %1373
        %v1375 = vsel %vm1284, %v1250, 0.0
        %1376 = vadd.xlane.f32.xlu0 %v1375
        %v1377 = vpop.xlane.xlu0 %1376
        %v1378 = vsel %vm1284, %v1251, 0.0
        %1379 = vadd.xlane.f32.xlu0 %v1378
        %v1380 = vpop.xlane.xlu0 %1379
        %v1381 = vadd.f32 %v1252, %v1287
        %v1382 = vadd.f32 %v1253, %v1290
        %v1383 = vadd.f32 %v1254, %v1293
        %v1384 = vadd.f32 %v1255, %v1296
        %v1385 = vadd.f32 %v1256, %v1299
        %v1386 = vadd.f32 %v1257, %v1302
        %v1387 = vadd.f32 %v1258, %v1305
        %v1388 = vadd.f32 %v1259, %v1308
        %v1389 = vadd.f32 %v1260, %v1311
        %v1390 = vadd.f32 %v1261, %v1314
        %v1391 = vadd.f32 %v1262, %v1317
        %v1392 = vadd.f32 %v1263, %v1320
        %v1393 = vadd.f32 %v1264, %v1323
        %v1394 = vadd.f32 %v1265, %v1326
        %v1395 = vadd.f32 %v1266, %v1329
        %v1396 = vadd.f32 %v1267, %v1332
        %v1397 = vadd.f32 %v1268, %v1335
        %v1398 = vadd.f32 %v1269, %v1338
        %v1399 = vadd.f32 %v1270, %v1341
        %v1400 = vadd.f32 %v1271, %v1344
        %v1401 = vadd.f32 %v1272, %v1347
        %v1402 = vadd.f32 %v1273, %v1350
        %v1403 = vadd.f32 %v1274, %v1353
        %v1404 = vadd.f32 %v1275, %v1356
        %v1405 = vadd.f32 %v1276, %v1359
        %v1406 = vadd.f32 %v1277, %v1362
        %v1407 = vadd.f32 %v1278, %v1365
        %v1408 = vadd.f32 %v1279, %v1368
        %v1409 = vadd.f32 %v1280, %v1371
        %v1410 = vadd.f32 %v1281, %v1374
        %v1411 = vadd.f32 %v1282, %v1377
        %v1412 = vadd.f32 %v1283, %v1380
        %vm1413 = vcmask 7168
        %1414 = vst.msk [vmem:[#allocation3] sm:$0xff] %vm1413, %v1381
        %1415 = vst.msk [vmem:[#allocation3 + $0x8] sm:$0xff] %vm1413, %v1382
        %1416 = vst.msk [vmem:[#allocation3 + $0x10] sm:$0xff] %vm1413, %v1383
        %1417 = vst.msk [vmem:[#allocation3 + $0x18] sm:$0xff] %vm1413, %v1384
        %1418 = vst.msk [vmem:[#allocation3 + $0x20] sm:$0xff] %vm1413, %v1385
        %1419 = vst.msk [vmem:[#allocation3 + $0x28] sm:$0xff] %vm1413, %v1386
        %1420 = vst.msk [vmem:[#allocation3 + $0x30] sm:$0xff] %vm1413, %v1387
        %1421 = vst.msk [vmem:[#allocation3 + $0x38] sm:$0xff] %vm1413, %v1388
        %1422 = vst.msk [vmem:[#allocation3 + $0x40] sm:$0xff] %vm1413, %v1389
        %1423 = vst.msk [vmem:[#allocation3 + $0x48] sm:$0xff] %vm1413, %v1390
        %1424 = vst.msk [vmem:[#allocation3 + $0x50] sm:$0xff] %vm1413, %v1391
        %1425 = vst.msk [vmem:[#allocation3 + $0x58] sm:$0xff] %vm1413, %v1392
        %1426 = vst.msk [vmem:[#allocation3 + $0x60] sm:$0xff] %vm1413, %v1393
        %1427 = vst.msk [vmem:[#allocation3 + $0x68] sm:$0xff] %vm1413, %v1394
        %1428 = vst.msk [vmem:[#allocation3 + $0x70] sm:$0xff] %vm1413, %v1395
        %1429 = vst.msk [vmem:[#allocation3 + $0x78] sm:$0xff] %vm1413, %v1396
        %1430 = vst.msk [vmem:[#allocation3 + $0x80] sm:$0xff] %vm1413, %v1397
        %1431 = vst.msk [vmem:[#allocation3 + $0x88] sm:$0xff] %vm1413, %v1398
        %1432 = vst.msk [vmem:[#allocation3 + $0x90] sm:$0xff] %vm1413, %v1399
        %1433 = vst.msk [vmem:[#allocation3 + $0x98] sm:$0xff] %vm1413, %v1400
        %1434 = vst.msk [vmem:[#allocation3 + $0xa0] sm:$0xff] %vm1413, %v1401
        %1435 = vst.msk [vmem:[#allocation3 + $0xa8] sm:$0xff] %vm1413, %v1402
        %1436 = vst.msk [vmem:[#allocation3 + $0xb0] sm:$0xff] %vm1413, %v1403
        %1437 = vst.msk [vmem:[#allocation3 + $0xb8] sm:$0xff] %vm1413, %v1404
        %1438 = vst.msk [vmem:[#allocation3 + $0xc0] sm:$0xff] %vm1413, %v1405
        %1439 = vst.msk [vmem:[#allocation3 + $0xc8] sm:$0xff] %vm1413, %v1406
        %1440 = vst.msk [vmem:[#allocation3 + $0xd0] sm:$0xff] %vm1413, %v1407
        %1441 = vst.msk [vmem:[#allocation3 + $0xd8] sm:$0xff] %vm1413, %v1408
        %1442 = vst.msk [vmem:[#allocation3 + $0xe0] sm:$0xff] %vm1413, %v1409
        %1443 = vst.msk [vmem:[#allocation3 + $0xe8] sm:$0xff] %vm1413, %v1410
        %1444 = vst.msk [vmem:[#allocation3 + $0xf0] sm:$0xff] %vm1413, %v1411
        %1445 = vst.msk [vmem:[#allocation3 + $0xf8] sm:$0xff] %vm1413, %v1412
        %v1446 = vld [vmem:[#allocation4] sm:$0xff]
        %v1447 = vld [vmem:[#allocation4 + $0x8] sm:$0xff]
        %v1448 = vld [vmem:[#allocation4 + $0x10] sm:$0xff]
        %v1449 = vld [vmem:[#allocation4 + $0x18] sm:$0xff]
        %v1450 = vld [vmem:[#allocation4 + $0x20] sm:$0xff]
        %v1451 = vld [vmem:[#allocation4 + $0x28] sm:$0xff]
        %v1452 = vld [vmem:[#allocation4 + $0x30] sm:$0xff]
        %v1453 = vld [vmem:[#allocation4 + $0x38] sm:$0xff]
        %v1454 = vld [vmem:[#allocation4 + $0x40] sm:$0xff]
        %v1455 = vld [vmem:[#allocation4 + $0x48] sm:$0xff]
        %v1456 = vld [vmem:[#allocation4 + $0x50] sm:$0xff]
        %v1457 = vld [vmem:[#allocation4 + $0x58] sm:$0xff]
        %v1458 = vld [vmem:[#allocation4 + $0x60] sm:$0xff]
        %v1459 = vld [vmem:[#allocation4 + $0x68] sm:$0xff]
        %v1460 = vld [vmem:[#allocation4 + $0x70] sm:$0xff]
        %v1461 = vld [vmem:[#allocation4 + $0x78] sm:$0xff]
        %v1462 = vld [vmem:[#allocation4 + $0x80] sm:$0xff]
        %v1463 = vld [vmem:[#allocation4 + $0x88] sm:$0xff]
        %v1464 = vld [vmem:[#allocation4 + $0x90] sm:$0xff]
        %v1465 = vld [vmem:[#allocation4 + $0x98] sm:$0xff]
        %v1466 = vld [vmem:[#allocation4 + $0xa0] sm:$0xff]
        %v1467 = vld [vmem:[#allocation4 + $0xa8] sm:$0xff]
        %v1468 = vld [vmem:[#allocation4 + $0xb0] sm:$0xff]
        %v1469 = vld [vmem:[#allocation4 + $0xb8] sm:$0xff]
        %v1470 = vld [vmem:[#allocation4 + $0xc0] sm:$0xff]
        %v1471 = vld [vmem:[#allocation4 + $0xc8] sm:$0xff]
        %v1472 = vld [vmem:[#allocation4 + $0xd0] sm:$0xff]
        %v1473 = vld [vmem:[#allocation4 + $0xd8] sm:$0xff]
        %v1474 = vld [vmem:[#allocation4 + $0xe0] sm:$0xff]
        %v1475 = vld [vmem:[#allocation4 + $0xe8] sm:$0xff]
        %v1476 = vld [vmem:[#allocation4 + $0xf0] sm:$0xff]
        %v1477 = vld [vmem:[#allocation4 + $0xf8] sm:$0xff]
        %v1478 = vmul.f32 %v1220, %v1220
        %v1479 = vmul.f32 %v1221, %v1221
        %v1480 = vmul.f32 %v1222, %v1222
        %v1481 = vmul.f32 %v1223, %v1223
        %v1482 = vmul.f32 %v1224, %v1224
        %v1483 = vmul.f32 %v1225, %v1225
        %v1484 = vmul.f32 %v1226, %v1226
        %v1485 = vmul.f32 %v1227, %v1227
        %v1486 = vmul.f32 %v1228, %v1228
        %v1487 = vmul.f32 %v1229, %v1229
        %v1488 = vmul.f32 %v1230, %v1230
        %v1489 = vmul.f32 %v1231, %v1231
        %v1490 = vmul.f32 %v1232, %v1232
        %v1491 = vmul.f32 %v1233, %v1233
        %v1492 = vmul.f32 %v1234, %v1234
        %v1493 = vmul.f32 %v1235, %v1235
        %v1494 = vmul.f32 %v1236, %v1236
        %v1495 = vmul.f32 %v1237, %v1237
        %v1496 = vmul.f32 %v1238, %v1238
        %v1497 = vmul.f32 %v1239, %v1239
        %v1498 = vmul.f32 %v1240, %v1240
        %v1499 = vmul.f32 %v1241, %v1241
        %v1500 = vmul.f32 %v1242, %v1242
        %v1501 = vmul.f32 %v1243, %v1243
        %v1502 = vmul.f32 %v1244, %v1244
        %v1503 = vmul.f32 %v1245, %v1245
        %v1504 = vmul.f32 %v1246, %v1246
        %v1505 = vmul.f32 %v1247, %v1247
        %v1506 = vmul.f32 %v1248, %v1248
        %v1507 = vmul.f32 %v1249, %v1249
        %v1508 = vmul.f32 %v1250, %v1250
        %v1509 = vmul.f32 %v1251, %v1251
        %v1510 = vsel %vm1284, %v1478, 0.0
        %1511 = vadd.xlane.f32.xlu0 %v1510
        %v1512 = vpop.xlane.xlu0 %1511
        %v1513 = vsel %vm1284, %v1479, 0.0
        %1514 = vadd.xlane.f32.xlu0 %v1513
        %v1515 = vpop.xlane.xlu0 %1514
        %v1516 = vsel %vm1284, %v1480, 0.0
        %1517 = vadd.xlane.f32.xlu0 %v1516
        %v1518 = vpop.xlane.xlu0 %1517
        %v1519 = vsel %vm1284, %v1481, 0.0
        %1520 = vadd.xlane.f32.xlu0 %v1519
        %v1521 = vpop.xlane.xlu0 %1520
        %v1522 = vsel %vm1284, %v1482, 0.0
        %1523 = vadd.xlane.f32.xlu0 %v1522
        %v1524 = vpop.xlane.xlu0 %1523
        %v1525 = vsel %vm1284, %v1483, 0.0
        %1526 = vadd.xlane.f32.xlu0 %v1525
        %v1527 = vpop.xlane.xlu0 %1526
        %v1528 = vsel %vm1284, %v1484, 0.0
        %1529 = vadd.xlane.f32.xlu0 %v1528
        %v1530 = vpop.xlane.xlu0 %1529
        %v1531 = vsel %vm1284, %v1485, 0.0
        %1532 = vadd.xlane.f32.xlu0 %v1531
        %v1533 = vpop.xlane.xlu0 %1532
        %v1534 = vsel %vm1284, %v1486, 0.0
        %1535 = vadd.xlane.f32.xlu0 %v1534
        %v1536 = vpop.xlane.xlu0 %1535
        %v1537 = vsel %vm1284, %v1487, 0.0
        %1538 = vadd.xlane.f32.xlu0 %v1537
        %v1539 = vpop.xlane.xlu0 %1538
        %v1540 = vsel %vm1284, %v1488, 0.0
        %1541 = vadd.xlane.f32.xlu0 %v1540
        %v1542 = vpop.xlane.xlu0 %1541
        %v1543 = vsel %vm1284, %v1489, 0.0
        %1544 = vadd.xlane.f32.xlu0 %v1543
        %v1545 = vpop.xlane.xlu0 %1544
        %v1546 = vsel %vm1284, %v1490, 0.0
        %1547 = vadd.xlane.f32.xlu0 %v1546
        %v1548 = vpop.xlane.xlu0 %1547
        %v1549 = vsel %vm1284, %v1491, 0.0
        %1550 = vadd.xlane.f32.xlu0 %v1549
        %v1551 = vpop.xlane.xlu0 %1550
        %v1552 = vsel %vm1284, %v1492, 0.0
        %1553 = vadd.xlane.f32.xlu0 %v1552
        %v1554 = vpop.xlane.xlu0 %1553
        %v1555 = vsel %vm1284, %v1493, 0.0
        %1556 = vadd.xlane.f32.xlu0 %v1555
        %v1557 = vpop.xlane.xlu0 %1556
        %v1558 = vsel %vm1284, %v1494, 0.0
        %1559 = vadd.xlane.f32.xlu0 %v1558
        %v1560 = vpop.xlane.xlu0 %1559
        %v1561 = vsel %vm1284, %v1495, 0.0
        %1562 = vadd.xlane.f32.xlu0 %v1561
        %v1563 = vpop.xlane.xlu0 %1562
        %v1564 = vsel %vm1284, %v1496, 0.0
        %1565 = vadd.xlane.f32.xlu0 %v1564
        %v1566 = vpop.xlane.xlu0 %1565
        %v1567 = vsel %vm1284, %v1497, 0.0
        %1568 = vadd.xlane.f32.xlu0 %v1567
        %v1569 = vpop.xlane.xlu0 %1568
        %v1570 = vsel %vm1284, %v1498, 0.0
        %1571 = vadd.xlane.f32.xlu0 %v1570
        %v1572 = vpop.xlane.xlu0 %1571
        %v1573 = vsel %vm1284, %v1499, 0.0
        %1574 = vadd.xlane.f32.xlu0 %v1573
        %v1575 = vpop.xlane.xlu0 %1574
        %v1576 = vsel %vm1284, %v1500, 0.0
        %1577 = vadd.xlane.f32.xlu0 %v1576
        %v1578 = vpop.xlane.xlu0 %1577
        %v1579 = vsel %vm1284, %v1501, 0.0
        %1580 = vadd.xlane.f32.xlu0 %v1579
        %v1581 = vpop.xlane.xlu0 %1580
        %v1582 = vsel %vm1284, %v1502, 0.0
        %1583 = vadd.xlane.f32.xlu0 %v1582
        %v1584 = vpop.xlane.xlu0 %1583
        %v1585 = vsel %vm1284, %v1503, 0.0
        %1586 = vadd.xlane.f32.xlu0 %v1585
        %v1587 = vpop.xlane.xlu0 %1586
        %v1588 = vsel %vm1284, %v1504, 0.0
        %1589 = vadd.xlane.f32.xlu0 %v1588
        %v1590 = vpop.xlane.xlu0 %1589
        %v1591 = vsel %vm1284, %v1505, 0.0
        %1592 = vadd.xlane.f32.xlu0 %v1591
        %v1593 = vpop.xlane.xlu0 %1592
        %v1594 = vsel %vm1284, %v1506, 0.0
        %1595 = vadd.xlane.f32.xlu0 %v1594
        %v1596 = vpop.xlane.xlu0 %1595
        %v1597 = vsel %vm1284, %v1507, 0.0
        %1598 = vadd.xlane.f32.xlu0 %v1597
        %v1599 = vpop.xlane.xlu0 %1598
        %v1600 = vsel %vm1284, %v1508, 0.0
        %1601 = vadd.xlane.f32.xlu0 %v1600
        %v1602 = vpop.xlane.xlu0 %1601
        %v1603 = vsel %vm1284, %v1509, 0.0
        %1604 = vadd.xlane.f32.xlu0 %v1603
        %v1605 = vpop.xlane.xlu0 %1604
        %v1606 = vadd.f32 %v1446, %v1512
        %v1607 = vadd.f32 %v1447, %v1515
        %v1608 = vadd.f32 %v1448, %v1518
        %v1609 = vadd.f32 %v1449, %v1521
        %v1610 = vadd.f32 %v1450, %v1524
        %v1611 = vadd.f32 %v1451, %v1527
        %v1612 = vadd.f32 %v1452, %v1530
        %v1613 = vadd.f32 %v1453, %v1533
        %v1614 = vadd.f32 %v1454, %v1536
        %v1615 = vadd.f32 %v1455, %v1539
        %v1616 = vadd.f32 %v1456, %v1542
        %v1617 = vadd.f32 %v1457, %v1545
        %v1618 = vadd.f32 %v1458, %v1548
        %v1619 = vadd.f32 %v1459, %v1551
        %v1620 = vadd.f32 %v1460, %v1554
        %v1621 = vadd.f32 %v1461, %v1557
        %v1622 = vadd.f32 %v1462, %v1560
        %v1623 = vadd.f32 %v1463, %v1563
        %v1624 = vadd.f32 %v1464, %v1566
        %v1625 = vadd.f32 %v1465, %v1569
        %v1626 = vadd.f32 %v1466, %v1572
        %v1627 = vadd.f32 %v1467, %v1575
        %v1628 = vadd.f32 %v1468, %v1578
        %v1629 = vadd.f32 %v1469, %v1581
        %v1630 = vadd.f32 %v1470, %v1584
        %v1631 = vadd.f32 %v1471, %v1587
        %v1632 = vadd.f32 %v1472, %v1590
        %v1633 = vadd.f32 %v1473, %v1593
        %v1634 = vadd.f32 %v1474, %v1596
        %v1635 = vadd.f32 %v1475, %v1599
        %v1636 = vadd.f32 %v1476, %v1602
        %v1637 = vadd.f32 %v1477, %v1605
        %1638 = vst.msk [vmem:[#allocation4] sm:$0xff] %vm1413, %v1606
        %1639 = vst.msk [vmem:[#allocation4 + $0x8] sm:$0xff] %vm1413, %v1607
        %1640 = vst.msk [vmem:[#allocation4 + $0x10] sm:$0xff] %vm1413, %v1608
        %1641 = vst.msk [vmem:[#allocation4 + $0x18] sm:$0xff] %vm1413, %v1609
        %1642 = vst.msk [vmem:[#allocation4 + $0x20] sm:$0xff] %vm1413, %v1610
        %1643 = vst.msk [vmem:[#allocation4 + $0x28] sm:$0xff] %vm1413, %v1611
        %1644 = vst.msk [vmem:[#allocation4 + $0x30] sm:$0xff] %vm1413, %v1612
        %1645 = vst.msk [vmem:[#allocation4 + $0x38] sm:$0xff] %vm1413, %v1613
        %1646 = vst.msk [vmem:[#allocation4 + $0x40] sm:$0xff] %vm1413, %v1614
        %1647 = vst.msk [vmem:[#allocation4 + $0x48] sm:$0xff] %vm1413, %v1615
        %1648 = vst.msk [vmem:[#allocation4 + $0x50] sm:$0xff] %vm1413, %v1616
        %1649 = vst.msk [vmem:[#allocation4 + $0x58] sm:$0xff] %vm1413, %v1617
        %1650 = vst.msk [vmem:[#allocation4 + $0x60] sm:$0xff] %vm1413, %v1618
        %1651 = vst.msk [vmem:[#allocation4 + $0x68] sm:$0xff] %vm1413, %v1619
        %1652 = vst.msk [vmem:[#allocation4 + $0x70] sm:$0xff] %vm1413, %v1620
        %1653 = vst.msk [vmem:[#allocation4 + $0x78] sm:$0xff] %vm1413, %v1621
        %1654 = vst.msk [vmem:[#allocation4 + $0x80] sm:$0xff] %vm1413, %v1622
        %1655 = vst.msk [vmem:[#allocation4 + $0x88] sm:$0xff] %vm1413, %v1623
        %1656 = vst.msk [vmem:[#allocation4 + $0x90] sm:$0xff] %vm1413, %v1624
        %1657 = vst.msk [vmem:[#allocation4 + $0x98] sm:$0xff] %vm1413, %v1625
        %1658 = vst.msk [vmem:[#allocation4 + $0xa0] sm:$0xff] %vm1413, %v1626
        %1659 = vst.msk [vmem:[#allocation4 + $0xa8] sm:$0xff] %vm1413, %v1627
        %1660 = vst.msk [vmem:[#allocation4 + $0xb0] sm:$0xff] %vm1413, %v1628
        %1661 = vst.msk [vmem:[#allocation4 + $0xb8] sm:$0xff] %vm1413, %v1629
        %1662 = vst.msk [vmem:[#allocation4 + $0xc0] sm:$0xff] %vm1413, %v1630
        %1663 = vst.msk [vmem:[#allocation4 + $0xc8] sm:$0xff] %vm1413, %v1631
        %1664 = vst.msk [vmem:[#allocation4 + $0xd0] sm:$0xff] %vm1413, %v1632
        %1665 = vst.msk [vmem:[#allocation4 + $0xd8] sm:$0xff] %vm1413, %v1633
        %1666 = vst.msk [vmem:[#allocation4 + $0xe0] sm:$0xff] %vm1413, %v1634
        %1667 = vst.msk [vmem:[#allocation4 + $0xe8] sm:$0xff] %vm1413, %v1635
        %1668 = vst.msk [vmem:[#allocation4 + $0xf0] sm:$0xff] %vm1413, %v1636
        %1669 = vst.msk [vmem:[#allocation4 + $0xf8] sm:$0xff] %vm1413, %v1637
        %v1670 = vpack.c.bf16 %v1220, %v1220
        %v1671 = vpack.c.bf16 %v1221, %v1221
        %v1672 = vpack.c.bf16 %v1222, %v1222
        %v1673 = vpack.c.bf16 %v1223, %v1223
        %v1674 = vpack.c.bf16 %v1224, %v1224
        %v1675 = vpack.c.bf16 %v1225, %v1225
        %v1676 = vpack.c.bf16 %v1226, %v1226
        %v1677 = vpack.c.bf16 %v1227, %v1227
        %v1678 = vpack.c.bf16 %v1228, %v1228
        %v1679 = vpack.c.bf16 %v1229, %v1229
        %v1680 = vpack.c.bf16 %v1230, %v1230
        %v1681 = vpack.c.bf16 %v1231, %v1231
        %v1682 = vpack.c.bf16 %v1232, %v1232
        %v1683 = vpack.c.bf16 %v1233, %v1233
        %v1684 = vpack.c.bf16 %v1234, %v1234
        %v1685 = vpack.c.bf16 %v1235, %v1235
        %v1686 = vpack.c.bf16 %v1236, %v1236
        %v1687 = vpack.c.bf16 %v1237, %v1237
        %v1688 = vpack.c.bf16 %v1238, %v1238
        %v1689 = vpack.c.bf16 %v1239, %v1239
        %v1690 = vpack.c.bf16 %v1240, %v1240
        %v1691 = vpack.c.bf16 %v1241, %v1241
        %v1692 = vpack.c.bf16 %v1242, %v1242
        %v1693 = vpack.c.bf16 %v1243, %v1243
        %v1694 = vpack.c.bf16 %v1244, %v1244
        %v1695 = vpack.c.bf16 %v1245, %v1245
        %v1696 = vpack.c.bf16 %v1246, %v1246
        %v1697 = vpack.c.bf16 %v1247, %v1247
        %v1698 = vpack.c.bf16 %v1248, %v1248
        %v1699 = vpack.c.bf16 %v1249, %v1249
        %v1700 = vpack.c.bf16 %v1250, %v1250
        %v1701 = vpack.c.bf16 %v1251, %v1251
        %s1702 = smul.u32 %s29, 32
        %s1703 = smul.addr %s1702, 4
        %s1704 = scalar_lea.vmem [#allocation2], %s1703
        %vm1705 = vcmask 125952
        %1706 = vst.msk [vmem:[%s1704] sm:$0xf] %vm1705, %v1670
        %1707 = vst.msk [vmem:[%s1704 + $0x4] sm:$0xf] %vm1705, %v1671
        %1708 = vst.msk [vmem:[%s1704 + $0x8] sm:$0xf] %vm1705, %v1672
        %1709 = vst.msk [vmem:[%s1704 + $0xc] sm:$0xf] %vm1705, %v1673
        %1710 = vst.msk [vmem:[%s1704 + $0x10] sm:$0xf] %vm1705, %v1674
        %1711 = vst.msk [vmem:[%s1704 + $0x14] sm:$0xf] %vm1705, %v1675
        %1712 = vst.msk [vmem:[%s1704 + $0x18] sm:$0xf] %vm1705, %v1676
        %1713 = vst.msk [vmem:[%s1704 + $0x1c] sm:$0xf] %vm1705, %v1677
        %1714 = vst.msk [vmem:[%s1704 + $0x20] sm:$0xf] %vm1705, %v1678
        %1715 = vst.msk [vmem:[%s1704 + $0x24] sm:$0xf] %vm1705, %v1679
        %1716 = vst.msk [vmem:[%s1704 + $0x28] sm:$0xf] %vm1705, %v1680
        %1717 = vst.msk [vmem:[%s1704 + $0x2c] sm:$0xf] %vm1705, %v1681
        %1718 = vst.msk [vmem:[%s1704 + $0x30] sm:$0xf] %vm1705, %v1682
        %1719 = vst.msk [vmem:[%s1704 + $0x34] sm:$0xf] %vm1705, %v1683
        %1720 = vst.msk [vmem:[%s1704 + $0x38] sm:$0xf] %vm1705, %v1684
        %1721 = vst.msk [vmem:[%s1704 + $0x3c] sm:$0xf] %vm1705, %v1685
        %1722 = vst.msk [vmem:[%s1704 + $0x40] sm:$0xf] %vm1705, %v1686
        %1723 = vst.msk [vmem:[%s1704 + $0x44] sm:$0xf] %vm1705, %v1687
        %1724 = vst.msk [vmem:[%s1704 + $0x48] sm:$0xf] %vm1705, %v1688
        %1725 = vst.msk [vmem:[%s1704 + $0x4c] sm:$0xf] %vm1705, %v1689
        %1726 = vst.msk [vmem:[%s1704 + $0x50] sm:$0xf] %vm1705, %v1690
        %1727 = vst.msk [vmem:[%s1704 + $0x54] sm:$0xf] %vm1705, %v1691
        %1728 = vst.msk [vmem:[%s1704 + $0x58] sm:$0xf] %vm1705, %v1692
        %1729 = vst.msk [vmem:[%s1704 + $0x5c] sm:$0xf] %vm1705, %v1693
        %1730 = vst.msk [vmem:[%s1704 + $0x60] sm:$0xf] %vm1705, %v1694
        %1731 = vst.msk [vmem:[%s1704 + $0x64] sm:$0xf] %vm1705, %v1695
        %1732 = vst.msk [vmem:[%s1704 + $0x68] sm:$0xf] %vm1705, %v1696
        %1733 = vst.msk [vmem:[%s1704 + $0x6c] sm:$0xf] %vm1705, %v1697
        %1734 = vst.msk [vmem:[%s1704 + $0x70] sm:$0xf] %vm1705, %v1698
        %1735 = vst.msk [vmem:[%s1704 + $0x74] sm:$0xf] %vm1705, %v1699
        %1736 = vst.msk [vmem:[%s1704 + $0x78] sm:$0xf] %vm1705, %v1700
        %1737 = vst.msk [vmem:[%s1704 + $0x7c] sm:$0xf] %vm1705, %v1701
      $region60: #{pixel_discriminator.1} parent=55 // pred_fallthru
        _
      %p1738 = scmp.eq.s32.totalorder %s28, 1
      // Predicated region
      $region65: #{pixel_discriminator.1} parent=55 // pred_check
        %p1739 = pneg %p1738
      $region66: #{pixel_discriminator.1} parent=55 // pred_check_branch
        %1741 = sbr.rel (%p1739) target = $region68
      $region67: #{pixel_discriminator.1} parent=55 // pred_region
        %v1742 = vld [vmem:[#allocation3] sm:$0xff]
        %v1743 = vld [vmem:[#allocation3 + $0x8] sm:$0xff]
        %v1744 = vld [vmem:[#allocation3 + $0x10] sm:$0xff]
        %v1745 = vld [vmem:[#allocation3 + $0x18] sm:$0xff]
        %v1746 = vld [vmem:[#allocation3 + $0x20] sm:$0xff]
        %v1747 = vld [vmem:[#allocation3 + $0x28] sm:$0xff]
        %v1748 = vld [vmem:[#allocation3 + $0x30] sm:$0xff]
        %v1749 = vld [vmem:[#allocation3 + $0x38] sm:$0xff]
        %v1750 = vld [vmem:[#allocation3 + $0x40] sm:$0xff]
        %v1751 = vld [vmem:[#allocation3 + $0x48] sm:$0xff]
        %v1752 = vld [vmem:[#allocation3 + $0x50] sm:$0xff]
        %v1753 = vld [vmem:[#allocation3 + $0x58] sm:$0xff]
        %v1754 = vld [vmem:[#allocation3 + $0x60] sm:$0xff]
        %v1755 = vld [vmem:[#allocation3 + $0x68] sm:$0xff]
        %v1756 = vld [vmem:[#allocation3 + $0x70] sm:$0xff]
        %v1757 = vld [vmem:[#allocation3 + $0x78] sm:$0xff]
        %v1758 = vld [vmem:[#allocation3 + $0x80] sm:$0xff]
        %v1759 = vld [vmem:[#allocation3 + $0x88] sm:$0xff]
        %v1760 = vld [vmem:[#allocation3 + $0x90] sm:$0xff]
        %v1761 = vld [vmem:[#allocation3 + $0x98] sm:$0xff]
        %v1762 = vld [vmem:[#allocation3 + $0xa0] sm:$0xff]
        %v1763 = vld [vmem:[#allocation3 + $0xa8] sm:$0xff]
        %v1764 = vld [vmem:[#allocation3 + $0xb0] sm:$0xff]
        %v1765 = vld [vmem:[#allocation3 + $0xb8] sm:$0xff]
        %v1766 = vld [vmem:[#allocation3 + $0xc0] sm:$0xff]
        %v1767 = vld [vmem:[#allocation3 + $0xc8] sm:$0xff]
        %v1768 = vld [vmem:[#allocation3 + $0xd0] sm:$0xff]
        %v1769 = vld [vmem:[#allocation3 + $0xd8] sm:$0xff]
        %v1770 = vld [vmem:[#allocation3 + $0xe0] sm:$0xff]
        %v1771 = vld [vmem:[#allocation3 + $0xe8] sm:$0xff]
        %v1772 = vld [vmem:[#allocation3 + $0xf0] sm:$0xff]
        %v1773 = vld [vmem:[#allocation3 + $0xf8] sm:$0xff]
        %v1774 = vmul.f32 %v1742, 0.0625
        %v1775 = vmul.f32 %v1743, 0.0625
        %v1776 = vmul.f32 %v1744, 0.0625
        %v1777 = vmul.f32 %v1745, 0.0625
        %v1778 = vmul.f32 %v1746, 0.0625
        %v1779 = vmul.f32 %v1747, 0.0625
        %v1780 = vmul.f32 %v1748, 0.0625
        %v1781 = vmul.f32 %v1749, 0.0625
        %v1782 = vmul.f32 %v1750, 0.0625
        %v1783 = vmul.f32 %v1751, 0.0625
        %v1784 = vmul.f32 %v1752, 0.0625
        %v1785 = vmul.f32 %v1753, 0.0625
        %v1786 = vmul.f32 %v1754, 0.0625
        %v1787 = vmul.f32 %v1755, 0.0625
        %v1788 = vmul.f32 %v1756, 0.0625
        %v1789 = vmul.f32 %v1757, 0.0625
        %v1790 = vmul.f32 %v1758, 0.0625
        %v1791 = vmul.f32 %v1759, 0.0625
        %v1792 = vmul.f32 %v1760, 0.0625
        %v1793 = vmul.f32 %v1761, 0.0625
        %v1794 = vmul.f32 %v1762, 0.0625
        %v1795 = vmul.f32 %v1763, 0.0625
        %v1796 = vmul.f32 %v1764, 0.0625
        %v1797 = vmul.f32 %v1765, 0.0625
        %v1798 = vmul.f32 %v1766, 0.0625
        %v1799 = vmul.f32 %v1767, 0.0625
        %v1800 = vmul.f32 %v1768, 0.0625
        %v1801 = vmul.f32 %v1769, 0.0625
        %v1802 = vmul.f32 %v1770, 0.0625
        %v1803 = vmul.f32 %v1771, 0.0625
        %v1804 = vmul.f32 %v1772, 0.0625
        %v1805 = vmul.f32 %v1773, 0.0625
        %v1806 = vld [vmem:[#allocation4] sm:$0xff]
        %v1807 = vld [vmem:[#allocation4 + $0x8] sm:$0xff]
        %v1808 = vld [vmem:[#allocation4 + $0x10] sm:$0xff]
        %v1809 = vld [vmem:[#allocation4 + $0x18] sm:$0xff]
        %v1810 = vld [vmem:[#allocation4 + $0x20] sm:$0xff]
        %v1811 = vld [vmem:[#allocation4 + $0x28] sm:$0xff]
        %v1812 = vld [vmem:[#allocation4 + $0x30] sm:$0xff]
        %v1813 = vld [vmem:[#allocation4 + $0x38] sm:$0xff]
        %v1814 = vld [vmem:[#allocation4 + $0x40] sm:$0xff]
        %v1815 = vld [vmem:[#allocation4 + $0x48] sm:$0xff]
        %v1816 = vld [vmem:[#allocation4 + $0x50] sm:$0xff]
        %v1817 = vld [vmem:[#allocation4 + $0x58] sm:$0xff]
        %v1818 = vld [vmem:[#allocation4 + $0x60] sm:$0xff]
        %v1819 = vld [vmem:[#allocation4 + $0x68] sm:$0xff]
        %v1820 = vld [vmem:[#allocation4 + $0x70] sm:$0xff]
        %v1821 = vld [vmem:[#allocation4 + $0x78] sm:$0xff]
        %v1822 = vld [vmem:[#allocation4 + $0x80] sm:$0xff]
        %v1823 = vld [vmem:[#allocation4 + $0x88] sm:$0xff]
        %v1824 = vld [vmem:[#allocation4 + $0x90] sm:$0xff]
        %v1825 = vld [vmem:[#allocation4 + $0x98] sm:$0xff]
        %v1826 = vld [vmem:[#allocation4 + $0xa0] sm:$0xff]
        %v1827 = vld [vmem:[#allocation4 + $0xa8] sm:$0xff]
        %v1828 = vld [vmem:[#allocation4 + $0xb0] sm:$0xff]
        %v1829 = vld [vmem:[#allocation4 + $0xb8] sm:$0xff]
        %v1830 = vld [vmem:[#allocation4 + $0xc0] sm:$0xff]
        %v1831 = vld [vmem:[#allocation4 + $0xc8] sm:$0xff]
        %v1832 = vld [vmem:[#allocation4 + $0xd0] sm:$0xff]
        %v1833 = vld [vmem:[#allocation4 + $0xd8] sm:$0xff]
        %v1834 = vld [vmem:[#allocation4 + $0xe0] sm:$0xff]
        %v1835 = vld [vmem:[#allocation4 + $0xe8] sm:$0xff]
        %v1836 = vld [vmem:[#allocation4 + $0xf0] sm:$0xff]
        %v1837 = vld [vmem:[#allocation4 + $0xf8] sm:$0xff]
        %v1838 = vmul.f32 %v1806, 0.0625
        %v1839 = vmul.f32 %v1807, 0.0625
        %v1840 = vmul.f32 %v1808, 0.0625
        %v1841 = vmul.f32 %v1809, 0.0625
        %v1842 = vmul.f32 %v1810, 0.0625
        %v1843 = vmul.f32 %v1811, 0.0625
        %v1844 = vmul.f32 %v1812, 0.0625
        %v1845 = vmul.f32 %v1813, 0.0625
        %v1846 = vmul.f32 %v1814, 0.0625
        %v1847 = vmul.f32 %v1815, 0.0625
        %v1848 = vmul.f32 %v1816, 0.0625
        %v1849 = vmul.f32 %v1817, 0.0625
        %v1850 = vmul.f32 %v1818, 0.0625
        %v1851 = vmul.f32 %v1819, 0.0625
        %v1852 = vmul.f32 %v1820, 0.0625
        %v1853 = vmul.f32 %v1821, 0.0625
        %v1854 = vmul.f32 %v1822, 0.0625
        %v1855 = vmul.f32 %v1823, 0.0625
        %v1856 = vmul.f32 %v1824, 0.0625
        %v1857 = vmul.f32 %v1825, 0.0625
        %v1858 = vmul.f32 %v1826, 0.0625
        %v1859 = vmul.f32 %v1827, 0.0625
        %v1860 = vmul.f32 %v1828, 0.0625
        %v1861 = vmul.f32 %v1829, 0.0625
        %v1862 = vmul.f32 %v1830, 0.0625
        %v1863 = vmul.f32 %v1831, 0.0625
        %v1864 = vmul.f32 %v1832, 0.0625
        %v1865 = vmul.f32 %v1833, 0.0625
        %v1866 = vmul.f32 %v1834, 0.0625
        %v1867 = vmul.f32 %v1835, 0.0625
        %v1868 = vmul.f32 %v1836, 0.0625
        %v1869 = vmul.f32 %v1837, 0.0625
        %v1870 = vmul.f32 %v1774, %v1774
        %v1871 = vmul.f32 %v1775, %v1775
        %v1872 = vmul.f32 %v1776, %v1776
        %v1873 = vmul.f32 %v1777, %v1777
        %v1874 = vmul.f32 %v1778, %v1778
        %v1875 = vmul.f32 %v1779, %v1779
        %v1876 = vmul.f32 %v1780, %v1780
        %v1877 = vmul.f32 %v1781, %v1781
        %v1878 = vmul.f32 %v1782, %v1782
        %v1879 = vmul.f32 %v1783, %v1783
        %v1880 = vmul.f32 %v1784, %v1784
        %v1881 = vmul.f32 %v1785, %v1785
        %v1882 = vmul.f32 %v1786, %v1786
        %v1883 = vmul.f32 %v1787, %v1787
        %v1884 = vmul.f32 %v1788, %v1788
        %v1885 = vmul.f32 %v1789, %v1789
        %v1886 = vmul.f32 %v1790, %v1790
        %v1887 = vmul.f32 %v1791, %v1791
        %v1888 = vmul.f32 %v1792, %v1792
        %v1889 = vmul.f32 %v1793, %v1793
        %v1890 = vmul.f32 %v1794, %v1794
        %v1891 = vmul.f32 %v1795, %v1795
        %v1892 = vmul.f32 %v1796, %v1796
        %v1893 = vmul.f32 %v1797, %v1797
        %v1894 = vmul.f32 %v1798, %v1798
        %v1895 = vmul.f32 %v1799, %v1799
        %v1896 = vmul.f32 %v1800, %v1800
        %v1897 = vmul.f32 %v1801, %v1801
        %v1898 = vmul.f32 %v1802, %v1802
        %v1899 = vmul.f32 %v1803, %v1803
        %v1900 = vmul.f32 %v1804, %v1804
        %v1901 = vmul.f32 %v1805, %v1805
        %v1902 = vsub.f32 %v1838, %v1870
        %v1903 = vsub.f32 %v1839, %v1871
        %v1904 = vsub.f32 %v1840, %v1872
        %v1905 = vsub.f32 %v1841, %v1873
        %v1906 = vsub.f32 %v1842, %v1874
        %v1907 = vsub.f32 %v1843, %v1875
        %v1908 = vsub.f32 %v1844, %v1876
        %v1909 = vsub.f32 %v1845, %v1877
        %v1910 = vsub.f32 %v1846, %v1878
        %v1911 = vsub.f32 %v1847, %v1879
        %v1912 = vsub.f32 %v1848, %v1880
        %v1913 = vsub.f32 %v1849, %v1881
        %v1914 = vsub.f32 %v1850, %v1882
        %v1915 = vsub.f32 %v1851, %v1883
        %v1916 = vsub.f32 %v1852, %v1884
        %v1917 = vsub.f32 %v1853, %v1885
        %v1918 = vsub.f32 %v1854, %v1886
        %v1919 = vsub.f32 %v1855, %v1887
        %v1920 = vsub.f32 %v1856, %v1888
        %v1921 = vsub.f32 %v1857, %v1889
        %v1922 = vsub.f32 %v1858, %v1890
        %v1923 = vsub.f32 %v1859, %v1891
        %v1924 = vsub.f32 %v1860, %v1892
        %v1925 = vsub.f32 %v1861, %v1893
        %v1926 = vsub.f32 %v1862, %v1894
        %v1927 = vsub.f32 %v1863, %v1895
        %v1928 = vsub.f32 %v1864, %v1896
        %v1929 = vsub.f32 %v1865, %v1897
        %v1930 = vsub.f32 %v1866, %v1898
        %v1931 = vsub.f32 %v1867, %v1899
        %v1932 = vsub.f32 %v1868, %v1900
        %v1933 = vsub.f32 %v1869, %v1901
        %v1934 = vmax.f32 %v1902, 0.0
        %v1935 = vmax.f32 %v1903, 0.0
        %v1936 = vmax.f32 %v1904, 0.0
        %v1937 = vmax.f32 %v1905, 0.0
        %v1938 = vmax.f32 %v1906, 0.0
        %v1939 = vmax.f32 %v1907, 0.0
        %v1940 = vmax.f32 %v1908, 0.0
        %v1941 = vmax.f32 %v1909, 0.0
        %v1942 = vmax.f32 %v1910, 0.0
        %v1943 = vmax.f32 %v1911, 0.0
        %v1944 = vmax.f32 %v1912, 0.0
        %v1945 = vmax.f32 %v1913, 0.0
        %v1946 = vmax.f32 %v1914, 0.0
        %v1947 = vmax.f32 %v1915, 0.0
        %v1948 = vmax.f32 %v1916, 0.0
        %v1949 = vmax.f32 %v1917, 0.0
        %v1950 = vmax.f32 %v1918, 0.0
        %v1951 = vmax.f32 %v1919, 0.0
        %v1952 = vmax.f32 %v1920, 0.0
        %v1953 = vmax.f32 %v1921, 0.0
        %v1954 = vmax.f32 %v1922, 0.0
        %v1955 = vmax.f32 %v1923, 0.0
        %v1956 = vmax.f32 %v1924, 0.0
        %v1957 = vmax.f32 %v1925, 0.0
        %v1958 = vmax.f32 %v1926, 0.0
        %v1959 = vmax.f32 %v1927, 0.0
        %v1960 = vmax.f32 %v1928, 0.0
        %v1961 = vmax.f32 %v1929, 0.0
        %v1962 = vmax.f32 %v1930, 0.0
        %v1963 = vmax.f32 %v1931, 0.0
        %v1964 = vmax.f32 %v1932, 0.0
        %v1965 = vmax.f32 %v1933, 0.0
        %v1966 = vadd.f32 %v1934, 1e-05
        %v1967 = vadd.f32 %v1935, 1e-05
        %v1968 = vadd.f32 %v1936, 1e-05
        %v1969 = vadd.f32 %v1937, 1e-05
        %v1970 = vadd.f32 %v1938, 1e-05
        %v1971 = vadd.f32 %v1939, 1e-05
        %v1972 = vadd.f32 %v1940, 1e-05
        %v1973 = vadd.f32 %v1941, 1e-05
        %v1974 = vadd.f32 %v1942, 1e-05
        %v1975 = vadd.f32 %v1943, 1e-05
        %v1976 = vadd.f32 %v1944, 1e-05
        %v1977 = vadd.f32 %v1945, 1e-05
        %v1978 = vadd.f32 %v1946, 1e-05
        %v1979 = vadd.f32 %v1947, 1e-05
        %v1980 = vadd.f32 %v1948, 1e-05
        %v1981 = vadd.f32 %v1949, 1e-05
        %v1982 = vadd.f32 %v1950, 1e-05
        %v1983 = vadd.f32 %v1951, 1e-05
        %v1984 = vadd.f32 %v1952, 1e-05
        %v1985 = vadd.f32 %v1953, 1e-05
        %v1986 = vadd.f32 %v1954, 1e-05
        %v1987 = vadd.f32 %v1955, 1e-05
        %v1988 = vadd.f32 %v1956, 1e-05
        %v1989 = vadd.f32 %v1957, 1e-05
        %v1990 = vadd.f32 %v1958, 1e-05
        %v1991 = vadd.f32 %v1959, 1e-05
        %v1992 = vadd.f32 %v1960, 1e-05
        %v1993 = vadd.f32 %v1961, 1e-05
        %v1994 = vadd.f32 %v1962, 1e-05
        %v1995 = vadd.f32 %v1963, 1e-05
        %v1996 = vadd.f32 %v1964, 1e-05
        %v1997 = vadd.f32 %v1965, 1e-05
        %v1998 = vrsqrt.pop %v1966
        %v1999 = vmul.f32 %v1998, %v1966
        %v2000 = vmul.f32 %v1999, %v1998
        %v2001 = vmul.f32 0.5, %v2000
        %v2002 = vsub.f32 1.5, %v2001
        %v2003 = vmul.f32 %v1998, %v2002
        %vm2004 = vweird.f32 %v1966
        %vm2005 = vweird.f32 %v1998
        %vm2006 = vmor %vm2004, %vm2005
        %v2007 = vsel %vm2006, %v1998, %v2003
        %v2008 = vrsqrt.pop %v1967
        %v2009 = vmul.f32 %v2008, %v1967
        %v2010 = vmul.f32 %v2009, %v2008
        %v2011 = vmul.f32 0.5, %v2010
        %v2012 = vsub.f32 1.5, %v2011
        %v2013 = vmul.f32 %v2008, %v2012
        %vm2014 = vweird.f32 %v1967
        %vm2015 = vweird.f32 %v2008
        %vm2016 = vmor %vm2014, %vm2015
        %v2017 = vsel %vm2016, %v2008, %v2013
        %v2018 = vrsqrt.pop %v1968
        %v2019 = vmul.f32 %v2018, %v1968
        %v2020 = vmul.f32 %v2019, %v2018
        %v2021 = vmul.f32 0.5, %v2020
        %v2022 = vsub.f32 1.5, %v2021
        %v2023 = vmul.f32 %v2018, %v2022
        %vm2024 = vweird.f32 %v1968
        %vm2025 = vweird.f32 %v2018
        %vm2026 = vmor %vm2024, %vm2025
        %v2027 = vsel %vm2026, %v2018, %v2023
        %v2028 = vrsqrt.pop %v1969
        %v2029 = vmul.f32 %v2028, %v1969
        %v2030 = vmul.f32 %v2029, %v2028
        %v2031 = vmul.f32 0.5, %v2030
        %v2032 = vsub.f32 1.5, %v2031
        %v2033 = vmul.f32 %v2028, %v2032
        %vm2034 = vweird.f32 %v1969
        %vm2035 = vweird.f32 %v2028
        %vm2036 = vmor %vm2034, %vm2035
        %v2037 = vsel %vm2036, %v2028, %v2033
        %v2038 = vrsqrt.pop %v1970
        %v2039 = vmul.f32 %v2038, %v1970
        %v2040 = vmul.f32 %v2039, %v2038
        %v2041 = vmul.f32 0.5, %v2040
        %v2042 = vsub.f32 1.5, %v2041
        %v2043 = vmul.f32 %v2038, %v2042
        %vm2044 = vweird.f32 %v1970
        %vm2045 = vweird.f32 %v2038
        %vm2046 = vmor %vm2044, %vm2045
        %v2047 = vsel %vm2046, %v2038, %v2043
        %v2048 = vrsqrt.pop %v1971
        %v2049 = vmul.f32 %v2048, %v1971
        %v2050 = vmul.f32 %v2049, %v2048
        %v2051 = vmul.f32 0.5, %v2050
        %v2052 = vsub.f32 1.5, %v2051
        %v2053 = vmul.f32 %v2048, %v2052
        %vm2054 = vweird.f32 %v1971
        %vm2055 = vweird.f32 %v2048
        %vm2056 = vmor %vm2054, %vm2055
        %v2057 = vsel %vm2056, %v2048, %v2053
        %v2058 = vrsqrt.pop %v1972
        %v2059 = vmul.f32 %v2058, %v1972
        %v2060 = vmul.f32 %v2059, %v2058
        %v2061 = vmul.f32 0.5, %v2060
        %v2062 = vsub.f32 1.5, %v2061
        %v2063 = vmul.f32 %v2058, %v2062
        %vm2064 = vweird.f32 %v1972
        %vm2065 = vweird.f32 %v2058
        %vm2066 = vmor %vm2064, %vm2065
        %v2067 = vsel %vm2066, %v2058, %v2063
        %v2068 = vrsqrt.pop %v1973
        %v2069 = vmul.f32 %v2068, %v1973
        %v2070 = vmul.f32 %v2069, %v2068
        %v2071 = vmul.f32 0.5, %v2070
        %v2072 = vsub.f32 1.5, %v2071
        %v2073 = vmul.f32 %v2068, %v2072
        %vm2074 = vweird.f32 %v1973
        %vm2075 = vweird.f32 %v2068
        %vm2076 = vmor %vm2074, %vm2075
        %v2077 = vsel %vm2076, %v2068, %v2073
        %v2078 = vrsqrt.pop %v1974
        %v2079 = vmul.f32 %v2078, %v1974
        %v2080 = vmul.f32 %v2079, %v2078
        %v2081 = vmul.f32 0.5, %v2080
        %v2082 = vsub.f32 1.5, %v2081
        %v2083 = vmul.f32 %v2078, %v2082
        %vm2084 = vweird.f32 %v1974
        %vm2085 = vweird.f32 %v2078
        %vm2086 = vmor %vm2084, %vm2085
        %v2087 = vsel %vm2086, %v2078, %v2083
        %v2088 = vrsqrt.pop %v1975
        %v2089 = vmul.f32 %v2088, %v1975
        %v2090 = vmul.f32 %v2089, %v2088
        %v2091 = vmul.f32 0.5, %v2090
        %v2092 = vsub.f32 1.5, %v2091
        %v2093 = vmul.f32 %v2088, %v2092
        %vm2094 = vweird.f32 %v1975
        %vm2095 = vweird.f32 %v2088
        %vm2096 = vmor %vm2094, %vm2095
        %v2097 = vsel %vm2096, %v2088, %v2093
        %v2098 = vrsqrt.pop %v1976
        %v2099 = vmul.f32 %v2098, %v1976
        %v2100 = vmul.f32 %v2099, %v2098
        %v2101 = vmul.f32 0.5, %v2100
        %v2102 = vsub.f32 1.5, %v2101
        %v2103 = vmul.f32 %v2098, %v2102
        %vm2104 = vweird.f32 %v1976
        %vm2105 = vweird.f32 %v2098
        %vm2106 = vmor %vm2104, %vm2105
        %v2107 = vsel %vm2106, %v2098, %v2103
        %v2108 = vrsqrt.pop %v1977
        %v2109 = vmul.f32 %v2108, %v1977
        %v2110 = vmul.f32 %v2109, %v2108
        %v2111 = vmul.f32 0.5, %v2110
        %v2112 = vsub.f32 1.5, %v2111
        %v2113 = vmul.f32 %v2108, %v2112
        %vm2114 = vweird.f32 %v1977
        %vm2115 = vweird.f32 %v2108
        %vm2116 = vmor %vm2114, %vm2115
        %v2117 = vsel %vm2116, %v2108, %v2113
        %v2118 = vrsqrt.pop %v1978
        %v2119 = vmul.f32 %v2118, %v1978
        %v2120 = vmul.f32 %v2119, %v2118
        %v2121 = vmul.f32 0.5, %v2120
        %v2122 = vsub.f32 1.5, %v2121
        %v2123 = vmul.f32 %v2118, %v2122
        %vm2124 = vweird.f32 %v1978
        %vm2125 = vweird.f32 %v2118
        %vm2126 = vmor %vm2124, %vm2125
        %v2127 = vsel %vm2126, %v2118, %v2123
        %v2128 = vrsqrt.pop %v1979
        %v2129 = vmul.f32 %v2128, %v1979
        %v2130 = vmul.f32 %v2129, %v2128
        %v2131 = vmul.f32 0.5, %v2130
        %v2132 = vsub.f32 1.5, %v2131
        %v2133 = vmul.f32 %v2128, %v2132
        %vm2134 = vweird.f32 %v1979
        %vm2135 = vweird.f32 %v2128
        %vm2136 = vmor %vm2134, %vm2135
        %v2137 = vsel %vm2136, %v2128, %v2133
        %v2138 = vrsqrt.pop %v1980
        %v2139 = vmul.f32 %v2138, %v1980
        %v2140 = vmul.f32 %v2139, %v2138
        %v2141 = vmul.f32 0.5, %v2140
        %v2142 = vsub.f32 1.5, %v2141
        %v2143 = vmul.f32 %v2138, %v2142
        %vm2144 = vweird.f32 %v1980
        %vm2145 = vweird.f32 %v2138
        %vm2146 = vmor %vm2144, %vm2145
        %v2147 = vsel %vm2146, %v2138, %v2143
        %v2148 = vrsqrt.pop %v1981
        %v2149 = vmul.f32 %v2148, %v1981
        %v2150 = vmul.f32 %v2149, %v2148
        %v2151 = vmul.f32 0.5, %v2150
        %v2152 = vsub.f32 1.5, %v2151
        %v2153 = vmul.f32 %v2148, %v2152
        %vm2154 = vweird.f32 %v1981
        %vm2155 = vweird.f32 %v2148
        %vm2156 = vmor %vm2154, %vm2155
        %v2157 = vsel %vm2156, %v2148, %v2153
        %v2158 = vrsqrt.pop %v1982
        %v2159 = vmul.f32 %v2158, %v1982
        %v2160 = vmul.f32 %v2159, %v2158
        %v2161 = vmul.f32 0.5, %v2160
        %v2162 = vsub.f32 1.5, %v2161
        %v2163 = vmul.f32 %v2158, %v2162
        %vm2164 = vweird.f32 %v1982
        %vm2165 = vweird.f32 %v2158
        %vm2166 = vmor %vm2164, %vm2165
        %v2167 = vsel %vm2166, %v2158, %v2163
        %v2168 = vrsqrt.pop %v1983
        %v2169 = vmul.f32 %v2168, %v1983
        %v2170 = vmul.f32 %v2169, %v2168
        %v2171 = vmul.f32 0.5, %v2170
        %v2172 = vsub.f32 1.5, %v2171
        %v2173 = vmul.f32 %v2168, %v2172
        %vm2174 = vweird.f32 %v1983
        %vm2175 = vweird.f32 %v2168
        %vm2176 = vmor %vm2174, %vm2175
        %v2177 = vsel %vm2176, %v2168, %v2173
        %v2178 = vrsqrt.pop %v1984
        %v2179 = vmul.f32 %v2178, %v1984
        %v2180 = vmul.f32 %v2179, %v2178
        %v2181 = vmul.f32 0.5, %v2180
        %v2182 = vsub.f32 1.5, %v2181
        %v2183 = vmul.f32 %v2178, %v2182
        %vm2184 = vweird.f32 %v1984
        %vm2185 = vweird.f32 %v2178
        %vm2186 = vmor %vm2184, %vm2185
        %v2187 = vsel %vm2186, %v2178, %v2183
        %v2188 = vrsqrt.pop %v1985
        %v2189 = vmul.f32 %v2188, %v1985
        %v2190 = vmul.f32 %v2189, %v2188
        %v2191 = vmul.f32 0.5, %v2190
        %v2192 = vsub.f32 1.5, %v2191
        %v2193 = vmul.f32 %v2188, %v2192
        %vm2194 = vweird.f32 %v1985
        %vm2195 = vweird.f32 %v2188
        %vm2196 = vmor %vm2194, %vm2195
        %v2197 = vsel %vm2196, %v2188, %v2193
        %v2198 = vrsqrt.pop %v1986
        %v2199 = vmul.f32 %v2198, %v1986
        %v2200 = vmul.f32 %v2199, %v2198
        %v2201 = vmul.f32 0.5, %v2200
        %v2202 = vsub.f32 1.5, %v2201
        %v2203 = vmul.f32 %v2198, %v2202
        %vm2204 = vweird.f32 %v1986
        %vm2205 = vweird.f32 %v2198
        %vm2206 = vmor %vm2204, %vm2205
        %v2207 = vsel %vm2206, %v2198, %v2203
        %v2208 = vrsqrt.pop %v1987
        %v2209 = vmul.f32 %v2208, %v1987
        %v2210 = vmul.f32 %v2209, %v2208
        %v2211 = vmul.f32 0.5, %v2210
        %v2212 = vsub.f32 1.5, %v2211
        %v2213 = vmul.f32 %v2208, %v2212
        %vm2214 = vweird.f32 %v1987
        %vm2215 = vweird.f32 %v2208
        %vm2216 = vmor %vm2214, %vm2215
        %v2217 = vsel %vm2216, %v2208, %v2213
        %v2218 = vrsqrt.pop %v1988
        %v2219 = vmul.f32 %v2218, %v1988
        %v2220 = vmul.f32 %v2219, %v2218
        %v2221 = vmul.f32 0.5, %v2220
        %v2222 = vsub.f32 1.5, %v2221
        %v2223 = vmul.f32 %v2218, %v2222
        %vm2224 = vweird.f32 %v1988
        %vm2225 = vweird.f32 %v2218
        %vm2226 = vmor %vm2224, %vm2225
        %v2227 = vsel %vm2226, %v2218, %v2223
        %v2228 = vrsqrt.pop %v1989
        %v2229 = vmul.f32 %v2228, %v1989
        %v2230 = vmul.f32 %v2229, %v2228
        %v2231 = vmul.f32 0.5, %v2230
        %v2232 = vsub.f32 1.5, %v2231
        %v2233 = vmul.f32 %v2228, %v2232
        %vm2234 = vweird.f32 %v1989
        %vm2235 = vweird.f32 %v2228
        %vm2236 = vmor %vm2234, %vm2235
        %v2237 = vsel %vm2236, %v2228, %v2233
        %v2238 = vrsqrt.pop %v1990
        %v2239 = vmul.f32 %v2238, %v1990
        %v2240 = vmul.f32 %v2239, %v2238
        %v2241 = vmul.f32 0.5, %v2240
        %v2242 = vsub.f32 1.5, %v2241
        %v2243 = vmul.f32 %v2238, %v2242
        %vm2244 = vweird.f32 %v1990
        %vm2245 = vweird.f32 %v2238
        %vm2246 = vmor %vm2244, %vm2245
        %v2247 = vsel %vm2246, %v2238, %v2243
        %v2248 = vrsqrt.pop %v1991
        %v2249 = vmul.f32 %v2248, %v1991
        %v2250 = vmul.f32 %v2249, %v2248
        %v2251 = vmul.f32 0.5, %v2250
        %v2252 = vsub.f32 1.5, %v2251
        %v2253 = vmul.f32 %v2248, %v2252
        %vm2254 = vweird.f32 %v1991
        %vm2255 = vweird.f32 %v2248
        %vm2256 = vmor %vm2254, %vm2255
        %v2257 = vsel %vm2256, %v2248, %v2253
        %v2258 = vrsqrt.pop %v1992
        %v2259 = vmul.f32 %v2258, %v1992
        %v2260 = vmul.f32 %v2259, %v2258
        %v2261 = vmul.f32 0.5, %v2260
        %v2262 = vsub.f32 1.5, %v2261
        %v2263 = vmul.f32 %v2258, %v2262
        %vm2264 = vweird.f32 %v1992
        %vm2265 = vweird.f32 %v2258
        %vm2266 = vmor %vm2264, %vm2265
        %v2267 = vsel %vm2266, %v2258, %v2263
        %v2268 = vrsqrt.pop %v1993
        %v2269 = vmul.f32 %v2268, %v1993
        %v2270 = vmul.f32 %v2269, %v2268
        %v2271 = vmul.f32 0.5, %v2270
        %v2272 = vsub.f32 1.5, %v2271
        %v2273 = vmul.f32 %v2268, %v2272
        %vm2274 = vweird.f32 %v1993
        %vm2275 = vweird.f32 %v2268
        %vm2276 = vmor %vm2274, %vm2275
        %v2277 = vsel %vm2276, %v2268, %v2273
        %v2278 = vrsqrt.pop %v1994
        %v2279 = vmul.f32 %v2278, %v1994
        %v2280 = vmul.f32 %v2279, %v2278
        %v2281 = vmul.f32 0.5, %v2280
        %v2282 = vsub.f32 1.5, %v2281
        %v2283 = vmul.f32 %v2278, %v2282
        %vm2284 = vweird.f32 %v1994
        %vm2285 = vweird.f32 %v2278
        %vm2286 = vmor %vm2284, %vm2285
        %v2287 = vsel %vm2286, %v2278, %v2283
        %v2288 = vrsqrt.pop %v1995
        %v2289 = vmul.f32 %v2288, %v1995
        %v2290 = vmul.f32 %v2289, %v2288
        %v2291 = vmul.f32 0.5, %v2290
        %v2292 = vsub.f32 1.5, %v2291
        %v2293 = vmul.f32 %v2288, %v2292
        %vm2294 = vweird.f32 %v1995
        %vm2295 = vweird.f32 %v2288
        %vm2296 = vmor %vm2294, %vm2295
        %v2297 = vsel %vm2296, %v2288, %v2293
        %v2298 = vrsqrt.pop %v1996
        %v2299 = vmul.f32 %v2298, %v1996
        %v2300 = vmul.f32 %v2299, %v2298
        %v2301 = vmul.f32 0.5, %v2300
        %v2302 = vsub.f32 1.5, %v2301
        %v2303 = vmul.f32 %v2298, %v2302
        %vm2304 = vweird.f32 %v1996
        %vm2305 = vweird.f32 %v2298
        %vm2306 = vmor %vm2304, %vm2305
        %v2307 = vsel %vm2306, %v2298, %v2303
        %v2308 = vrsqrt.pop %v1997
        %v2309 = vmul.f32 %v2308, %v1997
        %v2310 = vmul.f32 %v2309, %v2308
        %v2311 = vmul.f32 0.5, %v2310
        %v2312 = vsub.f32 1.5, %v2311
        %v2313 = vmul.f32 %v2308, %v2312
        %vm2314 = vweird.f32 %v1997
        %vm2315 = vweird.f32 %v2308
        %vm2316 = vmor %vm2314, %vm2315
        %v2317 = vsel %vm2316, %v2308, %v2313
        %s2318 = smul.u32 %s29, 32
        %s2319 = smul.addr %s2318, 4
        %s2320 = scalar_lea.vmem [#allocation2], %s2319
        %v2321 = vld [vmem:[%s2320] sm:$0xf]
        %v2322 = vld [vmem:[%s2320 + $0x4] sm:$0xf]
        %v2323 = vld [vmem:[%s2320 + $0x8] sm:$0xf]
        %v2324 = vld [vmem:[%s2320 + $0xc] sm:$0xf]
        %v2325 = vld [vmem:[%s2320 + $0x10] sm:$0xf]
        %v2326 = vld [vmem:[%s2320 + $0x14] sm:$0xf]
        %v2327 = vld [vmem:[%s2320 + $0x18] sm:$0xf]
        %v2328 = vld [vmem:[%s2320 + $0x1c] sm:$0xf]
        %v2329 = vld [vmem:[%s2320 + $0x20] sm:$0xf]
        %v2330 = vld [vmem:[%s2320 + $0x24] sm:$0xf]
        %v2331 = vld [vmem:[%s2320 + $0x28] sm:$0xf]
        %v2332 = vld [vmem:[%s2320 + $0x2c] sm:$0xf]
        %v2333 = vld [vmem:[%s2320 + $0x30] sm:$0xf]
        %v2334 = vld [vmem:[%s2320 + $0x34] sm:$0xf]
        %v2335 = vld [vmem:[%s2320 + $0x38] sm:$0xf]
        %v2336 = vld [vmem:[%s2320 + $0x3c] sm:$0xf]
        %v2337 = vld [vmem:[%s2320 + $0x40] sm:$0xf]
        %v2338 = vld [vmem:[%s2320 + $0x44] sm:$0xf]
        %v2339 = vld [vmem:[%s2320 + $0x48] sm:$0xf]
        %v2340 = vld [vmem:[%s2320 + $0x4c] sm:$0xf]
        %v2341 = vld [vmem:[%s2320 + $0x50] sm:$0xf]
        %v2342 = vld [vmem:[%s2320 + $0x54] sm:$0xf]
        %v2343 = vld [vmem:[%s2320 + $0x58] sm:$0xf]
        %v2344 = vld [vmem:[%s2320 + $0x5c] sm:$0xf]
        %v2345 = vld [vmem:[%s2320 + $0x60] sm:$0xf]
        %v2346 = vld [vmem:[%s2320 + $0x64] sm:$0xf]
        %v2347 = vld [vmem:[%s2320 + $0x68] sm:$0xf]
        %v2348 = vld [vmem:[%s2320 + $0x6c] sm:$0xf]
        %v2349 = vld [vmem:[%s2320 + $0x70] sm:$0xf]
        %v2350 = vld [vmem:[%s2320 + $0x74] sm:$0xf]
        %v2351 = vld [vmem:[%s2320 + $0x78] sm:$0xf]
        %v2352 = vld [vmem:[%s2320 + $0x7c] sm:$0xf]
        %v2353 = vunpack.c.l.bf16 %v2321
        %v2354 = vunpack.c.l.bf16 %v2322
        %v2355 = vunpack.c.l.bf16 %v2323
        %v2356 = vunpack.c.l.bf16 %v2324
        %v2357 = vunpack.c.l.bf16 %v2325
        %v2358 = vunpack.c.l.bf16 %v2326
        %v2359 = vunpack.c.l.bf16 %v2327
        %v2360 = vunpack.c.l.bf16 %v2328
        %v2361 = vunpack.c.l.bf16 %v2329
        %v2362 = vunpack.c.l.bf16 %v2330
        %v2363 = vunpack.c.l.bf16 %v2331
        %v2364 = vunpack.c.l.bf16 %v2332
        %v2365 = vunpack.c.l.bf16 %v2333
        %v2366 = vunpack.c.l.bf16 %v2334
        %v2367 = vunpack.c.l.bf16 %v2335
        %v2368 = vunpack.c.l.bf16 %v2336
        %v2369 = vunpack.c.l.bf16 %v2337
        %v2370 = vunpack.c.l.bf16 %v2338
        %v2371 = vunpack.c.l.bf16 %v2339
        %v2372 = vunpack.c.l.bf16 %v2340
        %v2373 = vunpack.c.l.bf16 %v2341
        %v2374 = vunpack.c.l.bf16 %v2342
        %v2375 = vunpack.c.l.bf16 %v2343
        %v2376 = vunpack.c.l.bf16 %v2344
        %v2377 = vunpack.c.l.bf16 %v2345
        %v2378 = vunpack.c.l.bf16 %v2346
        %v2379 = vunpack.c.l.bf16 %v2347
        %v2380 = vunpack.c.l.bf16 %v2348
        %v2381 = vunpack.c.l.bf16 %v2349
        %v2382 = vunpack.c.l.bf16 %v2350
        %v2383 = vunpack.c.l.bf16 %v2351
        %v2384 = vunpack.c.l.bf16 %v2352
        %2386 = vset.pattern.permute.xlu0 0
        %2387 = vperm.xlu0 %2386, %v1774
        %v2388 = vpop.permute.xlu0 %2387
        %2391 = vset.pattern.permute.xlu0 0
        %2392 = vperm.xlu0 %2391, %v1775
        %v2393 = vpop.permute.xlu0 %2392
        %2396 = vset.pattern.permute.xlu0 0
        %2397 = vperm.xlu0 %2396, %v1776
        %v2398 = vpop.permute.xlu0 %2397
        %2401 = vset.pattern.permute.xlu0 0
        %2402 = vperm.xlu0 %2401, %v1777
        %v2403 = vpop.permute.xlu0 %2402
        %2406 = vset.pattern.permute.xlu0 0
        %2407 = vperm.xlu0 %2406, %v1778
        %v2408 = vpop.permute.xlu0 %2407
        %2411 = vset.pattern.permute.xlu0 0
        %2412 = vperm.xlu0 %2411, %v1779
        %v2413 = vpop.permute.xlu0 %2412
        %2416 = vset.pattern.permute.xlu0 0
        %2417 = vperm.xlu0 %2416, %v1780
        %v2418 = vpop.permute.xlu0 %2417
        %2421 = vset.pattern.permute.xlu0 0
        %2422 = vperm.xlu0 %2421, %v1781
        %v2423 = vpop.permute.xlu0 %2422
        %2426 = vset.pattern.permute.xlu0 0
        %2427 = vperm.xlu0 %2426, %v1782
        %v2428 = vpop.permute.xlu0 %2427
        %2431 = vset.pattern.permute.xlu0 0
        %2432 = vperm.xlu0 %2431, %v1783
        %v2433 = vpop.permute.xlu0 %2432
        %2436 = vset.pattern.permute.xlu0 0
        %2437 = vperm.xlu0 %2436, %v1784
        %v2438 = vpop.permute.xlu0 %2437
        %2441 = vset.pattern.permute.xlu0 0
        %2442 = vperm.xlu0 %2441, %v1785
        %v2443 = vpop.permute.xlu0 %2442
        %2446 = vset.pattern.permute.xlu0 0
        %2447 = vperm.xlu0 %2446, %v1786
        %v2448 = vpop.permute.xlu0 %2447
        %2451 = vset.pattern.permute.xlu0 0
        %2452 = vperm.xlu0 %2451, %v1787
        %v2453 = vpop.permute.xlu0 %2452
        %2456 = vset.pattern.permute.xlu0 0
        %2457 = vperm.xlu0 %2456, %v1788
        %v2458 = vpop.permute.xlu0 %2457
        %2461 = vset.pattern.permute.xlu0 0
        %2462 = vperm.xlu0 %2461, %v1789
        %v2463 = vpop.permute.xlu0 %2462
        %2466 = vset.pattern.permute.xlu0 0
        %2467 = vperm.xlu0 %2466, %v1790
        %v2468 = vpop.permute.xlu0 %2467
        %2471 = vset.pattern.permute.xlu0 0
        %2472 = vperm.xlu0 %2471, %v1791
        %v2473 = vpop.permute.xlu0 %2472
        %2476 = vset.pattern.permute.xlu0 0
        %2477 = vperm.xlu0 %2476, %v1792
        %v2478 = vpop.permute.xlu0 %2477
        %2481 = vset.pattern.permute.xlu0 0
        %2482 = vperm.xlu0 %2481, %v1793
        %v2483 = vpop.permute.xlu0 %2482
        %2486 = vset.pattern.permute.xlu0 0
        %2487 = vperm.xlu0 %2486, %v1794
        %v2488 = vpop.permute.xlu0 %2487
        %2491 = vset.pattern.permute.xlu0 0
        %2492 = vperm.xlu0 %2491, %v1795
        %v2493 = vpop.permute.xlu0 %2492
        %2496 = vset.pattern.permute.xlu0 0
        %2497 = vperm.xlu0 %2496, %v1796
        %v2498 = vpop.permute.xlu0 %2497
        %2501 = vset.pattern.permute.xlu0 0
        %2502 = vperm.xlu0 %2501, %v1797
        %v2503 = vpop.permute.xlu0 %2502
        %2506 = vset.pattern.permute.xlu0 0
        %2507 = vperm.xlu0 %2506, %v1798
        %v2508 = vpop.permute.xlu0 %2507
        %2511 = vset.pattern.permute.xlu0 0
        %2512 = vperm.xlu0 %2511, %v1799
        %v2513 = vpop.permute.xlu0 %2512
        %2516 = vset.pattern.permute.xlu0 0
        %2517 = vperm.xlu0 %2516, %v1800
        %v2518 = vpop.permute.xlu0 %2517
        %2521 = vset.pattern.permute.xlu0 0
        %2522 = vperm.xlu0 %2521, %v1801
        %v2523 = vpop.permute.xlu0 %2522
        %2526 = vset.pattern.permute.xlu0 0
        %2527 = vperm.xlu0 %2526, %v1802
        %v2528 = vpop.permute.xlu0 %2527
        %2531 = vset.pattern.permute.xlu0 0
        %2532 = vperm.xlu0 %2531, %v1803
        %v2533 = vpop.permute.xlu0 %2532
        %2536 = vset.pattern.permute.xlu0 0
        %2537 = vperm.xlu0 %2536, %v1804
        %v2538 = vpop.permute.xlu0 %2537
        %2541 = vset.pattern.permute.xlu0 0
        %2542 = vperm.xlu0 %2541, %v1805
        %v2543 = vpop.permute.xlu0 %2542
        %v2545 = vsub.f32 %v2353, %v2388
        %v2546 = vsub.f32 %v2354, %v2393
        %v2547 = vsub.f32 %v2355, %v2398
        %v2548 = vsub.f32 %v2356, %v2403
        %v2549 = vsub.f32 %v2357, %v2408
        %v2550 = vsub.f32 %v2358, %v2413
        %v2551 = vsub.f32 %v2359, %v2418
        %v2552 = vsub.f32 %v2360, %v2423
        %v2553 = vsub.f32 %v2361, %v2428
        %v2554 = vsub.f32 %v2362, %v2433
        %v2555 = vsub.f32 %v2363, %v2438
        %v2556 = vsub.f32 %v2364, %v2443
        %v2557 = vsub.f32 %v2365, %v2448
        %v2558 = vsub.f32 %v2366, %v2453
        %v2559 = vsub.f32 %v2367, %v2458
        %v2560 = vsub.f32 %v2368, %v2463
        %v2561 = vsub.f32 %v2369, %v2468
        %v2562 = vsub.f32 %v2370, %v2473
        %v2563 = vsub.f32 %v2371, %v2478
        %v2564 = vsub.f32 %v2372, %v2483
        %v2565 = vsub.f32 %v2373, %v2488
        %v2566 = vsub.f32 %v2374, %v2493
        %v2567 = vsub.f32 %v2375, %v2498
        %v2568 = vsub.f32 %v2376, %v2503
        %v2569 = vsub.f32 %v2377, %v2508
        %v2570 = vsub.f32 %v2378, %v2513
        %v2571 = vsub.f32 %v2379, %v2518
        %v2572 = vsub.f32 %v2380, %v2523
        %v2573 = vsub.f32 %v2381, %v2528
        %v2574 = vsub.f32 %v2382, %v2533
        %v2575 = vsub.f32 %v2383, %v2538
        %v2576 = vsub.f32 %v2384, %v2543
        %2578 = vset.pattern.permute.xlu0 0
        %2579 = vperm.xlu0 %2578, %v2007
        %v2580 = vpop.permute.xlu0 %2579
        %2583 = vset.pattern.permute.xlu0 0
        %2584 = vperm.xlu0 %2583, %v2017
        %v2585 = vpop.permute.xlu0 %2584
        %2588 = vset.pattern.permute.xlu0 0
        %2589 = vperm.xlu0 %2588, %v2027
        %v2590 = vpop.permute.xlu0 %2589
        %2593 = vset.pattern.permute.xlu0 0
        %2594 = vperm.xlu0 %2593, %v2037
        %v2595 = vpop.permute.xlu0 %2594
        %2598 = vset.pattern.permute.xlu0 0
        %2599 = vperm.xlu0 %2598, %v2047
        %v2600 = vpop.permute.xlu0 %2599
        %2603 = vset.pattern.permute.xlu0 0
        %2604 = vperm.xlu0 %2603, %v2057
        %v2605 = vpop.permute.xlu0 %2604
        %2608 = vset.pattern.permute.xlu0 0
        %2609 = vperm.xlu0 %2608, %v2067
        %v2610 = vpop.permute.xlu0 %2609
        %2613 = vset.pattern.permute.xlu0 0
        %2614 = vperm.xlu0 %2613, %v2077
        %v2615 = vpop.permute.xlu0 %2614
        %2618 = vset.pattern.permute.xlu0 0
        %2619 = vperm.xlu0 %2618, %v2087
        %v2620 = vpop.permute.xlu0 %2619
        %2623 = vset.pattern.permute.xlu0 0
        %2624 = vperm.xlu0 %2623, %v2097
        %v2625 = vpop.permute.xlu0 %2624
        %2628 = vset.pattern.permute.xlu0 0
        %2629 = vperm.xlu0 %2628, %v2107
        %v2630 = vpop.permute.xlu0 %2629
        %2633 = vset.pattern.permute.xlu0 0
        %2634 = vperm.xlu0 %2633, %v2117
        %v2635 = vpop.permute.xlu0 %2634
        %2638 = vset.pattern.permute.xlu0 0
        %2639 = vperm.xlu0 %2638, %v2127
        %v2640 = vpop.permute.xlu0 %2639
        %2643 = vset.pattern.permute.xlu0 0
        %2644 = vperm.xlu0 %2643, %v2137
        %v2645 = vpop.permute.xlu0 %2644
        %2648 = vset.pattern.permute.xlu0 0
        %2649 = vperm.xlu0 %2648, %v2147
        %v2650 = vpop.permute.xlu0 %2649
        %2653 = vset.pattern.permute.xlu0 0
        %2654 = vperm.xlu0 %2653, %v2157
        %v2655 = vpop.permute.xlu0 %2654
        %2658 = vset.pattern.permute.xlu0 0
        %2659 = vperm.xlu0 %2658, %v2167
        %v2660 = vpop.permute.xlu0 %2659
        %2663 = vset.pattern.permute.xlu0 0
        %2664 = vperm.xlu0 %2663, %v2177
        %v2665 = vpop.permute.xlu0 %2664
        %2668 = vset.pattern.permute.xlu0 0
        %2669 = vperm.xlu0 %2668, %v2187
        %v2670 = vpop.permute.xlu0 %2669
        %2673 = vset.pattern.permute.xlu0 0
        %2674 = vperm.xlu0 %2673, %v2197
        %v2675 = vpop.permute.xlu0 %2674
        %2678 = vset.pattern.permute.xlu0 0
        %2679 = vperm.xlu0 %2678, %v2207
        %v2680 = vpop.permute.xlu0 %2679
        %2683 = vset.pattern.permute.xlu0 0
        %2684 = vperm.xlu0 %2683, %v2217
        %v2685 = vpop.permute.xlu0 %2684
        %2688 = vset.pattern.permute.xlu0 0
        %2689 = vperm.xlu0 %2688, %v2227
        %v2690 = vpop.permute.xlu0 %2689
        %2693 = vset.pattern.permute.xlu0 0
        %2694 = vperm.xlu0 %2693, %v2237
        %v2695 = vpop.permute.xlu0 %2694
        %2698 = vset.pattern.permute.xlu0 0
        %2699 = vperm.xlu0 %2698, %v2247
        %v2700 = vpop.permute.xlu0 %2699
        %2703 = vset.pattern.permute.xlu0 0
        %2704 = vperm.xlu0 %2703, %v2257
        %v2705 = vpop.permute.xlu0 %2704
        %2708 = vset.pattern.permute.xlu0 0
        %2709 = vperm.xlu0 %2708, %v2267
        %v2710 = vpop.permute.xlu0 %2709
        %2713 = vset.pattern.permute.xlu0 0
        %2714 = vperm.xlu0 %2713, %v2277
        %v2715 = vpop.permute.xlu0 %2714
        %2718 = vset.pattern.permute.xlu0 0
        %2719 = vperm.xlu0 %2718, %v2287
        %v2720 = vpop.permute.xlu0 %2719
        %2723 = vset.pattern.permute.xlu0 0
        %2724 = vperm.xlu0 %2723, %v2297
        %v2725 = vpop.permute.xlu0 %2724
        %2728 = vset.pattern.permute.xlu0 0
        %2729 = vperm.xlu0 %2728, %v2307
        %v2730 = vpop.permute.xlu0 %2729
        %2733 = vset.pattern.permute.xlu0 0
        %2734 = vperm.xlu0 %2733, %v2317
        %v2735 = vpop.permute.xlu0 %2734
        %v2737 = vmul.f32 %v2545, %v2580
        %v2738 = vmul.f32 %v2546, %v2585
        %v2739 = vmul.f32 %v2547, %v2590
        %v2740 = vmul.f32 %v2548, %v2595
        %v2741 = vmul.f32 %v2549, %v2600
        %v2742 = vmul.f32 %v2550, %v2605
        %v2743 = vmul.f32 %v2551, %v2610
        %v2744 = vmul.f32 %v2552, %v2615
        %v2745 = vmul.f32 %v2553, %v2620
        %v2746 = vmul.f32 %v2554, %v2625
        %v2747 = vmul.f32 %v2555, %v2630
        %v2748 = vmul.f32 %v2556, %v2635
        %v2749 = vmul.f32 %v2557, %v2640
        %v2750 = vmul.f32 %v2558, %v2645
        %v2751 = vmul.f32 %v2559, %v2650
        %v2752 = vmul.f32 %v2560, %v2655
        %v2753 = vmul.f32 %v2561, %v2660
        %v2754 = vmul.f32 %v2562, %v2665
        %v2755 = vmul.f32 %v2563, %v2670
        %v2756 = vmul.f32 %v2564, %v2675
        %v2757 = vmul.f32 %v2565, %v2680
        %v2758 = vmul.f32 %v2566, %v2685
        %v2759 = vmul.f32 %v2567, %v2690
        %v2760 = vmul.f32 %v2568, %v2695
        %v2761 = vmul.f32 %v2569, %v2700
        %v2762 = vmul.f32 %v2570, %v2705
        %v2763 = vmul.f32 %v2571, %v2710
        %v2764 = vmul.f32 %v2572, %v2715
        %v2765 = vmul.f32 %v2573, %v2720
        %v2766 = vmul.f32 %v2574, %v2725
        %v2767 = vmul.f32 %v2575, %v2730
        %v2768 = vmul.f32 %v2576, %v2735
        %v2769 = vld [vmem:[%s5] sm:$0xff]
        %v2770 = vld [vmem:[%s5 + $0x8] sm:$0xff]
        %v2771 = vld [vmem:[%s5 + $0x10] sm:$0xff]
        %v2772 = vld [vmem:[%s5 + $0x18] sm:$0xff]
        %v2773 = vld [vmem:[%s5 + $0x20] sm:$0xff]
        %v2774 = vld [vmem:[%s5 + $0x28] sm:$0xff]
        %v2775 = vld [vmem:[%s5 + $0x30] sm:$0xff]
        %v2776 = vld [vmem:[%s5 + $0x38] sm:$0xff]
        %v2777 = vld [vmem:[%s5 + $0x40] sm:$0xff]
        %v2778 = vld [vmem:[%s5 + $0x48] sm:$0xff]
        %v2779 = vld [vmem:[%s5 + $0x50] sm:$0xff]
        %v2780 = vld [vmem:[%s5 + $0x58] sm:$0xff]
        %v2781 = vld [vmem:[%s5 + $0x60] sm:$0xff]
        %v2782 = vld [vmem:[%s5 + $0x68] sm:$0xff]
        %v2783 = vld [vmem:[%s5 + $0x70] sm:$0xff]
        %v2784 = vld [vmem:[%s5 + $0x78] sm:$0xff]
        %v2785 = vld [vmem:[%s5 + $0x80] sm:$0xff]
        %v2786 = vld [vmem:[%s5 + $0x88] sm:$0xff]
        %v2787 = vld [vmem:[%s5 + $0x90] sm:$0xff]
        %v2788 = vld [vmem:[%s5 + $0x98] sm:$0xff]
        %v2789 = vld [vmem:[%s5 + $0xa0] sm:$0xff]
        %v2790 = vld [vmem:[%s5 + $0xa8] sm:$0xff]
        %v2791 = vld [vmem:[%s5 + $0xb0] sm:$0xff]
        %v2792 = vld [vmem:[%s5 + $0xb8] sm:$0xff]
        %v2793 = vld [vmem:[%s5 + $0xc0] sm:$0xff]
        %v2794 = vld [vmem:[%s5 + $0xc8] sm:$0xff]
        %v2795 = vld [vmem:[%s5 + $0xd0] sm:$0xff]
        %v2796 = vld [vmem:[%s5 + $0xd8] sm:$0xff]
        %v2797 = vld [vmem:[%s5 + $0xe0] sm:$0xff]
        %v2798 = vld [vmem:[%s5 + $0xe8] sm:$0xff]
        %v2799 = vld [vmem:[%s5 + $0xf0] sm:$0xff]
        %v2800 = vld [vmem:[%s5 + $0xf8] sm:$0xff]
        %v2801 = vpack.c.bf16 %v2738, %v2737
        %v2802 = vpack.c.bf16 %v2740, %v2739
        %v2803 = vpack.c.bf16 %v2742, %v2741
        %v2804 = vpack.c.bf16 %v2744, %v2743
        %v2805 = vpack.c.bf16 %v2746, %v2745
        %v2806 = vpack.c.bf16 %v2748, %v2747
        %v2807 = vpack.c.bf16 %v2750, %v2749
        %v2808 = vpack.c.bf16 %v2752, %v2751
        %v2809 = vpack.c.bf16 %v2754, %v2753
        %v2810 = vpack.c.bf16 %v2756, %v2755
        %v2811 = vpack.c.bf16 %v2758, %v2757
        %v2812 = vpack.c.bf16 %v2760, %v2759
        %v2813 = vpack.c.bf16 %v2762, %v2761
        %v2814 = vpack.c.bf16 %v2764, %v2763
        %v2815 = vpack.c.bf16 %v2766, %v2765
        %v2816 = vpack.c.bf16 %v2768, %v2767
        %v2817 = vld [vmem:[%s6] sm:$0xff]
        %v2818 = vld [vmem:[%s6 + $0x8] sm:$0xff]
        %v2819 = vld [vmem:[%s6 + $0x10] sm:$0xff]
        %v2820 = vld [vmem:[%s6 + $0x18] sm:$0xff]
        %v2821 = vld [vmem:[%s6 + $0x20] sm:$0xff]
        %v2822 = vld [vmem:[%s6 + $0x28] sm:$0xff]
        %v2823 = vld [vmem:[%s6 + $0x30] sm:$0xff]
        %v2824 = vld [vmem:[%s6 + $0x38] sm:$0xff]
        %v2825 = vld [vmem:[%s6 + $0x40] sm:$0xff]
        %v2826 = vld [vmem:[%s6 + $0x48] sm:$0xff]
        %v2827 = vld [vmem:[%s6 + $0x50] sm:$0xff]
        %v2828 = vld [vmem:[%s6 + $0x58] sm:$0xff]
        %v2829 = vld [vmem:[%s6 + $0x60] sm:$0xff]
        %v2830 = vld [vmem:[%s6 + $0x68] sm:$0xff]
        %v2831 = vld [vmem:[%s6 + $0x70] sm:$0xff]
        %v2832 = vld [vmem:[%s6 + $0x78] sm:$0xff]
        %v2833 = vld [vmem:[%s6 + $0x80] sm:$0xff]
        %v2834 = vld [vmem:[%s6 + $0x88] sm:$0xff]
        %v2835 = vld [vmem:[%s6 + $0x90] sm:$0xff]
        %v2836 = vld [vmem:[%s6 + $0x98] sm:$0xff]
        %v2837 = vld [vmem:[%s6 + $0xa0] sm:$0xff]
        %v2838 = vld [vmem:[%s6 + $0xa8] sm:$0xff]
        %v2839 = vld [vmem:[%s6 + $0xb0] sm:$0xff]
        %v2840 = vld [vmem:[%s6 + $0xb8] sm:$0xff]
        %v2841 = vld [vmem:[%s6 + $0xc0] sm:$0xff]
        %v2842 = vld [vmem:[%s6 + $0xc8] sm:$0xff]
        %v2843 = vld [vmem:[%s6 + $0xd0] sm:$0xff]
        %v2844 = vld [vmem:[%s6 + $0xd8] sm:$0xff]
        %v2845 = vld [vmem:[%s6 + $0xe0] sm:$0xff]
        %v2846 = vld [vmem:[%s6 + $0xe8] sm:$0xff]
        %v2847 = vld [vmem:[%s6 + $0xf0] sm:$0xff]
        %v2848 = vld [vmem:[%s6 + $0xf8] sm:$0xff]
        %2850 = vset.pattern.permute.xlu0 0
        %2851 = vperm.xlu0 %2850, %v2817
        %v2852 = vpop.permute.xlu0 %2851
        %2855 = vset.pattern.permute.xlu0 0
        %2856 = vperm.xlu0 %2855, %v2818
        %v2857 = vpop.permute.xlu0 %2856
        %2860 = vset.pattern.permute.xlu0 0
        %2861 = vperm.xlu0 %2860, %v2819
        %v2862 = vpop.permute.xlu0 %2861
        %2865 = vset.pattern.permute.xlu0 0
        %2866 = vperm.xlu0 %2865, %v2820
        %v2867 = vpop.permute.xlu0 %2866
        %2870 = vset.pattern.permute.xlu0 0
        %2871 = vperm.xlu0 %2870, %v2821
        %v2872 = vpop.permute.xlu0 %2871
        %2875 = vset.pattern.permute.xlu0 0
        %2876 = vperm.xlu0 %2875, %v2822
        %v2877 = vpop.permute.xlu0 %2876
        %2880 = vset.pattern.permute.xlu0 0
        %2881 = vperm.xlu0 %2880, %v2823
        %v2882 = vpop.permute.xlu0 %2881
        %2885 = vset.pattern.permute.xlu0 0
        %2886 = vperm.xlu0 %2885, %v2824
        %v2887 = vpop.permute.xlu0 %2886
        %2890 = vset.pattern.permute.xlu0 0
        %2891 = vperm.xlu0 %2890, %v2825
        %v2892 = vpop.permute.xlu0 %2891
        %2895 = vset.pattern.permute.xlu0 0
        %2896 = vperm.xlu0 %2895, %v2826
        %v2897 = vpop.permute.xlu0 %2896
        %2900 = vset.pattern.permute.xlu0 0
        %2901 = vperm.xlu0 %2900, %v2827
        %v2902 = vpop.permute.xlu0 %2901
        %2905 = vset.pattern.permute.xlu0 0
        %2906 = vperm.xlu0 %2905, %v2828
        %v2907 = vpop.permute.xlu0 %2906
        %2910 = vset.pattern.permute.xlu0 0
        %2911 = vperm.xlu0 %2910, %v2829
        %v2912 = vpop.permute.xlu0 %2911
        %2915 = vset.pattern.permute.xlu0 0
        %2916 = vperm.xlu0 %2915, %v2830
        %v2917 = vpop.permute.xlu0 %2916
        %2920 = vset.pattern.permute.xlu0 0
        %2921 = vperm.xlu0 %2920, %v2831
        %v2922 = vpop.permute.xlu0 %2921
        %2925 = vset.pattern.permute.xlu0 0
        %2926 = vperm.xlu0 %2925, %v2832
        %v2927 = vpop.permute.xlu0 %2926
        %2930 = vset.pattern.permute.xlu0 0
        %2931 = vperm.xlu0 %2930, %v2833
        %v2932 = vpop.permute.xlu0 %2931
        %2935 = vset.pattern.permute.xlu0 0
        %2936 = vperm.xlu0 %2935, %v2834
        %v2937 = vpop.permute.xlu0 %2936
        %2940 = vset.pattern.permute.xlu0 0
        %2941 = vperm.xlu0 %2940, %v2835
        %v2942 = vpop.permute.xlu0 %2941
        %2945 = vset.pattern.permute.xlu0 0
        %2946 = vperm.xlu0 %2945, %v2836
        %v2947 = vpop.permute.xlu0 %2946
        %2950 = vset.pattern.permute.xlu0 0
        %2951 = vperm.xlu0 %2950, %v2837
        %v2952 = vpop.permute.xlu0 %2951
        %2955 = vset.pattern.permute.xlu0 0
        %2956 = vperm.xlu0 %2955, %v2838
        %v2957 = vpop.permute.xlu0 %2956
        %2960 = vset.pattern.permute.xlu0 0
        %2961 = vperm.xlu0 %2960, %v2839
        %v2962 = vpop.permute.xlu0 %2961
        %2965 = vset.pattern.permute.xlu0 0
        %2966 = vperm.xlu0 %2965, %v2840
        %v2967 = vpop.permute.xlu0 %2966
        %2970 = vset.pattern.permute.xlu0 0
        %2971 = vperm.xlu0 %2970, %v2841
        %v2972 = vpop.permute.xlu0 %2971
        %2975 = vset.pattern.permute.xlu0 0
        %2976 = vperm.xlu0 %2975, %v2842
        %v2977 = vpop.permute.xlu0 %2976
        %2980 = vset.pattern.permute.xlu0 0
        %2981 = vperm.xlu0 %2980, %v2843
        %v2982 = vpop.permute.xlu0 %2981
        %2985 = vset.pattern.permute.xlu0 0
        %2986 = vperm.xlu0 %2985, %v2844
        %v2987 = vpop.permute.xlu0 %2986
        %2990 = vset.pattern.permute.xlu0 0
        %2991 = vperm.xlu0 %2990, %v2845
        %v2992 = vpop.permute.xlu0 %2991
        %2995 = vset.pattern.permute.xlu0 0
        %2996 = vperm.xlu0 %2995, %v2846
        %v2997 = vpop.permute.xlu0 %2996
        %3000 = vset.pattern.permute.xlu0 0
        %3001 = vperm.xlu0 %3000, %v2847
        %v3002 = vpop.permute.xlu0 %3001
        %3005 = vset.pattern.permute.xlu0 0
        %3006 = vperm.xlu0 %3005, %v2848
        %v3007 = vpop.permute.xlu0 %3006
        %v3041 = vunpack.c.l.b16 %v2769
        %v3042 = vunpack.c.h.b16 %v2769
        %v3043 = vunpack.c.l.b16 %v2770
        %v3044 = vunpack.c.h.b16 %v2770
        %v3045 = vunpack.c.l.b16 %v2771
        %v3046 = vunpack.c.h.b16 %v2771
        %v3047 = vunpack.c.l.b16 %v2772
        %v3048 = vunpack.c.h.b16 %v2772
        %v3049 = vunpack.c.l.b16 %v2773
        %v3050 = vunpack.c.h.b16 %v2773
        %v3051 = vunpack.c.l.b16 %v2774
        %v3052 = vunpack.c.h.b16 %v2774
        %v3053 = vunpack.c.l.b16 %v2775
        %v3054 = vunpack.c.h.b16 %v2775
        %v3055 = vunpack.c.l.b16 %v2776
        %v3056 = vunpack.c.h.b16 %v2776
        %v3057 = vunpack.c.l.b16 %v2777
        %v3058 = vunpack.c.h.b16 %v2777
        %v3059 = vunpack.c.l.b16 %v2778
        %v3060 = vunpack.c.h.b16 %v2778
        %v3061 = vunpack.c.l.b16 %v2779
        %v3062 = vunpack.c.h.b16 %v2779
        %v3063 = vunpack.c.l.b16 %v2780
        %v3064 = vunpack.c.h.b16 %v2780
        %v3065 = vunpack.c.l.b16 %v2781
        %v3066 = vunpack.c.h.b16 %v2781
        %v3067 = vunpack.c.l.b16 %v2782
        %v3068 = vunpack.c.h.b16 %v2782
        %v3069 = vunpack.c.l.b16 %v2783
        %v3070 = vunpack.c.h.b16 %v2783
        %v3071 = vunpack.c.l.b16 %v2784
        %v3072 = vunpack.c.h.b16 %v2784
        %v3073 = vunpack.c.l.b16 %v2785
        %v3074 = vunpack.c.h.b16 %v2785
        %v3075 = vunpack.c.l.b16 %v2786
        %v3076 = vunpack.c.h.b16 %v2786
        %v3077 = vunpack.c.l.b16 %v2787
        %v3078 = vunpack.c.h.b16 %v2787
        %v3079 = vunpack.c.l.b16 %v2788
        %v3080 = vunpack.c.h.b16 %v2788
        %v3081 = vunpack.c.l.b16 %v2789
        %v3082 = vunpack.c.h.b16 %v2789
        %v3083 = vunpack.c.l.b16 %v2790
        %v3084 = vunpack.c.h.b16 %v2790
        %v3085 = vunpack.c.l.b16 %v2791
        %v3086 = vunpack.c.h.b16 %v2791
        %v3087 = vunpack.c.l.b16 %v2792
        %v3088 = vunpack.c.h.b16 %v2792
        %v3089 = vunpack.c.l.b16 %v2793
        %v3090 = vunpack.c.h.b16 %v2793
        %v3091 = vunpack.c.l.b16 %v2794
        %v3092 = vunpack.c.h.b16 %v2794
        %v3093 = vunpack.c.l.b16 %v2795
        %v3094 = vunpack.c.h.b16 %v2795
        %v3095 = vunpack.c.l.b16 %v2796
        %v3096 = vunpack.c.h.b16 %v2796
        %v3097 = vunpack.c.l.b16 %v2797
        %v3098 = vunpack.c.h.b16 %v2797
        %v3099 = vunpack.c.l.b16 %v2798
        %v3100 = vunpack.c.h.b16 %v2798
        %v3101 = vunpack.c.l.b16 %v2799
        %v3102 = vunpack.c.h.b16 %v2799
        %v3103 = vunpack.c.l.b16 %v2800
        %v3104 = vunpack.c.h.b16 %v2800
        %v3105 = vpack.c.b16 %v3043, %v3041
        %v3106 = vpack.c.b16 %v3044, %v3042
        %v3107 = vpack.c.b16 %v3047, %v3045
        %v3108 = vpack.c.b16 %v3048, %v3046
        %v3109 = vpack.c.b16 %v3051, %v3049
        %v3110 = vpack.c.b16 %v3052, %v3050
        %v3111 = vpack.c.b16 %v3055, %v3053
        %v3112 = vpack.c.b16 %v3056, %v3054
        %v3113 = vpack.c.b16 %v3059, %v3057
        %v3114 = vpack.c.b16 %v3060, %v3058
        %v3115 = vpack.c.b16 %v3063, %v3061
        %v3116 = vpack.c.b16 %v3064, %v3062
        %v3117 = vpack.c.b16 %v3067, %v3065
        %v3118 = vpack.c.b16 %v3068, %v3066
        %v3119 = vpack.c.b16 %v3071, %v3069
        %v3120 = vpack.c.b16 %v3072, %v3070
        %v3121 = vpack.c.b16 %v3075, %v3073
        %v3122 = vpack.c.b16 %v3076, %v3074
        %v3123 = vpack.c.b16 %v3079, %v3077
        %v3124 = vpack.c.b16 %v3080, %v3078
        %v3125 = vpack.c.b16 %v3083, %v3081
        %v3126 = vpack.c.b16 %v3084, %v3082
        %v3127 = vpack.c.b16 %v3087, %v3085
        %v3128 = vpack.c.b16 %v3088, %v3086
        %v3129 = vpack.c.b16 %v3091, %v3089
        %v3130 = vpack.c.b16 %v3092, %v3090
        %v3131 = vpack.c.b16 %v3095, %v3093
        %v3132 = vpack.c.b16 %v3096, %v3094
        %v3133 = vpack.c.b16 %v3099, %v3097
        %v3134 = vpack.c.b16 %v3100, %v3098
        %v3135 = vpack.c.b16 %v3103, %v3101
        %v3136 = vpack.c.b16 %v3104, %v3102
        %3169 = vmatpush.bf16.msra.mxu0 %v2808
        %3170 = vmatpush.bf16.msra.mxu0 %v2807
        %3171 = vmatpush.bf16.msra.mxu0 %v2806
        %3172 = vmatpush.bf16.msra.mxu0 %v2805
        %3173 = vmatpush.bf16.msra.mxu0 %v2804
        %3174 = vmatpush.bf16.msra.mxu0 %v2803
        %3175 = vmatpush.bf16.msra.mxu0 %v2802
        %3176 = vmatpush.bf16.msra.mxu0 %v2801
        %3177 = vmatmul.bf16.gmra.mxu0 %v3105
        %v3178 = vpop.f32.mrf.mxu0
        %v3179 = vadd.f32 %v2852, %v3178
        %v3180 = vpop.f32.mrf.mxu0
        %v3181 = vadd.f32 %v2857, %v3180
        %3182 = vmatmul.bf16.gmra.mxu0 %v3107
        %v3183 = vpop.f32.mrf.mxu0
        %v3184 = vadd.f32 %v2862, %v3183
        %v3185 = vpop.f32.mrf.mxu0
        %v3186 = vadd.f32 %v2867, %v3185
        %3187 = vmatmul.bf16.gmra.mxu0 %v3109
        %v3188 = vpop.f32.mrf.mxu0
        %v3189 = vadd.f32 %v2872, %v3188
        %v3190 = vpop.f32.mrf.mxu0
        %v3191 = vadd.f32 %v2877, %v3190
        %3192 = vmatmul.bf16.gmra.mxu0 %v3111
        %v3193 = vpop.f32.mrf.mxu0
        %v3194 = vadd.f32 %v2882, %v3193
        %v3195 = vpop.f32.mrf.mxu0
        %v3196 = vadd.f32 %v2887, %v3195
        %3197 = vmatmul.bf16.gmra.mxu0 %v3113
        %v3198 = vpop.f32.mrf.mxu0
        %v3199 = vadd.f32 %v2892, %v3198
        %v3200 = vpop.f32.mrf.mxu0
        %v3201 = vadd.f32 %v2897, %v3200
        %3202 = vmatmul.bf16.gmra.mxu0 %v3115
        %v3203 = vpop.f32.mrf.mxu0
        %v3204 = vadd.f32 %v2902, %v3203
        %v3205 = vpop.f32.mrf.mxu0
        %v3206 = vadd.f32 %v2907, %v3205
        %3207 = vmatmul.bf16.gmra.mxu0 %v3117
        %v3208 = vpop.f32.mrf.mxu0
        %v3209 = vadd.f32 %v2912, %v3208
        %v3210 = vpop.f32.mrf.mxu0
        %v3211 = vadd.f32 %v2917, %v3210
        %3212 = vmatmul.bf16.gmra.mxu0 %v3119
        %v3213 = vpop.f32.mrf.mxu0
        %v3214 = vadd.f32 %v2922, %v3213
        %v3215 = vpop.f32.mrf.mxu0
        %v3216 = vadd.f32 %v2927, %v3215
        %3217 = vmatmul.bf16.gmra.mxu0 %v3121
        %v3218 = vpop.f32.mrf.mxu0
        %v3219 = vadd.f32 %v2932, %v3218
        %v3220 = vpop.f32.mrf.mxu0
        %v3221 = vadd.f32 %v2937, %v3220
        %3222 = vmatmul.bf16.gmra.mxu0 %v3123
        %v3223 = vpop.f32.mrf.mxu0
        %v3224 = vadd.f32 %v2942, %v3223
        %v3225 = vpop.f32.mrf.mxu0
        %v3226 = vadd.f32 %v2947, %v3225
        %3227 = vmatmul.bf16.gmra.mxu0 %v3125
        %v3228 = vpop.f32.mrf.mxu0
        %v3229 = vadd.f32 %v2952, %v3228
        %v3230 = vpop.f32.mrf.mxu0
        %v3231 = vadd.f32 %v2957, %v3230
        %3232 = vmatmul.bf16.gmra.mxu0 %v3127
        %v3233 = vpop.f32.mrf.mxu0
        %v3234 = vadd.f32 %v2962, %v3233
        %v3235 = vpop.f32.mrf.mxu0
        %v3236 = vadd.f32 %v2967, %v3235
        %3237 = vmatmul.bf16.gmra.mxu0 %v3129
        %v3238 = vpop.f32.mrf.mxu0
        %v3239 = vadd.f32 %v2972, %v3238
        %v3240 = vpop.f32.mrf.mxu0
        %v3241 = vadd.f32 %v2977, %v3240
        %3242 = vmatmul.bf16.gmra.mxu0 %v3131
        %v3243 = vpop.f32.mrf.mxu0
        %v3244 = vadd.f32 %v2982, %v3243
        %v3245 = vpop.f32.mrf.mxu0
        %v3246 = vadd.f32 %v2987, %v3245
        %3247 = vmatmul.bf16.gmra.mxu0 %v3133
        %v3248 = vpop.f32.mrf.mxu0
        %v3249 = vadd.f32 %v2992, %v3248
        %v3250 = vpop.f32.mrf.mxu0
        %v3251 = vadd.f32 %v2997, %v3250
        %3252 = vmatmul.bf16.gmra.mxu0 %v3135
        %v3253 = vpop.f32.mrf.mxu0
        %v3254 = vadd.f32 %v3002, %v3253
        %v3255 = vpop.f32.mrf.mxu0
        %v3256 = vadd.f32 %v3007, %v3255
        %3257 = vdwg.mxu0
        %3258 = vmatpush.bf16.msra.mxu0 %v2816
        %3259 = vmatpush.bf16.msra.mxu0 %v2815
        %3260 = vmatpush.bf16.msra.mxu0 %v2814
        %3261 = vmatpush.bf16.msra.mxu0 %v2813
        %3262 = vmatpush.bf16.msra.mxu0 %v2812
        %3263 = vmatpush.bf16.msra.mxu0 %v2811
        %3264 = vmatpush.bf16.msra.mxu0 %v2810
        %3265 = vmatpush.bf16.msra.mxu0 %v2809
        %3266 = vmatmul.bf16.gmra.mxu0 %v3106
        %v3267 = vpop.f32.mrf.mxu0
        %v3268 = vadd.f32 %v3179, %v3267
        %v3269 = vpop.f32.mrf.mxu0
        %v3270 = vadd.f32 %v3181, %v3269
        %3271 = vmatmul.bf16.gmra.mxu0 %v3108
        %v3272 = vpop.f32.mrf.mxu0
        %v3273 = vadd.f32 %v3184, %v3272
        %v3274 = vpop.f32.mrf.mxu0
        %v3275 = vadd.f32 %v3186, %v3274
        %3276 = vmatmul.bf16.gmra.mxu0 %v3110
        %v3277 = vpop.f32.mrf.mxu0
        %v3278 = vadd.f32 %v3189, %v3277
        %v3279 = vpop.f32.mrf.mxu0
        %v3280 = vadd.f32 %v3191, %v3279
        %3281 = vmatmul.bf16.gmra.mxu0 %v3112
        %v3282 = vpop.f32.mrf.mxu0
        %v3283 = vadd.f32 %v3194, %v3282
        %v3284 = vpop.f32.mrf.mxu0
        %v3285 = vadd.f32 %v3196, %v3284
        %3286 = vmatmul.bf16.gmra.mxu0 %v3114
        %v3287 = vpop.f32.mrf.mxu0
        %v3288 = vadd.f32 %v3199, %v3287
        %v3289 = vpop.f32.mrf.mxu0
        %v3290 = vadd.f32 %v3201, %v3289
        %3291 = vmatmul.bf16.gmra.mxu0 %v3116
        %v3292 = vpop.f32.mrf.mxu0
        %v3293 = vadd.f32 %v3204, %v3292
        %v3294 = vpop.f32.mrf.mxu0
        %v3295 = vadd.f32 %v3206, %v3294
        %3296 = vmatmul.bf16.gmra.mxu0 %v3118
        %v3297 = vpop.f32.mrf.mxu0
        %v3298 = vadd.f32 %v3209, %v3297
        %v3299 = vpop.f32.mrf.mxu0
        %v3300 = vadd.f32 %v3211, %v3299
        %3301 = vmatmul.bf16.gmra.mxu0 %v3120
        %v3302 = vpop.f32.mrf.mxu0
        %v3303 = vadd.f32 %v3214, %v3302
        %v3304 = vpop.f32.mrf.mxu0
        %v3305 = vadd.f32 %v3216, %v3304
        %3306 = vmatmul.bf16.gmra.mxu0 %v3122
        %v3307 = vpop.f32.mrf.mxu0
        %v3308 = vadd.f32 %v3219, %v3307
        %v3309 = vpop.f32.mrf.mxu0
        %v3310 = vadd.f32 %v3221, %v3309
        %3311 = vmatmul.bf16.gmra.mxu0 %v3124
        %v3312 = vpop.f32.mrf.mxu0
        %v3313 = vadd.f32 %v3224, %v3312
        %v3314 = vpop.f32.mrf.mxu0
        %v3315 = vadd.f32 %v3226, %v3314
        %3316 = vmatmul.bf16.gmra.mxu0 %v3126
        %v3317 = vpop.f32.mrf.mxu0
        %v3318 = vadd.f32 %v3229, %v3317
        %v3319 = vpop.f32.mrf.mxu0
        %v3320 = vadd.f32 %v3231, %v3319
        %3321 = vmatmul.bf16.gmra.mxu0 %v3128
        %v3322 = vpop.f32.mrf.mxu0
        %v3323 = vadd.f32 %v3234, %v3322
        %v3324 = vpop.f32.mrf.mxu0
        %v3325 = vadd.f32 %v3236, %v3324
        %3326 = vmatmul.bf16.gmra.mxu0 %v3130
        %v3327 = vpop.f32.mrf.mxu0
        %v3328 = vadd.f32 %v3239, %v3327
        %v3329 = vpop.f32.mrf.mxu0
        %v3330 = vadd.f32 %v3241, %v3329
        %3331 = vmatmul.bf16.gmra.mxu0 %v3132
        %v3332 = vpop.f32.mrf.mxu0
        %v3333 = vadd.f32 %v3244, %v3332
        %v3334 = vpop.f32.mrf.mxu0
        %v3335 = vadd.f32 %v3246, %v3334
        %3336 = vmatmul.bf16.gmra.mxu0 %v3134
        %v3337 = vpop.f32.mrf.mxu0
        %v3338 = vadd.f32 %v3249, %v3337
        %v3339 = vpop.f32.mrf.mxu0
        %v3340 = vadd.f32 %v3251, %v3339
        %3341 = vmatmul.bf16.gmra.mxu0 %v3136
        %v3342 = vpop.f32.mrf.mxu0
        %v3343 = vadd.f32 %v3254, %v3342
        %v3344 = vpop.f32.mrf.mxu0
        %v3345 = vadd.f32 %v3256, %v3344
        %3346 = vdwg.mxu0
        %vm3347 = vcmp.gt.f32.partialorder %v3268, 0.0
        %vm3348 = vcmp.gt.f32.partialorder %v3270, 0.0
        %vm3349 = vcmp.gt.f32.partialorder %v3273, 0.0
        %vm3350 = vcmp.gt.f32.partialorder %v3275, 0.0
        %vm3351 = vcmp.gt.f32.partialorder %v3278, 0.0
        %vm3352 = vcmp.gt.f32.partialorder %v3280, 0.0
        %vm3353 = vcmp.gt.f32.partialorder %v3283, 0.0
        %vm3354 = vcmp.gt.f32.partialorder %v3285, 0.0
        %vm3355 = vcmp.gt.f32.partialorder %v3288, 0.0
        %vm3356 = vcmp.gt.f32.partialorder %v3290, 0.0
        %vm3357 = vcmp.gt.f32.partialorder %v3293, 0.0
        %vm3358 = vcmp.gt.f32.partialorder %v3295, 0.0
        %vm3359 = vcmp.gt.f32.partialorder %v3298, 0.0
        %vm3360 = vcmp.gt.f32.partialorder %v3300, 0.0
        %vm3361 = vcmp.gt.f32.partialorder %v3303, 0.0
        %vm3362 = vcmp.gt.f32.partialorder %v3305, 0.0
        %vm3363 = vcmp.gt.f32.partialorder %v3308, 0.0
        %vm3364 = vcmp.gt.f32.partialorder %v3310, 0.0
        %vm3365 = vcmp.gt.f32.partialorder %v3313, 0.0
        %vm3366 = vcmp.gt.f32.partialorder %v3315, 0.0
        %vm3367 = vcmp.gt.f32.partialorder %v3318, 0.0
        %vm3368 = vcmp.gt.f32.partialorder %v3320, 0.0
        %vm3369 = vcmp.gt.f32.partialorder %v3323, 0.0
        %vm3370 = vcmp.gt.f32.partialorder %v3325, 0.0
        %vm3371 = vcmp.gt.f32.partialorder %v3328, 0.0
        %vm3372 = vcmp.gt.f32.partialorder %v3330, 0.0
        %vm3373 = vcmp.gt.f32.partialorder %v3333, 0.0
        %vm3374 = vcmp.gt.f32.partialorder %v3335, 0.0
        %vm3375 = vcmp.gt.f32.partialorder %v3338, 0.0
        %vm3376 = vcmp.gt.f32.partialorder %v3340, 0.0
        %vm3377 = vcmp.gt.f32.partialorder %v3343, 0.0
        %vm3378 = vcmp.gt.f32.partialorder %v3345, 0.0
        %v3379 = vmul.f32 %v3268, 0.2
        %v3380 = vmul.f32 %v3270, 0.2
        %v3381 = vmul.f32 %v3273, 0.2
        %v3382 = vmul.f32 %v3275, 0.2
        %v3383 = vmul.f32 %v3278, 0.2
        %v3384 = vmul.f32 %v3280, 0.2
        %v3385 = vmul.f32 %v3283, 0.2
        %v3386 = vmul.f32 %v3285, 0.2
        %v3387 = vmul.f32 %v3288, 0.2
        %v3388 = vmul.f32 %v3290, 0.2
        %v3389 = vmul.f32 %v3293, 0.2
        %v3390 = vmul.f32 %v3295, 0.2
        %v3391 = vmul.f32 %v3298, 0.2
        %v3392 = vmul.f32 %v3300, 0.2
        %v3393 = vmul.f32 %v3303, 0.2
        %v3394 = vmul.f32 %v3305, 0.2
        %v3395 = vmul.f32 %v3308, 0.2
        %v3396 = vmul.f32 %v3310, 0.2
        %v3397 = vmul.f32 %v3313, 0.2
        %v3398 = vmul.f32 %v3315, 0.2
        %v3399 = vmul.f32 %v3318, 0.2
        %v3400 = vmul.f32 %v3320, 0.2
        %v3401 = vmul.f32 %v3323, 0.2
        %v3402 = vmul.f32 %v3325, 0.2
        %v3403 = vmul.f32 %v3328, 0.2
        %v3404 = vmul.f32 %v3330, 0.2
        %v3405 = vmul.f32 %v3333, 0.2
        %v3406 = vmul.f32 %v3335, 0.2
        %v3407 = vmul.f32 %v3338, 0.2
        %v3408 = vmul.f32 %v3340, 0.2
        %v3409 = vmul.f32 %v3343, 0.2
        %v3410 = vmul.f32 %v3345, 0.2
        %v3411 = vsel %vm3347, %v3268, %v3379
        %v3412 = vsel %vm3348, %v3270, %v3380
        %v3413 = vsel %vm3349, %v3273, %v3381
        %v3414 = vsel %vm3350, %v3275, %v3382
        %v3415 = vsel %vm3351, %v3278, %v3383
        %v3416 = vsel %vm3352, %v3280, %v3384
        %v3417 = vsel %vm3353, %v3283, %v3385
        %v3418 = vsel %vm3354, %v3285, %v3386
        %v3419 = vsel %vm3355, %v3288, %v3387
        %v3420 = vsel %vm3356, %v3290, %v3388
        %v3421 = vsel %vm3357, %v3293, %v3389
        %v3422 = vsel %vm3358, %v3295, %v3390
        %v3423 = vsel %vm3359, %v3298, %v3391
        %v3424 = vsel %vm3360, %v3300, %v3392
        %v3425 = vsel %vm3361, %v3303, %v3393
        %v3426 = vsel %vm3362, %v3305, %v3394
        %v3427 = vsel %vm3363, %v3308, %v3395
        %v3428 = vsel %vm3364, %v3310, %v3396
        %v3429 = vsel %vm3365, %v3313, %v3397
        %v3430 = vsel %vm3366, %v3315, %v3398
        %v3431 = vsel %vm3367, %v3318, %v3399
        %v3432 = vsel %vm3368, %v3320, %v3400
        %v3433 = vsel %vm3369, %v3323, %v3401
        %v3434 = vsel %vm3370, %v3325, %v3402
        %v3435 = vsel %vm3371, %v3328, %v3403
        %v3436 = vsel %vm3372, %v3330, %v3404
        %v3437 = vsel %vm3373, %v3333, %v3405
        %v3438 = vsel %vm3374, %v3335, %v3406
        %v3439 = vsel %vm3375, %v3338, %v3407
        %v3440 = vsel %vm3376, %v3340, %v3408
        %v3441 = vsel %vm3377, %v3343, %v3409
        %v3442 = vsel %vm3378, %v3345, %v3410
        %v3443 = vld [vmem:[%s7] sm:$0xff]
        %v3444 = vld [vmem:[%s7 + $0x8] sm:$0xff]
        %v3445 = vld [vmem:[%s7 + $0x10] sm:$0xff]
        %v3446 = vld [vmem:[%s7 + $0x18] sm:$0xff]
        %v3447 = vld [vmem:[%s7 + $0x20] sm:$0xff]
        %v3448 = vld [vmem:[%s7 + $0x28] sm:$0xff]
        %v3449 = vld [vmem:[%s7 + $0x30] sm:$0xff]
        %v3450 = vld [vmem:[%s7 + $0x38] sm:$0xff]
        %v3451 = vld [vmem:[%s7 + $0x40] sm:$0xff]
        %v3452 = vld [vmem:[%s7 + $0x48] sm:$0xff]
        %v3453 = vld [vmem:[%s7 + $0x50] sm:$0xff]
        %v3454 = vld [vmem:[%s7 + $0x58] sm:$0xff]
        %v3455 = vld [vmem:[%s7 + $0x60] sm:$0xff]
        %v3456 = vld [vmem:[%s7 + $0x68] sm:$0xff]
        %v3457 = vld [vmem:[%s7 + $0x70] sm:$0xff]
        %v3458 = vld [vmem:[%s7 + $0x78] sm:$0xff]
        %v3459 = vld [vmem:[%s7 + $0x80] sm:$0xff]
        %v3460 = vld [vmem:[%s7 + $0x88] sm:$0xff]
        %v3461 = vld [vmem:[%s7 + $0x90] sm:$0xff]
        %v3462 = vld [vmem:[%s7 + $0x98] sm:$0xff]
        %v3463 = vld [vmem:[%s7 + $0xa0] sm:$0xff]
        %v3464 = vld [vmem:[%s7 + $0xa8] sm:$0xff]
        %v3465 = vld [vmem:[%s7 + $0xb0] sm:$0xff]
        %v3466 = vld [vmem:[%s7 + $0xb8] sm:$0xff]
        %v3467 = vld [vmem:[%s7 + $0xc0] sm:$0xff]
        %v3468 = vld [vmem:[%s7 + $0xc8] sm:$0xff]
        %v3469 = vld [vmem:[%s7 + $0xd0] sm:$0xff]
        %v3470 = vld [vmem:[%s7 + $0xd8] sm:$0xff]
        %v3471 = vld [vmem:[%s7 + $0xe0] sm:$0xff]
        %v3472 = vld [vmem:[%s7 + $0xe8] sm:$0xff]
        %v3473 = vld [vmem:[%s7 + $0xf0] sm:$0xff]
        %v3474 = vld [vmem:[%s7 + $0xf8] sm:$0xff]
        %3476 = vset.pattern.permute.xlu0 0
        %3477 = vperm.xlu0 %3476, %v3443
        %v3478 = vpop.permute.xlu0 %3477
        %3481 = vset.pattern.permute.xlu0 0
        %3482 = vperm.xlu0 %3481, %v3444
        %v3483 = vpop.permute.xlu0 %3482
        %3486 = vset.pattern.permute.xlu0 0
        %3487 = vperm.xlu0 %3486, %v3445
        %v3488 = vpop.permute.xlu0 %3487
        %3491 = vset.pattern.permute.xlu0 0
        %3492 = vperm.xlu0 %3491, %v3446
        %v3493 = vpop.permute.xlu0 %3492
        %3496 = vset.pattern.permute.xlu0 0
        %3497 = vperm.xlu0 %3496, %v3447
        %v3498 = vpop.permute.xlu0 %3497
        %3501 = vset.pattern.permute.xlu0 0
        %3502 = vperm.xlu0 %3501, %v3448
        %v3503 = vpop.permute.xlu0 %3502
        %3506 = vset.pattern.permute.xlu0 0
        %3507 = vperm.xlu0 %3506, %v3449
        %v3508 = vpop.permute.xlu0 %3507
        %3511 = vset.pattern.permute.xlu0 0
        %3512 = vperm.xlu0 %3511, %v3450
        %v3513 = vpop.permute.xlu0 %3512
        %3516 = vset.pattern.permute.xlu0 0
        %3517 = vperm.xlu0 %3516, %v3451
        %v3518 = vpop.permute.xlu0 %3517
        %3521 = vset.pattern.permute.xlu0 0
        %3522 = vperm.xlu0 %3521, %v3452
        %v3523 = vpop.permute.xlu0 %3522
        %3526 = vset.pattern.permute.xlu0 0
        %3527 = vperm.xlu0 %3526, %v3453
        %v3528 = vpop.permute.xlu0 %3527
        %3531 = vset.pattern.permute.xlu0 0
        %3532 = vperm.xlu0 %3531, %v3454
        %v3533 = vpop.permute.xlu0 %3532
        %3536 = vset.pattern.permute.xlu0 0
        %3537 = vperm.xlu0 %3536, %v3455
        %v3538 = vpop.permute.xlu0 %3537
        %3541 = vset.pattern.permute.xlu0 0
        %3542 = vperm.xlu0 %3541, %v3456
        %v3543 = vpop.permute.xlu0 %3542
        %3546 = vset.pattern.permute.xlu0 0
        %3547 = vperm.xlu0 %3546, %v3457
        %v3548 = vpop.permute.xlu0 %3547
        %3551 = vset.pattern.permute.xlu0 0
        %3552 = vperm.xlu0 %3551, %v3458
        %v3553 = vpop.permute.xlu0 %3552
        %3556 = vset.pattern.permute.xlu0 0
        %3557 = vperm.xlu0 %3556, %v3459
        %v3558 = vpop.permute.xlu0 %3557
        %3561 = vset.pattern.permute.xlu0 0
        %3562 = vperm.xlu0 %3561, %v3460
        %v3563 = vpop.permute.xlu0 %3562
        %3566 = vset.pattern.permute.xlu0 0
        %3567 = vperm.xlu0 %3566, %v3461
        %v3568 = vpop.permute.xlu0 %3567
        %3571 = vset.pattern.permute.xlu0 0
        %3572 = vperm.xlu0 %3571, %v3462
        %v3573 = vpop.permute.xlu0 %3572
        %3576 = vset.pattern.permute.xlu0 0
        %3577 = vperm.xlu0 %3576, %v3463
        %v3578 = vpop.permute.xlu0 %3577
        %3581 = vset.pattern.permute.xlu0 0
        %3582 = vperm.xlu0 %3581, %v3464
        %v3583 = vpop.permute.xlu0 %3582
        %3586 = vset.pattern.permute.xlu0 0
        %3587 = vperm.xlu0 %3586, %v3465
        %v3588 = vpop.permute.xlu0 %3587
        %3591 = vset.pattern.permute.xlu0 0
        %3592 = vperm.xlu0 %3591, %v3466
        %v3593 = vpop.permute.xlu0 %3592
        %3596 = vset.pattern.permute.xlu0 0
        %3597 = vperm.xlu0 %3596, %v3467
        %v3598 = vpop.permute.xlu0 %3597
        %3601 = vset.pattern.permute.xlu0 0
        %3602 = vperm.xlu0 %3601, %v3468
        %v3603 = vpop.permute.xlu0 %3602
        %3606 = vset.pattern.permute.xlu0 0
        %3607 = vperm.xlu0 %3606, %v3469
        %v3608 = vpop.permute.xlu0 %3607
        %3611 = vset.pattern.permute.xlu0 0
        %3612 = vperm.xlu0 %3611, %v3470
        %v3613 = vpop.permute.xlu0 %3612
        %3616 = vset.pattern.permute.xlu0 0
        %3617 = vperm.xlu0 %3616, %v3471
        %v3618 = vpop.permute.xlu0 %3617
        %3621 = vset.pattern.permute.xlu0 0
        %3622 = vperm.xlu0 %3621, %v3472
        %v3623 = vpop.permute.xlu0 %3622
        %3626 = vset.pattern.permute.xlu0 0
        %3627 = vperm.xlu0 %3626, %v3473
        %v3628 = vpop.permute.xlu0 %3627
        %3631 = vset.pattern.permute.xlu0 0
        %3632 = vperm.xlu0 %3631, %v3474
        %v3633 = vpop.permute.xlu0 %3632
        %v3635 = vmul.f32 %v3411, %v3478
        %v3636 = vmul.f32 %v3412, %v3483
        %v3637 = vmul.f32 %v3413, %v3488
        %v3638 = vmul.f32 %v3414, %v3493
        %v3639 = vmul.f32 %v3415, %v3498
        %v3640 = vmul.f32 %v3416, %v3503
        %v3641 = vmul.f32 %v3417, %v3508
        %v3642 = vmul.f32 %v3418, %v3513
        %v3643 = vmul.f32 %v3419, %v3518
        %v3644 = vmul.f32 %v3420, %v3523
        %v3645 = vmul.f32 %v3421, %v3528
        %v3646 = vmul.f32 %v3422, %v3533
        %v3647 = vmul.f32 %v3423, %v3538
        %v3648 = vmul.f32 %v3424, %v3543
        %v3649 = vmul.f32 %v3425, %v3548
        %v3650 = vmul.f32 %v3426, %v3553
        %v3651 = vmul.f32 %v3427, %v3558
        %v3652 = vmul.f32 %v3428, %v3563
        %v3653 = vmul.f32 %v3429, %v3568
        %v3654 = vmul.f32 %v3430, %v3573
        %v3655 = vmul.f32 %v3431, %v3578
        %v3656 = vmul.f32 %v3432, %v3583
        %v3657 = vmul.f32 %v3433, %v3588
        %v3658 = vmul.f32 %v3434, %v3593
        %v3659 = vmul.f32 %v3435, %v3598
        %v3660 = vmul.f32 %v3436, %v3603
        %v3661 = vmul.f32 %v3437, %v3608
        %v3662 = vmul.f32 %v3438, %v3613
        %v3663 = vmul.f32 %v3439, %v3618
        %v3664 = vmul.f32 %v3440, %v3623
        %v3665 = vmul.f32 %v3441, %v3628
        %v3666 = vmul.f32 %v3442, %v3633
        %vm3667 = vcmask 130048
        %v3668 = vsel %vm3667, %v3635, 0.0
        %v3669 = vsel %vm3667, %v3636, 0.0
        %v3670 = vadd.f32 %v3668, %v3669
        %v3671 = vsel %vm3667, %v3637, 0.0
        %v3672 = vadd.f32 %v3670, %v3671
        %v3673 = vsel %vm3667, %v3638, 0.0
        %v3674 = vadd.f32 %v3672, %v3673
        %v3675 = vsel %vm3667, %v3639, 0.0
        %v3676 = vadd.f32 %v3674, %v3675
        %v3677 = vsel %vm3667, %v3640, 0.0
        %v3678 = vadd.f32 %v3676, %v3677
        %v3679 = vsel %vm3667, %v3641, 0.0
        %v3680 = vadd.f32 %v3678, %v3679
        %v3681 = vsel %vm3667, %v3642, 0.0
        %v3682 = vadd.f32 %v3680, %v3681
        %v3683 = vsel %vm3667, %v3643, 0.0
        %v3684 = vadd.f32 %v3682, %v3683
        %v3685 = vsel %vm3667, %v3644, 0.0
        %v3686 = vadd.f32 %v3684, %v3685
        %v3687 = vsel %vm3667, %v3645, 0.0
        %v3688 = vadd.f32 %v3686, %v3687
        %v3689 = vsel %vm3667, %v3646, 0.0
        %v3690 = vadd.f32 %v3688, %v3689
        %v3691 = vsel %vm3667, %v3647, 0.0
        %v3692 = vadd.f32 %v3690, %v3691
        %v3693 = vsel %vm3667, %v3648, 0.0
        %v3694 = vadd.f32 %v3692, %v3693
        %v3695 = vsel %vm3667, %v3649, 0.0
        %v3696 = vadd.f32 %v3694, %v3695
        %v3697 = vsel %vm3667, %v3650, 0.0
        %v3698 = vadd.f32 %v3696, %v3697
        %v3699 = vsel %vm3667, %v3651, 0.0
        %v3700 = vadd.f32 %v3698, %v3699
        %v3701 = vsel %vm3667, %v3652, 0.0
        %v3702 = vadd.f32 %v3700, %v3701
        %v3703 = vsel %vm3667, %v3653, 0.0
        %v3704 = vadd.f32 %v3702, %v3703
        %v3705 = vsel %vm3667, %v3654, 0.0
        %v3706 = vadd.f32 %v3704, %v3705
        %v3707 = vsel %vm3667, %v3655, 0.0
        %v3708 = vadd.f32 %v3706, %v3707
        %v3709 = vsel %vm3667, %v3656, 0.0
        %v3710 = vadd.f32 %v3708, %v3709
        %v3711 = vsel %vm3667, %v3657, 0.0
        %v3712 = vadd.f32 %v3710, %v3711
        %v3713 = vsel %vm3667, %v3658, 0.0
        %v3714 = vadd.f32 %v3712, %v3713
        %v3715 = vsel %vm3667, %v3659, 0.0
        %v3716 = vadd.f32 %v3714, %v3715
        %v3717 = vsel %vm3667, %v3660, 0.0
        %v3718 = vadd.f32 %v3716, %v3717
        %v3719 = vsel %vm3667, %v3661, 0.0
        %v3720 = vadd.f32 %v3718, %v3719
        %v3721 = vsel %vm3667, %v3662, 0.0
        %v3722 = vadd.f32 %v3720, %v3721
        %v3723 = vsel %vm3667, %v3663, 0.0
        %v3724 = vadd.f32 %v3722, %v3723
        %v3725 = vsel %vm3667, %v3664, 0.0
        %v3726 = vadd.f32 %v3724, %v3725
        %v3727 = vsel %vm3667, %v3665, 0.0
        %v3728 = vadd.f32 %v3726, %v3727
        %v3729 = vsel %vm3667, %v3666, 0.0
        %v3730 = vadd.f32 %v3728, %v3729
        %v3731 = vrot.slane %v3730, 4
        %v3732 = vadd.f32 %v3730, %v3731
        %v3733 = vrot.slane %v3732, 2
        %v3734 = vadd.f32 %v3732, %v3733
        %v3735 = vrot.slane %v3734, 1
        %v3736 = vadd.f32 %v3734, %v3735
        %v3737 = vld [vmem:[#allocation5] sm:$0x1]
        %3739 = vset.pattern.permute.xlu0 0
        %3740 = vperm.xlu0 %3739, %v3737
        %v3741 = vpop.permute.xlu0 %3740
        %v3743 = vperm.slane %v3741, 0
        %v3744 = vadd.f32 %v3736, %v3743
        %vm3745 = vcmask 122880
        %3746 = vst.msk [vmem:[%s383] sm:$0x1] %vm3745, %v3744
      $region68: #{pixel_discriminator.1} parent=55 // pred_fallthru
        _
      %s3747 = smul.u32 %s29, %s28
      %p3748 = scmp.lt.s32.totalorder %s27, 1
      %s3749 = scalar_select %p3748, %s27, 1
      %p3750 = scmp.lt.s32.totalorder %s3747, 0
      %s3751 = scalar_select %p3750, %s3747, 0
      %s3752 = sadd.s32 %s3751, %s3749
      %s3753 = scalar_lea.vmem %s9, %s3752
      // Predicated region
      $region69: #{pixel_discriminator.1} parent=55 // pred_check
        %p3754 = pneg %p263
      $region70: #{pixel_discriminator.1} parent=55 // pred_check_branch
        %3756 = sbr.rel (%p3754) target = $region72
      $region71: #{pixel_discriminator.1} parent=55 // pred_region
        %s3757 = smul.u32 %s29, %s28
      $region72: #{pixel_discriminator.1} parent=55 // pred_fallthru
        _
    $region56: #{pixel_discriminator.1} parent=5 // pred_fallthru
      _
    %p3758 = scmp.le.s32.totalorder 2, %s17
    // Predicated region
    $region73: #{pixel_discriminator.1} parent=5 // pred_check
      %p3759 = pneg %p3758
    $region74: #{pixel_discriminator.1} parent=5 // pred_check_branch
      %3761 = sbr.rel (%p3759) target = $region76
    $region75: #{pixel_discriminator.1} parent=5 // pred_region
      %s3762 = ssub.s32 %s17, 2
      // Predicated region
      $region77: #{pixel_discriminator.1} parent=75 // pred_check
        %p3763 = pneg %p269
      $region78: #{pixel_discriminator.1} parent=75 // pred_check_branch
        %3765 = sbr.rel (%p3763) target = $region80
      $region79: #{pixel_discriminator.1} parent=75 // pred_region
        %s3766 = smul.u32 %s32, %s31
        %p3767 = scmp.lt.s32.totalorder %s30, 1
        %s3768 = scalar_select %p3767, %s30, 1
        %p3769 = scmp.lt.s32.totalorder %s3766, 0
        %s3770 = scalar_select %p3769, %s3766, 0
        %s3771 = sadd.s32 %s3770, %s3768
        %s3772 = scalar_lea.vmem %s9, %s3771
      $region80: #{pixel_discriminator.1} parent=75 // pred_fallthru
        _
    $region76: #{pixel_discriminator.1} parent=5 // pred_fallthru
      _
  $region6: #{pixel_discriminator.1} parent=0 // loop_footer
    %s21 = sadd.s32 1, %s17
  $region7: #{pixel_discriminator.1} parent=0 // loop_footer_branch
    %16 = sbr.rel target = $region3
  $region8: #{pixel_discriminator.1} parent=0 // loop_exit
    _

</llo_original>
